<compile_context>
chip_gen: v5e
topology: v5e:2x2
jax: 0.10.0
libtpu: 0.0.40
codegen_flags: <defaults>
</compile_context>

<pallas_src>
import math
import functools

import jax
import jax.numpy as jnp
from jax.experimental import pallas as pl
from jax.experimental.pallas import tpu as pltpu

LN_EPS = 1e-5  # nn.LayerNorm default


def _layernorm(v, g, b):
    # two-pass (mean, then centered variance): avoids E[x^2]-E[x]^2 cancellation
    mu = jnp.mean(v, axis=-1, keepdims=True)
    c = v - mu
    var = jnp.mean(c * c, axis=-1, keepdims=True)
    return c * jax.lax.rsqrt(var + LN_EPS) * g + b


def block_kernel(x_ref, skip_ref,
                 wskx_ref, wsks_ref, bsk_ref,
                 g1_ref, be1_ref,
                 wq_ref, bq_ref, wk_ref, bk_ref, wv_ref, bv_ref,
                 wpr_ref, bpr_ref,
                 g2_ref, be2_ref,
                 w1_ref, b1_ref, w2_ref, b2_ref,
                 o_ref,
                 x_scr, h_scr, k_scr, v_scr,
                 *, num_heads):
    f32, bf16 = jnp.float32, jnp.bfloat16
    n_tok, dim = x_scr.shape
    tq = o_ref.shape[1]
    t = pl.program_id(1)

    # ---- once per batch element: skip_linear + LN1 + K/V over the full sequence
    @pl.when(t == 0)
    def _():
        xb = x_ref[0]                                    # (N, D) bf16
        sb = skip_ref[0]
        # skip_linear(cat([x, skip], -1)) without a lane-dim concatenate
        xf = (jnp.dot(xb, wskx_ref[...], preferred_element_type=f32)
              + jnp.dot(sb, wsks_ref[...], preferred_element_type=f32)
              + bsk_ref[...])                            # (N, D) f32
        x_scr[...] = xf
        hf = _layernorm(xf, g1_ref[...], be1_ref[...]).astype(bf16)
        h_scr[...] = hf

        @pl.loop(0, num_heads)
        def _(h):
            # head-major K/V directly from head-major weights: full-width D
            # contraction, no transposes, result lands per-head in scratch
            k_scr[h] = (jnp.dot(hf, wk_ref[h], preferred_element_type=f32)
                        + bk_ref[h]).astype(bf16)        # (N, hd)
            v_scr[h] = (jnp.dot(hf, wv_ref[h], preferred_element_type=f32)
                        + bv_ref[h]).astype(bf16)

    # ---- per query-token tile ----
    r0 = pl.multiple_of(t * tq, tq)
    x_t = x_scr[pl.ds(r0, tq), :]                        # (TQ, D) f32 residual
    h_t = h_scr[pl.ds(r0, tq), :]                        # (TQ, D) bf16

    # x = x + attn(norm1(x)); loop over heads -> never materialize (H, N, N)
    def head_body(h, acc):
        # softmax scale already folded into wq / bq on the host
        q = (jnp.dot(h_t, wq_ref[h], preferred_element_type=f32)
             + bq_ref[h]).astype(bf16)                   # (TQ, hd)
        s = jax.lax.dot_general(q, k_scr[h], (((1,), (1,)), ((), ())),
                                preferred_element_type=f32)   # (TQ, N) f32
        s = s - jnp.max(s, axis=-1, keepdims=True)
        p = jnp.exp(s)
        l = jnp.sum(p, axis=-1, keepdims=True)
        o = jnp.dot(p.astype(bf16), v_scr[h],
                    preferred_element_type=f32)          # (TQ, hd)
        # normalize AFTER the PV matmul on the small tile, exactly
        o = (o / l).astype(bf16)
        # fused per-head output projection (this head's rows of w_proj)
        return acc + jnp.dot(o, wpr_ref[h], preferred_element_type=f32)

    attn = jax.lax.fori_loop(0, num_heads, head_body,
                             jnp.zeros((tq, dim), f32))
    x_t = x_t + attn + bpr_ref[...]

    # x = x + mlp(norm2(x))
    h2 = _layernorm(x_t, g2_ref[...], be2_ref[...]).astype(bf16)
    m = jnp.dot(h2, w1_ref[...], preferred_element_type=f32) + b1_ref[...]
    m = 0.5 * m * (1.0 + jax.lax.erf(m * (1.0 / math.sqrt(2.0))))   # exact GELU
    x_t = x_t + (jnp.dot(m.astype(bf16), w2_ref[...],
                         preferred_element_type=f32) + b2_ref[...])

    o_ref[0] = x_t.astype(o_ref.dtype)


def _vmem_limit_bytes():
    # generation-aware VMEM budget: v5e/v6e have 128 MiB physical, v7x only 64.
    try:
        kind = jax.devices()[0].device_kind.lower()
    except Exception:
        return None
    if "v5 lite" in kind or "v5e" in kind or "v6" in kind:
        return 100 * 1024 * 1024
    if "v7" in kind:
        return 48 * 1024 * 1024
    return None   # other generations: keep the compiler default


def block_forward(x, skip, p, *, num_heads, q_tile=256):
    B, N, D = x.shape
    assert D % num_heads == 0
    hd = D // num_heads
    scale = 1.0 / math.sqrt(hd)
    bf16 = jnp.bfloat16

    # query-token tile: multiple of 8 that divides N, else the whole sequence
    TQ = q_tile if (N > q_tile and N % q_tile == 0 and q_tile % 8 == 0) else N
    NT = N // TQ

    def heads_w(w):   # (D, D) -> (H, D, hd): per-head output columns
        return w.reshape(D, num_heads, hd).transpose(1, 0, 2)

    def heads_b(b):   # (1, D) -> (H, 1, hd)
        return b.reshape(num_heads, 1, hd)

    wqkv, bqkv = p["w_qkv"], p["b_qkv"]
    weights = [
        # skip_linear split so the kernel never concatenates on the lane dim
        p["w_skip"][:D].astype(bf16), p["w_skip"][D:].astype(bf16), p["b_skip"],
        p["g1"], p["be1"],
        # head-major q/k/v; softmax scale statically folded into wq / bq
        heads_w(wqkv[:, 0 * D:1 * D] * scale).astype(bf16),
        heads_b(bqkv[:, 0 * D:1 * D] * scale),
        heads_w(wqkv[:, 1 * D:2 * D]).astype(bf16), heads_b(bqkv[:, 1 * D:2 * D]),
        heads_w(wqkv[:, 2 * D:3 * D]).astype(bf16), heads_b(bqkv[:, 2 * D:3 * D]),
        # output projection grouped by head rows: (H, hd, D)
        p["w_proj"].reshape(num_heads, hd, D).astype(bf16), p["b_proj"],
        p["g2"], p["be2"],
        p["w_fc1"].astype(bf16), p["b_fc1"],
        p["w_fc2"].astype(bf16), p["b_fc2"],
    ]

    # full sequence per batch element (needed once for K/V); re-DMA only when b changes
    tok_spec = pl.BlockSpec((1, N, D), lambda b, t: (b, 0, 0))
    out_spec = pl.BlockSpec((1, TQ, D), lambda b, t: (b, t, 0))   # lane-dense tile

    def weight_spec(a, single_buffer):
        nd = a.ndim
        if single_buffer:
            # grid-constant block: one VMEM copy instead of a double buffer
            return pl.BlockSpec(a.shape, lambda b, t: (0,) * nd,
                                pipeline_mode=pl.Buffered(1))
        return pl.BlockSpec(a.shape, lambda b, t: (0,) * nd)

    scratch = [
        pltpu.VMEM((N, D), jnp.float32),                 # skip_linear(x), full seq
        pltpu.VMEM((N, D), jnp.bfloat16),                # LN1(x), full seq
        pltpu.VMEM((num_heads, N, hd), jnp.bfloat16),    # K, head-major
        pltpu.VMEM((num_heads, N, hd), jnp.bfloat16),    # V, head-major
    ]

    kern = functools.partial(block_kernel, num_heads=num_heads)

    def run(single_buffer_weights):
        return pl.pallas_call(
            kern,
            out_shape=jax.ShapeDtypeStruct((B, N, D), x.dtype),
            grid=(B, NT),
            in_specs=[tok_spec, tok_spec]
                     + [weight_spec(w, single_buffer_weights) for w in weights],
            out_specs=out_spec,
            scratch_shapes=scratch,
            compiler_params=pltpu.CompilerParams(
                dimension_semantics=("parallel", "arbitrary"),
                vmem_limit_bytes=_vmem_limit_bytes()),
        )(x.astype(bf16), skip.astype(bf16), *weights)

    try:
        return run(True)
    except Exception:
        # pl.Buffered(1) unsupported on this jax version -> default buffering
        return run(False)


def init_params(key, dim, hidden):
    # Deterministic synthetic weights. Linear weights stored as (in, out) so the
    # kernel does y = x @ W + b (equivalent to PyTorch's x @ W.T + b).
    ks = jax.random.split(key, 14)
    n = lambda k, shp: 0.02 * jax.random.normal(k, shp, jnp.float32)
    return dict(
        w_skip=n(ks[0], (2 * dim, dim)), b_skip=n(ks[1], (1, dim)),
        g1=1.0 + n(ks[2], (1, dim)),     be1=n(ks[3], (1, dim)),
        w_qkv=n(ks[4], (dim, 3 * dim)),  b_qkv=n(ks[5], (1, 3 * dim)),
        w_proj=n(ks[6], (dim, dim)),     b_proj=n(ks[7], (1, dim)),
        g2=1.0 + n(ks[8], (1, dim)),     be2=n(ks[9], (1, dim)),
        w_fc1=n(ks[10], (dim, hidden)),  b_fc1=n(ks[11], (1, hidden)),
        w_fc2=n(ks[12], (hidden, dim)),  b_fc2=n(ks[13], (1, dim)),
    )


def block_reference(x, skip, p, *, num_heads):
    # Pure-JAX f32 mirror of the PyTorch forward for verification.
    B, N, D = x.shape
    hd = D // num_heads

    def ln(v, g, b):
        mu = v.mean(-1, keepdims=True)
        var = ((v - mu) ** 2).mean(-1, keepdims=True)
        return (v - mu) / jnp.sqrt(var + LN_EPS) * g + b

    x = jnp.concatenate([x, skip], -1) @ p["w_skip"] + p["b_skip"]
    h = ln(x, p["g1"], p["be1"])
    qkv = (h @ p["w_qkv"] + p["b_qkv"]).reshape(B, N, 3, num_heads, hd)
    qkv = qkv.transpose(2, 0, 3, 1, 4)
    q, k, v = qkv[0], qkv[1], qkv[2]
    att = jnp.einsum("bhnd,bhmd->bhnm", q, k) / math.sqrt(hd)
    att = jax.nn.softmax(att, axis=-1)
    o = jnp.einsum("bhnm,bhmd->bhnd", att, v).transpose(0, 2, 1, 3).reshape(B, N, D)
    x = x + (o @ p["w_proj"] + p["b_proj"])
    h2 = ln(x, p["g2"], p["be2"])
    m = h2 @ p["w_fc1"] + p["b_fc1"]
    m = 0.5 * m * (1.0 + jax.lax.erf(m / math.sqrt(2.0)))
    m = m @ p["w_fc2"] + p["b_fc2"]
    return x + m


if __name__ == "__main__":
    B, N, D, H = 2, 8, 32, 4   # batch=2, seq=8, dim=32, num_heads=4
    key = jax.random.PRNGKey(0)
    kx, ks, kp = jax.random.split(key, 3)
    x = jax.random.normal(kx, (B, N, D), jnp.float32)
    skip = jax.random.normal(ks, (B, N, D), jnp.float32)
    params = init_params(kp, D, 4 * D)

    # TODO(synk): timm Attention/Mlp dropout omitted (eval mode, p=0).
    out = block_forward(x, skip, params, num_heads=H)
    out = jax.block_until_ready(out)

    ref = block_reference(x, skip, params, num_heads=H)
    assert out.shape == (B, N, D)
    err = float(jnp.max(jnp.abs(out - ref)))
    # bf16 inputs/weights on the MXU => looser tolerance vs. the f32 reference.
    assert jnp.allclose(out, ref, rtol=3e-2, atol=3e-2), f"max abs err {err}"
    print("KERNEL_OK")
</pallas_src>

<mosaic_0001>
module attributes {stable_mosaic.version = 11 : i64} {
  func.func @block_kernel(%arg0: i32, %arg1: i32, %arg2: memref<1x8x32xbf16, #tpu.memory_space<vmem>>, %arg3: memref<1x8x32xbf16, #tpu.memory_space<vmem>>, %arg4: memref<32x32xbf16, #tpu.memory_space<vmem>>, %arg5: memref<32x32xbf16, #tpu.memory_space<vmem>>, %arg6: memref<1x32xf32, #tpu.memory_space<vmem>>, %arg7: memref<1x32xf32, #tpu.memory_space<vmem>>, %arg8: memref<1x32xf32, #tpu.memory_space<vmem>>, %arg9: memref<4x32x8xbf16, #tpu.memory_space<vmem>>, %arg10: memref<4x1x8xf32, #tpu.memory_space<vmem>>, %arg11: memref<4x32x8xbf16, #tpu.memory_space<vmem>>, %arg12: memref<4x1x8xf32, #tpu.memory_space<vmem>>, %arg13: memref<4x32x8xbf16, #tpu.memory_space<vmem>>, %arg14: memref<4x1x8xf32, #tpu.memory_space<vmem>>, %arg15: memref<4x8x32xbf16, #tpu.memory_space<vmem>>, %arg16: memref<1x32xf32, #tpu.memory_space<vmem>>, %arg17: memref<1x32xf32, #tpu.memory_space<vmem>>, %arg18: memref<1x32xf32, #tpu.memory_space<vmem>>, %arg19: memref<32x128xbf16, #tpu.memory_space<vmem>>, %arg20: memref<1x128xf32, #tpu.memory_space<vmem>>, %arg21: memref<128x32xbf16, #tpu.memory_space<vmem>>, %arg22: memref<1x32xf32, #tpu.memory_space<vmem>>, %arg23: memref<1x8x32xf32, #tpu.memory_space<vmem>>, %arg24: memref<8x32xf32, #tpu.memory_space<vmem>>, %arg25: memref<8x32xbf16, #tpu.memory_space<vmem>>, %arg26: memref<4x8x8xbf16, #tpu.memory_space<vmem>>, %arg27: memref<4x8x8xbf16, #tpu.memory_space<vmem>>) attributes {dimension_semantics = [#tpu.dimension_semantics<parallel>, #tpu.dimension_semantics<arbitrary>], iteration_bounds = array<i64: 2, 1>, scalar_prefetch = 0 : i64, scratch_operands = 4 : i64, tpu.core_type = #tpu.core_type<tc>, window_params = [{transform_indices = @transform_0, window_bounds = array<i64: 1, 8, 32>}, {transform_indices = @transform_1, window_bounds = array<i64: 1, 8, 32>}, {pipeline_mode = #tpu.pipeline_mode<synchronous>, transform_indices = @transform_2, window_bounds = array<i64: 32, 32>}, {pipeline_mode = #tpu.pipeline_mode<synchronous>, transform_indices = @transform_3, window_bounds = array<i64: 32, 32>}, {pipeline_mode = #tpu.pipeline_mode<synchronous>, transform_indices = @transform_4, window_bounds = array<i64: 1, 32>}, {pipeline_mode = #tpu.pipeline_mode<synchronous>, transform_indices = @transform_5, window_bounds = array<i64: 1, 32>}, {pipeline_mode = #tpu.pipeline_mode<synchronous>, transform_indices = @transform_6, window_bounds = array<i64: 1, 32>}, {pipeline_mode = #tpu.pipeline_mode<synchronous>, transform_indices = @transform_7, window_bounds = array<i64: 4, 32, 8>}, {pipeline_mode = #tpu.pipeline_mode<synchronous>, transform_indices = @transform_8, window_bounds = array<i64: 4, 1, 8>}, {pipeline_mode = #tpu.pipeline_mode<synchronous>, transform_indices = @transform_9, window_bounds = array<i64: 4, 32, 8>}, {pipeline_mode = #tpu.pipeline_mode<synchronous>, transform_indices = @transform_10, window_bounds = array<i64: 4, 1, 8>}, {pipeline_mode = #tpu.pipeline_mode<synchronous>, transform_indices = @transform_11, window_bounds = array<i64: 4, 32, 8>}, {pipeline_mode = #tpu.pipeline_mode<synchronous>, transform_indices = @transform_12, window_bounds = array<i64: 4, 1, 8>}, {pipeline_mode = #tpu.pipeline_mode<synchronous>, transform_indices = @transform_13, window_bounds = array<i64: 4, 8, 32>}, {pipeline_mode = #tpu.pipeline_mode<synchronous>, transform_indices = @transform_14, window_bounds = array<i64: 1, 32>}, {pipeline_mode = #tpu.pipeline_mode<synchronous>, transform_indices = @transform_15, window_bounds = array<i64: 1, 32>}, {pipeline_mode = #tpu.pipeline_mode<synchronous>, transform_indices = @transform_16, window_bounds = array<i64: 1, 32>}, {pipeline_mode = #tpu.pipeline_mode<synchronous>, transform_indices = @transform_17, window_bounds = array<i64: 32, 128>}, {pipeline_mode = #tpu.pipeline_mode<synchronous>, transform_indices = @transform_18, window_bounds = array<i64: 1, 128>}, {pipeline_mode = #tpu.pipeline_mode<synchronous>, transform_indices = @transform_19, window_bounds = array<i64: 128, 32>}, {pipeline_mode = #tpu.pipeline_mode<synchronous>, transform_indices = @transform_20, window_bounds = array<i64: 1, 32>}, {transform_indices = @transform_21, window_bounds = array<i64: 1, 8, 32>}]} {
    %c0_i32 = arith.constant 0 : i32
    %0 = arith.cmpi eq, %arg1, %c0_i32 : i32
    %1 = arith.extui %0 : i1 to i32
    %c0_i32_0 = arith.constant 0 : i32
    %2 = arith.cmpi ne, %1, %c0_i32_0 : i32
    scf.if %2 {
      %c0_31 = arith.constant 0 : index
      %c0_32 = arith.constant 0 : index
      %c0_33 = arith.constant 0 : index
      %62 = vector.load %arg2[%c0_31, %c0_32, %c0_33] : memref<1x8x32xbf16, #tpu.memory_space<vmem>>, vector<1x8x32xbf16>
      %63 = vector.shape_cast %62 : vector<1x8x32xbf16> to vector<8x32xbf16>
      %c0_34 = arith.constant 0 : index
      %c0_35 = arith.constant 0 : index
      %c0_36 = arith.constant 0 : index
      %64 = vector.load %arg3[%c0_34, %c0_35, %c0_36] : memref<1x8x32xbf16, #tpu.memory_space<vmem>>, vector<1x8x32xbf16>
      %65 = vector.shape_cast %64 : vector<1x8x32xbf16> to vector<8x32xbf16>
      %c0_37 = arith.constant 0 : index
      %c0_38 = arith.constant 0 : index
      %66 = vector.load %arg4[%c0_37, %c0_38] : memref<32x32xbf16, #tpu.memory_space<vmem>>, vector<32x32xbf16>
      %cst_39 = arith.constant dense<0.000000e+00> : vector<8x32xf32>
      %67 = tpu.matmul %63, %66, %cst_39 {dimension_numbers = #tpu.dot_dimension_numbers<[1], [0], [0], [1], [0, 0, 1, 1], [], []>} : vector<8x32xbf16>, vector<32x32xbf16>, vector<8x32xf32> -> vector<8x32xf32>
      %c0_40 = arith.constant 0 : index
      %c0_41 = arith.constant 0 : index
      %68 = vector.load %arg5[%c0_40, %c0_41] : memref<32x32xbf16, #tpu.memory_space<vmem>>, vector<32x32xbf16>
      %cst_42 = arith.constant dense<0.000000e+00> : vector<8x32xf32>
      %69 = tpu.matmul %65, %68, %cst_42 {dimension_numbers = #tpu.dot_dimension_numbers<[1], [0], [0], [1], [0, 0, 1, 1], [], []>} : vector<8x32xbf16>, vector<32x32xbf16>, vector<8x32xf32> -> vector<8x32xf32>
      %70 = arith.addf %67, %69 : vector<8x32xf32>
      %c0_43 = arith.constant 0 : index
      %c0_44 = arith.constant 0 : index
      %71 = vector.load %arg6[%c0_43, %c0_44] : memref<1x32xf32, #tpu.memory_space<vmem>>, vector<1x32xf32>
      %72 = vector.broadcast %71 : vector<1x32xf32> to vector<8x32xf32>
      %73 = arith.addf %70, %72 : vector<8x32xf32>
      %c0_45 = arith.constant 0 : index
      %c0_46 = arith.constant 0 : index
      %74 = vector.load %arg24[%c0_45, %c0_46] : memref<8x32xf32, #tpu.memory_space<vmem>>, vector<8x32xf32>
      tpu.vector_store %arg24[%c0_45, %c0_46], %73 {strides = array<i32>} : memref<8x32xf32, #tpu.memory_space<vmem>>, vector<8x32xf32>,
      %c0_47 = arith.constant 0 : index
      %c0_48 = arith.constant 0 : index
      %75 = vector.load %arg7[%c0_47, %c0_48] : memref<1x32xf32, #tpu.memory_space<vmem>>, vector<1x32xf32>
      %c0_49 = arith.constant 0 : index
      %c0_50 = arith.constant 0 : index
      %76 = vector.load %arg8[%c0_49, %c0_50] : memref<1x32xf32, #tpu.memory_space<vmem>>, vector<1x32xf32>
      %cst_51 = arith.constant dense<0.000000e+00> : vector<8xf32>
      %77 = vector.multi_reduction <add>, %73, %cst_51 [1] : vector<8x32xf32> to vector<8xf32>
      %78 = vector.shape_cast %77 : vector<8xf32> to vector<8x1xf32>
      %cst_52 = arith.constant 3.200000e+01 : f32
      %79 = vector.broadcast %cst_52 : f32 to vector<8x1xf32>
      %80 = arith.divf %78, %79 : vector<8x1xf32>
      %81 = vector.broadcast %80 : vector<8x1xf32> to vector<8x32xf32>
      %82 = arith.subf %73, %81 : vector<8x32xf32>
      %83 = arith.mulf %82, %82 : vector<8x32xf32>
      %cst_53 = arith.constant dense<0.000000e+00> : vector<8xf32>
      %84 = vector.multi_reduction <add>, %83, %cst_53 [1] : vector<8x32xf32> to vector<8xf32>
      %85 = vector.shape_cast %84 : vector<8xf32> to vector<8x1xf32>
      %cst_54 = arith.constant 3.200000e+01 : f32
      %86 = vector.broadcast %cst_54 : f32 to vector<8x1xf32>
      %87 = arith.divf %85, %86 : vector<8x1xf32>
      %cst_55 = arith.constant 9.99999974E-6 : f32
      %88 = vector.broadcast %cst_55 : f32 to vector<8x1xf32>
      %89 = arith.addf %87, %88 : vector<8x1xf32>
      %90 = math.rsqrt %89 : vector<8x1xf32>
      %91 = vector.broadcast %90 : vector<8x1xf32> to vector<8x32xf32>
      %92 = arith.mulf %82, %91 : vector<8x32xf32>
      %93 = vector.broadcast %75 : vector<1x32xf32> to vector<8x32xf32>
      %94 = arith.mulf %92, %93 : vector<8x32xf32>
      %95 = vector.broadcast %76 : vector<1x32xf32> to vector<8x32xf32>
      %96 = arith.addf %94, %95 : vector<8x32xf32>
      %97 = arith.truncf %96 : vector<8x32xf32> to vector<8x32xbf16>
      %c0_56 = arith.constant 0 : index
      %c0_57 = arith.constant 0 : index
      %98 = vector.load %arg25[%c0_56, %c0_57] : memref<8x32xbf16, #tpu.memory_space<vmem>>, vector<8x32xbf16>
      tpu.vector_store %arg25[%c0_56, %c0_57], %97 {strides = array<i32>} : memref<8x32xbf16, #tpu.memory_space<vmem>>, vector<8x32xbf16>,
      %c0_i32_58 = arith.constant 0 : i32
      %c4_i32_59 = arith.constant 4 : i32
      %99 = arith.addi %c0_i32_58, %c4_i32_59 : i32
      %c1_i32_60 = arith.constant 1 : i32
      scf.for %arg28 = %c0_i32_58 to %99 step %c1_i32_60  : i32 {
        %c1_i32_62 = arith.constant 1 : i32
        %100 = arith.muli %arg28, %c1_i32_62 : i32
        %c0_i32_63 = arith.constant 0 : i32
        %101 = arith.addi %c0_i32_63, %100 : i32
        %102 = arith.index_cast %101 : i32 to index
        %c0_64 = arith.constant 0 : index
        %c0_65 = arith.constant 0 : index
        %103 = vector.load %arg11[%102, %c0_64, %c0_65] : memref<4x32x8xbf16, #tpu.memory_space<vmem>>, vector<1x32x8xbf16>
        %104 = vector.shape_cast %103 : vector<1x32x8xbf16> to vector<32x8xbf16>
        %cst_66 = arith.constant dense<0.000000e+00> : vector<8x8xf32>
        %105 = tpu.matmul %97, %104, %cst_66 {dimension_numbers = #tpu.dot_dimension_numbers<[1], [0], [0], [1], [0, 0, 1, 1], [], []>} : vector<8x32xbf16>, vector<32x8xbf16>, vector<8x8xf32> -> vector<8x8xf32>
        %106 = arith.index_cast %101 : i32 to index
        %c0_67 = arith.constant 0 : index
        %c0_68 = arith.constant 0 : index
        %107 = vector.load %arg12[%106, %c0_67, %c0_68] : memref<4x1x8xf32, #tpu.memory_space<vmem>>, vector<1x1x8xf32>
        %108 = vector.shape_cast %107 : vector<1x1x8xf32> to vector<1x8xf32>
        %109 = vector.broadcast %108 : vector<1x8xf32> to vector<8x8xf32>
        %110 = arith.addf %105, %109 : vector<8x8xf32>
        %111 = arith.truncf %110 : vector<8x8xf32> to vector<8x8xbf16>
        %112 = arith.index_cast %101 : i32 to index
        %c0_69 = arith.constant 0 : index
        %c0_70 = arith.constant 0 : index
        %113 = vector.load %arg26[%112, %c0_69, %c0_70] : memref<4x8x8xbf16, #tpu.memory_space<vmem>>, vector<1x8x8xbf16>
        %114 = vector.shape_cast %113 : vector<1x8x8xbf16> to vector<8x8xbf16>
        %115 = vector.shape_cast %111 : vector<8x8xbf16> to vector<1x8x8xbf16>
        tpu.vector_store %arg26[%112, %c0_69, %c0_70], %115 {strides = array<i32>} : memref<4x8x8xbf16, #tpu.memory_space<vmem>>, vector<1x8x8xbf16>,
        %116 = arith.index_cast %101 : i32 to index
        %c0_71 = arith.constant 0 : index
        %c0_72 = arith.constant 0 : index
        %117 = vector.load %arg13[%116, %c0_71, %c0_72] : memref<4x32x8xbf16, #tpu.memory_space<vmem>>, vector<1x32x8xbf16>
        %118 = vector.shape_cast %117 : vector<1x32x8xbf16> to vector<32x8xbf16>
        %cst_73 = arith.constant dense<0.000000e+00> : vector<8x8xf32>
        %119 = tpu.matmul %97, %118, %cst_73 {dimension_numbers = #tpu.dot_dimension_numbers<[1], [0], [0], [1], [0, 0, 1, 1], [], []>} : vector<8x32xbf16>, vector<32x8xbf16>, vector<8x8xf32> -> vector<8x8xf32>
        %120 = arith.index_cast %101 : i32 to index
        %c0_74 = arith.constant 0 : index
        %c0_75 = arith.constant 0 : index
        %121 = vector.load %arg14[%120, %c0_74, %c0_75] : memref<4x1x8xf32, #tpu.memory_space<vmem>>, vector<1x1x8xf32>
        %122 = vector.shape_cast %121 : vector<1x1x8xf32> to vector<1x8xf32>
        %123 = vector.broadcast %122 : vector<1x8xf32> to vector<8x8xf32>
        %124 = arith.addf %119, %123 : vector<8x8xf32>
        %125 = arith.truncf %124 : vector<8x8xf32> to vector<8x8xbf16>
        %126 = arith.index_cast %101 : i32 to index
        %c0_76 = arith.constant 0 : index
        %c0_77 = arith.constant 0 : index
        %127 = vector.load %arg27[%126, %c0_76, %c0_77] : memref<4x8x8xbf16, #tpu.memory_space<vmem>>, vector<1x8x8xbf16>
        %128 = vector.shape_cast %127 : vector<1x8x8xbf16> to vector<8x8xbf16>
        %129 = vector.shape_cast %125 : vector<8x8xbf16> to vector<1x8x8xbf16>
        tpu.vector_store %arg27[%126, %c0_76, %c0_77], %129 {strides = array<i32>} : memref<4x8x8xbf16, #tpu.memory_space<vmem>>, vector<1x8x8xbf16>,
      }
      %c4_i32_61 = arith.constant 4 : i32
    } else {
    }
    %c8_i32 = arith.constant 8 : i32
    %3 = arith.muli %arg1, %c8_i32 : i32
    %4 = tpu.assume_multiple %3, 8 : i32
    %5 = arith.index_cast %4 : i32 to index
    %c0 = arith.constant 0 : index
    %6 = vector.load %arg24[%5, %c0] : memref<8x32xf32, #tpu.memory_space<vmem>>, vector<8x32xf32>
    %7 = arith.index_cast %4 : i32 to index
    %c0_1 = arith.constant 0 : index
    %8 = vector.load %arg25[%7, %c0_1] : memref<8x32xbf16, #tpu.memory_space<vmem>>, vector<8x32xbf16>
    %cst = arith.constant 0.000000e+00 : f32
    %9 = vector.broadcast %cst : f32 to vector<8x32xf32>
    %c0_i32_2 = arith.constant 0 : i32
    %c4_i32 = arith.constant 4 : i32
    %10 = arith.addi %c0_i32_2, %c4_i32 : i32
    %c1_i32 = arith.constant 1 : i32
    %11 = scf.for %arg28 = %c0_i32_2 to %10 step %c1_i32 iter_args(%arg29 = %9) -> (vector<8x32xf32>)  : i32 {
      %62 = arith.index_cast %arg28 : i32 to index
      %c0_31 = arith.constant 0 : index
      %c0_32 = arith.constant 0 : index
      %63 = vector.load %arg9[%62, %c0_31, %c0_32] : memref<4x32x8xbf16, #tpu.memory_space<vmem>>, vector<1x32x8xbf16>
      %64 = vector.shape_cast %63 : vector<1x32x8xbf16> to vector<32x8xbf16>
      %cst_33 = arith.constant dense<0.000000e+00> : vector<8x8xf32>
      %65 = tpu.matmul %8, %64, %cst_33 {dimension_numbers = #tpu.dot_dimension_numbers<[1], [0], [0], [1], [0, 0, 1, 1], [], []>} : vector<8x32xbf16>, vector<32x8xbf16>, vector<8x8xf32> -> vector<8x8xf32>
      %66 = arith.index_cast %arg28 : i32 to index
      %c0_34 = arith.constant 0 : index
      %c0_35 = arith.constant 0 : index
      %67 = vector.load %arg10[%66, %c0_34, %c0_35] : memref<4x1x8xf32, #tpu.memory_space<vmem>>, vector<1x1x8xf32>
      %68 = vector.shape_cast %67 : vector<1x1x8xf32> to vector<1x8xf32>
      %69 = vector.broadcast %68 : vector<1x8xf32> to vector<8x8xf32>
      %70 = arith.addf %65, %69 : vector<8x8xf32>
      %71 = arith.truncf %70 : vector<8x8xf32> to vector<8x8xbf16>
      %72 = arith.index_cast %arg28 : i32 to index
      %c0_36 = arith.constant 0 : index
      %c0_37 = arith.constant 0 : index
      %73 = vector.load %arg26[%72, %c0_36, %c0_37] : memref<4x8x8xbf16, #tpu.memory_space<vmem>>, vector<1x8x8xbf16>
      %74 = vector.shape_cast %73 : vector<1x8x8xbf16> to vector<8x8xbf16>
      %cst_38 = arith.constant dense<0.000000e+00> : vector<8x8xf32>
      %75 = tpu.matmul %71, %74, %cst_38 {dimension_numbers = #tpu.dot_dimension_numbers<[1], [1], [0], [0], [0, 0, 1, 0], [], []>} : vector<8x8xbf16>, vector<8x8xbf16>, vector<8x8xf32> -> vector<8x8xf32>
      %cst_39 = arith.constant dense<0xFF800000> : vector<8xf32>
      %76 = vector.multi_reduction <maximumf>, %75, %cst_39 [1] : vector<8x8xf32> to vector<8xf32>
      %77 = vector.shape_cast %76 : vector<8xf32> to vector<8x1xf32>
      %78 = vector.broadcast %77 : vector<8x1xf32> to vector<8x8xf32>
      %79 = arith.subf %75, %78 : vector<8x8xf32>
      %80 = math.exp %79 : vector<8x8xf32>
      %cst_40 = arith.constant dense<0.000000e+00> : vector<8xf32>
      %81 = vector.multi_reduction <add>, %80, %cst_40 [1] : vector<8x8xf32> to vector<8xf32>
      %82 = vector.shape_cast %81 : vector<8xf32> to vector<8x1xf32>
      %83 = arith.truncf %80 : vector<8x8xf32> to vector<8x8xbf16>
      %84 = arith.index_cast %arg28 : i32 to index
      %c0_41 = arith.constant 0 : index
      %c0_42 = arith.constant 0 : index
      %85 = vector.load %arg27[%84, %c0_41, %c0_42] : memref<4x8x8xbf16, #tpu.memory_space<vmem>>, vector<1x8x8xbf16>
      %86 = vector.shape_cast %85 : vector<1x8x8xbf16> to vector<8x8xbf16>
      %cst_43 = arith.constant dense<0.000000e+00> : vector<8x8xf32>
      %87 = tpu.matmul %83, %86, %cst_43 {dimension_numbers = #tpu.dot_dimension_numbers<[1], [0], [0], [1], [0, 0, 1, 1], [], []>} : vector<8x8xbf16>, vector<8x8xbf16>, vector<8x8xf32> -> vector<8x8xf32>
      %88 = vector.broadcast %82 : vector<8x1xf32> to vector<8x8xf32>
      %89 = arith.divf %87, %88 : vector<8x8xf32>
      %90 = arith.truncf %89 : vector<8x8xf32> to vector<8x8xbf16>
      %91 = arith.index_cast %arg28 : i32 to index
      %c0_44 = arith.constant 0 : index
      %c0_45 = arith.constant 0 : index
      %92 = vector.load %arg15[%91, %c0_44, %c0_45] : memref<4x8x32xbf16, #tpu.memory_space<vmem>>, vector<1x8x32xbf16>
      %93 = vector.shape_cast %92 : vector<1x8x32xbf16> to vector<8x32xbf16>
      %cst_46 = arith.constant dense<0.000000e+00> : vector<8x32xf32>
      %94 = tpu.matmul %90, %93, %cst_46 {dimension_numbers = #tpu.dot_dimension_numbers<[1], [0], [0], [1], [0, 0, 1, 1], [], []>} : vector<8x8xbf16>, vector<8x32xbf16>, vector<8x32xf32> -> vector<8x32xf32>
      %95 = arith.addf %arg29, %94 : vector<8x32xf32>
      scf.yield %95 : vector<8x32xf32>
    }
    %c4_i32_3 = arith.constant 4 : i32
    %12 = arith.addf %6, %11 : vector<8x32xf32>
    %c0_4 = arith.constant 0 : index
    %c0_5 = arith.constant 0 : index
    %13 = vector.load %arg16[%c0_4, %c0_5] : memref<1x32xf32, #tpu.memory_space<vmem>>, vector<1x32xf32>
    %14 = vector.broadcast %13 : vector<1x32xf32> to vector<8x32xf32>
    %15 = arith.addf %12, %14 : vector<8x32xf32>
    %c0_6 = arith.constant 0 : index
    %c0_7 = arith.constant 0 : index
    %16 = vector.load %arg17[%c0_6, %c0_7] : memref<1x32xf32, #tpu.memory_space<vmem>>, vector<1x32xf32>
    %c0_8 = arith.constant 0 : index
    %c0_9 = arith.constant 0 : index
    %17 = vector.load %arg18[%c0_8, %c0_9] : memref<1x32xf32, #tpu.memory_space<vmem>>, vector<1x32xf32>
    %cst_10 = arith.constant dense<0.000000e+00> : vector<8xf32>
    %18 = vector.multi_reduction <add>, %15, %cst_10 [1] : vector<8x32xf32> to vector<8xf32>
    %19 = vector.shape_cast %18 : vector<8xf32> to vector<8x1xf32>
    %cst_11 = arith.constant 3.200000e+01 : f32
    %20 = vector.broadcast %cst_11 : f32 to vector<8x1xf32>
    %21 = arith.divf %19, %20 : vector<8x1xf32>
    %22 = vector.broadcast %21 : vector<8x1xf32> to vector<8x32xf32>
    %23 = arith.subf %15, %22 : vector<8x32xf32>
    %24 = arith.mulf %23, %23 : vector<8x32xf32>
    %cst_12 = arith.constant dense<0.000000e+00> : vector<8xf32>
    %25 = vector.multi_reduction <add>, %24, %cst_12 [1] : vector<8x32xf32> to vector<8xf32>
    %26 = vector.shape_cast %25 : vector<8xf32> to vector<8x1xf32>
    %cst_13 = arith.constant 3.200000e+01 : f32
    %27 = vector.broadcast %cst_13 : f32 to vector<8x1xf32>
    %28 = arith.divf %26, %27 : vector<8x1xf32>
    %cst_14 = arith.constant 9.99999974E-6 : f32
    %29 = vector.broadcast %cst_14 : f32 to vector<8x1xf32>
    %30 = arith.addf %28, %29 : vector<8x1xf32>
    %31 = math.rsqrt %30 : vector<8x1xf32>
    %32 = vector.broadcast %31 : vector<8x1xf32> to vector<8x32xf32>
    %33 = arith.mulf %23, %32 : vector<8x32xf32>
    %34 = vector.broadcast %16 : vector<1x32xf32> to vector<8x32xf32>
    %35 = arith.mulf %33, %34 : vector<8x32xf32>
    %36 = vector.broadcast %17 : vector<1x32xf32> to vector<8x32xf32>
    %37 = arith.addf %35, %36 : vector<8x32xf32>
    %38 = arith.truncf %37 : vector<8x32xf32> to vector<8x32xbf16>
    %c0_15 = arith.constant 0 : index
    %c0_16 = arith.constant 0 : index
    %39 = vector.load %arg19[%c0_15, %c0_16] : memref<32x128xbf16, #tpu.memory_space<vmem>>, vector<32x128xbf16>
    %cst_17 = arith.constant dense<0.000000e+00> : vector<8x128xf32>
    %40 = tpu.matmul %38, %39, %cst_17 {dimension_numbers = #tpu.dot_dimension_numbers<[1], [0], [0], [1], [0, 0, 1, 1], [], []>} : vector<8x32xbf16>, vector<32x128xbf16>, vector<8x128xf32> -> vector<8x128xf32>
    %c0_18 = arith.constant 0 : index
    %c0_19 = arith.constant 0 : index
    %41 = vector.load %arg20[%c0_18, %c0_19] : memref<1x128xf32, #tpu.memory_space<vmem>>, vector<1x128xf32>
    %42 = vector.broadcast %41 : vector<1x128xf32> to vector<8x128xf32>
    %43 = arith.addf %40, %42 : vector<8x128xf32>
    %cst_20 = arith.constant 5.000000e-01 : f32
    %44 = vector.broadcast %cst_20 : f32 to vector<8x128xf32>
    %45 = arith.mulf %44, %43 : vector<8x128xf32>
    %cst_21 = arith.constant 0.707106769 : f32
    %46 = vector.broadcast %cst_21 : f32 to vector<8x128xf32>
    %47 = arith.mulf %43, %46 : vector<8x128xf32>
    %48 = math.erf %47 : vector<8x128xf32>
    %cst_22 = arith.constant 1.000000e+00 : f32
    %49 = vector.broadcast %cst_22 : f32 to vector<8x128xf32>
    %50 = arith.addf %49, %48 : vector<8x128xf32>
    %51 = arith.mulf %45, %50 : vector<8x128xf32>
    %52 = arith.truncf %51 : vector<8x128xf32> to vector<8x128xbf16>
    %c0_23 = arith.constant 0 : index
    %c0_24 = arith.constant 0 : index
    %53 = vector.load %arg21[%c0_23, %c0_24] : memref<128x32xbf16, #tpu.memory_space<vmem>>, vector<128x32xbf16>
    %cst_25 = arith.constant dense<0.000000e+00> : vector<8x32xf32>
    %54 = tpu.matmul %52, %53, %cst_25 {dimension_numbers = #tpu.dot_dimension_numbers<[1], [0], [0], [1], [0, 0, 1, 1], [], []>} : vector<8x128xbf16>, vector<128x32xbf16>, vector<8x32xf32> -> vector<8x32xf32>
    %c0_26 = arith.constant 0 : index
    %c0_27 = arith.constant 0 : index
    %55 = vector.load %arg22[%c0_26, %c0_27] : memref<1x32xf32, #tpu.memory_space<vmem>>, vector<1x32xf32>
    %56 = vector.broadcast %55 : vector<1x32xf32> to vector<8x32xf32>
    %57 = arith.addf %54, %56 : vector<8x32xf32>
    %58 = arith.addf %15, %57 : vector<8x32xf32>
    %c0_28 = arith.constant 0 : index
    %c0_29 = arith.constant 0 : index
    %c0_30 = arith.constant 0 : index
    %59 = vector.load %arg23[%c0_28, %c0_29, %c0_30] : memref<1x8x32xf32, #tpu.memory_space<vmem>>, vector<1x8x32xf32>
    %60 = vector.shape_cast %59 : vector<1x8x32xf32> to vector<8x32xf32>
    %61 = vector.shape_cast %58 : vector<8x32xf32> to vector<1x8x32xf32>
    tpu.vector_store %arg23[%c0_28, %c0_29, %c0_30], %61 {strides = array<i32>} : memref<1x8x32xf32, #tpu.memory_space<vmem>>, vector<1x8x32xf32>,
    return
  }
  func.func @transform_0(%arg0: i32, %arg1: i32) -> (i32, i32, i32) {
    %c0_i32 = arith.constant 0 : i32
    %c0_i32_0 = arith.constant 0 : i32
    %c0_i32_1 = arith.constant 0 : i32
    return %arg0, %c0_i32, %c0_i32_0 : i32, i32, i32
  }
  func.func @transform_1(%arg0: i32, %arg1: i32) -> (i32, i32, i32) {
    %c0_i32 = arith.constant 0 : i32
    %c0_i32_0 = arith.constant 0 : i32
    %c0_i32_1 = arith.constant 0 : i32
    return %arg0, %c0_i32, %c0_i32_0 : i32, i32, i32
  }
  func.func @transform_2(%arg0: i32, %arg1: i32) -> (i32, i32) {
    %c0_i32 = arith.constant 0 : i32
    %c0_i32_0 = arith.constant 0 : i32
    %c0_i32_1 = arith.constant 0 : i32
    return %c0_i32, %c0_i32_0 : i32, i32
  }
  func.func @transform_3(%arg0: i32, %arg1: i32) -> (i32, i32) {
    %c0_i32 = arith.constant 0 : i32
    %c0_i32_0 = arith.constant 0 : i32
    %c0_i32_1 = arith.constant 0 : i32
    return %c0_i32, %c0_i32_0 : i32, i32
  }
  func.func @transform_4(%arg0: i32, %arg1: i32) -> (i32, i32) {
    %c0_i32 = arith.constant 0 : i32
    %c0_i32_0 = arith.constant 0 : i32
    %c0_i32_1 = arith.constant 0 : i32
    return %c0_i32, %c0_i32_0 : i32, i32
  }
  func.func @transform_5(%arg0: i32, %arg1: i32) -> (i32, i32) {
    %c0_i32 = arith.constant 0 : i32
    %c0_i32_0 = arith.constant 0 : i32
    %c0_i32_1 = arith.constant 0 : i32
    return %c0_i32, %c0_i32_0 : i32, i32
  }
  func.func @transform_6(%arg0: i32, %arg1: i32) -> (i32, i32) {
    %c0_i32 = arith.constant 0 : i32
    %c0_i32_0 = arith.constant 0 : i32
    %c0_i32_1 = arith.constant 0 : i32
    return %c0_i32, %c0_i32_0 : i32, i32
  }
  func.func @transform_7(%arg0: i32, %arg1: i32) -> (i32, i32, i32) {
    %c0_i32 = arith.constant 0 : i32
    %c0_i32_0 = arith.constant 0 : i32
    %c0_i32_1 = arith.constant 0 : i32
    %c0_i32_2 = arith.constant 0 : i32
    return %c0_i32, %c0_i32_0, %c0_i32_1 : i32, i32, i32
  }
  func.func @transform_8(%arg0: i32, %arg1: i32) -> (i32, i32, i32) {
    %c0_i32 = arith.constant 0 : i32
    %c0_i32_0 = arith.constant 0 : i32
    %c0_i32_1 = arith.constant 0 : i32
    %c0_i32_2 = arith.constant 0 : i32
    return %c0_i32, %c0_i32_0, %c0_i32_1 : i32, i32, i32
  }
  func.func @transform_9(%arg0: i32, %arg1: i32) -> (i32, i32, i32) {
    %c0_i32 = arith.constant 0 : i32
    %c0_i32_0 = arith.constant 0 : i32
    %c0_i32_1 = arith.constant 0 : i32
    %c0_i32_2 = arith.constant 0 : i32
    return %c0_i32, %c0_i32_0, %c0_i32_1 : i32, i32, i32
  }
  func.func @transform_10(%arg0: i32, %arg1: i32) -> (i32, i32, i32) {
    %c0_i32 = arith.constant 0 : i32
    %c0_i32_0 = arith.constant 0 : i32
    %c0_i32_1 = arith.constant 0 : i32
    %c0_i32_2 = arith.constant 0 : i32
    return %c0_i32, %c0_i32_0, %c0_i32_1 : i32, i32, i32
  }
  func.func @transform_11(%arg0: i32, %arg1: i32) -> (i32, i32, i32) {
    %c0_i32 = arith.constant 0 : i32
    %c0_i32_0 = arith.constant 0 : i32
    %c0_i32_1 = arith.constant 0 : i32
    %c0_i32_2 = arith.constant 0 : i32
    return %c0_i32, %c0_i32_0, %c0_i32_1 : i32, i32, i32
  }
  func.func @transform_12(%arg0: i32, %arg1: i32) -> (i32, i32, i32) {
    %c0_i32 = arith.constant 0 : i32
    %c0_i32_0 = arith.constant 0 : i32
    %c0_i32_1 = arith.constant 0 : i32
    %c0_i32_2 = arith.constant 0 : i32
    return %c0_i32, %c0_i32_0, %c0_i32_1 : i32, i32, i32
  }
  func.func @transform_13(%arg0: i32, %arg1: i32) -> (i32, i32, i32) {
    %c0_i32 = arith.constant 0 : i32
    %c0_i32_0 = arith.constant 0 : i32
    %c0_i32_1 = arith.constant 0 : i32
    %c0_i32_2 = arith.constant 0 : i32
    return %c0_i32, %c0_i32_0, %c0_i32_1 : i32, i32, i32
  }
  func.func @transform_14(%arg0: i32, %arg1: i32) -> (i32, i32) {
    %c0_i32 = arith.constant 0 : i32
    %c0_i32_0 = arith.constant 0 : i32
    %c0_i32_1 = arith.constant 0 : i32
    return %c0_i32, %c0_i32_0 : i32, i32
  }
  func.func @transform_15(%arg0: i32, %arg1: i32) -> (i32, i32) {
    %c0_i32 = arith.constant 0 : i32
    %c0_i32_0 = arith.constant 0 : i32
    %c0_i32_1 = arith.constant 0 : i32
    return %c0_i32, %c0_i32_0 : i32, i32
  }
  func.func @transform_16(%arg0: i32, %arg1: i32) -> (i32, i32) {
    %c0_i32 = arith.constant 0 : i32
    %c0_i32_0 = arith.constant 0 : i32
    %c0_i32_1 = arith.constant 0 : i32
    return %c0_i32, %c0_i32_0 : i32, i32
  }
  func.func @transform_17(%arg0: i32, %arg1: i32) -> (i32, i32) {
    %c0_i32 = arith.constant 0 : i32
    %c0_i32_0 = arith.constant 0 : i32
    %c0_i32_1 = arith.constant 0 : i32
    return %c0_i32, %c0_i32_0 : i32, i32
  }
  func.func @transform_18(%arg0: i32, %arg1: i32) -> (i32, i32) {
    %c0_i32 = arith.constant 0 : i32
    %c0_i32_0 = arith.constant 0 : i32
    %c0_i32_1 = arith.constant 0 : i32
    return %c0_i32, %c0_i32_0 : i32, i32
  }
  func.func @transform_19(%arg0: i32, %arg1: i32) -> (i32, i32) {
    %c0_i32 = arith.constant 0 : i32
    %c0_i32_0 = arith.constant 0 : i32
    %c0_i32_1 = arith.constant 0 : i32
    return %c0_i32, %c0_i32_0 : i32, i32
  }
  func.func @transform_20(%arg0: i32, %arg1: i32) -> (i32, i32) {
    %c0_i32 = arith.constant 0 : i32
    %c0_i32_0 = arith.constant 0 : i32
    %c0_i32_1 = arith.constant 0 : i32
    return %c0_i32, %c0_i32_0 : i32, i32
  }
  func.func @transform_21(%arg0: i32, %arg1: i32) -> (i32, i32, i32) {
    %c0_i32 = arith.constant 0 : i32
    %c0_i32_0 = arith.constant 0 : i32
    return %arg0, %arg1, %c0_i32 : i32, i32, i32
  }
}

module attributes {stable_mosaic.version = 11 : i64} {
  func.func @block_kernel(%arg0: i32, %arg1: i32, %arg2: memref<1x8x32xbf16, #tpu.memory_space<vmem>>, %arg3: memref<1x8x32xbf16, #tpu.memory_space<vmem>>, %arg4: memref<32x32xbf16, #tpu.memory_space<vmem>>, %arg5: memref<32x32xbf16, #tpu.memory_space<vmem>>, %arg6: memref<1x32xf32, #tpu.memory_space<vmem>>, %arg7: memref<1x32xf32, #tpu.memory_space<vmem>>, %arg8: memref<1x32xf32, #tpu.memory_space<vmem>>, %arg9: memref<4x32x8xbf16, #tpu.memory_space<vmem>>, %arg10: memref<4x1x8xf32, #tpu.memory_space<vmem>>, %arg11: memref<4x32x8xbf16, #tpu.memory_space<vmem>>, %arg12: memref<4x1x8xf32, #tpu.memory_space<vmem>>, %arg13: memref<4x32x8xbf16, #tpu.memory_space<vmem>>, %arg14: memref<4x1x8xf32, #tpu.memory_space<vmem>>, %arg15: memref<4x8x32xbf16, #tpu.memory_space<vmem>>, %arg16: memref<1x32xf32, #tpu.memory_space<vmem>>, %arg17: memref<1x32xf32, #tpu.memory_space<vmem>>, %arg18: memref<1x32xf32, #tpu.memory_space<vmem>>, %arg19: memref<32x128xbf16, #tpu.memory_space<vmem>>, %arg20: memref<1x128xf32, #tpu.memory_space<vmem>>, %arg21: memref<128x32xbf16, #tpu.memory_space<vmem>>, %arg22: memref<1x32xf32, #tpu.memory_space<vmem>>, %arg23: memref<1x8x32xf32, #tpu.memory_space<vmem>>, %arg24: memref<8x32xf32, #tpu.memory_space<vmem>>, %arg25: memref<8x32xbf16, #tpu.memory_space<vmem>>, %arg26: memref<4x8x8xbf16, #tpu.memory_space<vmem>>, %arg27: memref<4x8x8xbf16, #tpu.memory_space<vmem>>) attributes {dimension_semantics = [#tpu.dimension_semantics<parallel>, #tpu.dimension_semantics<arbitrary>], iteration_bounds = array<i64: 2, 1>, scalar_prefetch = 0 : i64, scratch_operands = 4 : i64, tpu.core_type = #tpu.core_type<tc>, window_params = [{transform_indices = @transform_0, window_bounds = array<i64: 1, 8, 32>}, {transform_indices = @transform_1, window_bounds = array<i64: 1, 8, 32>}, {pipeline_mode = #tpu.pipeline_mode<synchronous>, transform_indices = @transform_2, window_bounds = array<i64: 32, 32>}, {pipeline_mode = #tpu.pipeline_mode<synchronous>, transform_indices = @transform_3, window_bounds = array<i64: 32, 32>}, {pipeline_mode = #tpu.pipeline_mode<synchronous>, transform_indices = @transform_4, window_bounds = array<i64: 1, 32>}, {pipeline_mode = #tpu.pipeline_mode<synchronous>, transform_indices = @transform_5, window_bounds = array<i64: 1, 32>}, {pipeline_mode = #tpu.pipeline_mode<synchronous>, transform_indices = @transform_6, window_bounds = array<i64: 1, 32>}, {pipeline_mode = #tpu.pipeline_mode<synchronous>, transform_indices = @transform_7, window_bounds = array<i64: 4, 32, 8>}, {pipeline_mode = #tpu.pipeline_mode<synchronous>, transform_indices = @transform_8, window_bounds = array<i64: 4, 1, 8>}, {pipeline_mode = #tpu.pipeline_mode<synchronous>, transform_indices = @transform_9, window_bounds = array<i64: 4, 32, 8>}, {pipeline_mode = #tpu.pipeline_mode<synchronous>, transform_indices = @transform_10, window_bounds = array<i64: 4, 1, 8>}, {pipeline_mode = #tpu.pipeline_mode<synchronous>, transform_indices = @transform_11, window_bounds = array<i64: 4, 32, 8>}, {pipeline_mode = #tpu.pipeline_mode<synchronous>, transform_indices = @transform_12, window_bounds = array<i64: 4, 1, 8>}, {pipeline_mode = #tpu.pipeline_mode<synchronous>, transform_indices = @transform_13, window_bounds = array<i64: 4, 8, 32>}, {pipeline_mode = #tpu.pipeline_mode<synchronous>, transform_indices = @transform_14, window_bounds = array<i64: 1, 32>}, {pipeline_mode = #tpu.pipeline_mode<synchronous>, transform_indices = @transform_15, window_bounds = array<i64: 1, 32>}, {pipeline_mode = #tpu.pipeline_mode<synchronous>, transform_indices = @transform_16, window_bounds = array<i64: 1, 32>}, {pipeline_mode = #tpu.pipeline_mode<synchronous>, transform_indices = @transform_17, window_bounds = array<i64: 32, 128>}, {pipeline_mode = #tpu.pipeline_mode<synchronous>, transform_indices = @transform_18, window_bounds = array<i64: 1, 128>}, {pipeline_mode = #tpu.pipeline_mode<synchronous>, transform_indices = @transform_19, window_bounds = array<i64: 128, 32>}, {pipeline_mode = #tpu.pipeline_mode<synchronous>, transform_indices = @transform_20, window_bounds = array<i64: 1, 32>}, {transform_indices = @transform_21, window_bounds = array<i64: 1, 8, 32>}]} {
    %c0_i32 = arith.constant 0 : i32
    %0 = arith.cmpi eq, %arg1, %c0_i32 : i32
    %1 = arith.extui %0 : i1 to i32
    %c0_i32_0 = arith.constant 0 : i32
    %2 = arith.cmpi ne, %1, %c0_i32_0 : i32
    scf.if %2 {
      %c0_31 = arith.constant 0 : index
      %c0_32 = arith.constant 0 : index
      %c0_33 = arith.constant 0 : index
      %62 = vector.load %arg2[%c0_31, %c0_32, %c0_33] : memref<1x8x32xbf16, #tpu.memory_space<vmem>>, vector<1x8x32xbf16>
      %63 = vector.shape_cast %62 : vector<1x8x32xbf16> to vector<8x32xbf16>
      %c0_34 = arith.constant 0 : index
      %c0_35 = arith.constant 0 : index
      %c0_36 = arith.constant 0 : index
      %64 = vector.load %arg3[%c0_34, %c0_35, %c0_36] : memref<1x8x32xbf16, #tpu.memory_space<vmem>>, vector<1x8x32xbf16>
      %65 = vector.shape_cast %64 : vector<1x8x32xbf16> to vector<8x32xbf16>
      %c0_37 = arith.constant 0 : index
      %c0_38 = arith.constant 0 : index
      %66 = vector.load %arg4[%c0_37, %c0_38] : memref<32x32xbf16, #tpu.memory_space<vmem>>, vector<32x32xbf16>
      %cst_39 = arith.constant dense<0.000000e+00> : vector<8x32xf32>
      %67 = tpu.matmul %63, %66, %cst_39 {dimension_numbers = #tpu.dot_dimension_numbers<[1], [0], [0], [1], [0, 0, 1, 1], [], []>} : vector<8x32xbf16>, vector<32x32xbf16>, vector<8x32xf32> -> vector<8x32xf32>
      %c0_40 = arith.constant 0 : index
      %c0_41 = arith.constant 0 : index
      %68 = vector.load %arg5[%c0_40, %c0_41] : memref<32x32xbf16, #tpu.memory_space<vmem>>, vector<32x32xbf16>
      %cst_42 = arith.constant dense<0.000000e+00> : vector<8x32xf32>
      %69 = tpu.matmul %65, %68, %cst_42 {dimension_numbers = #tpu.dot_dimension_numbers<[1], [0], [0], [1], [0, 0, 1, 1], [], []>} : vector<8x32xbf16>, vector<32x32xbf16>, vector<8x32xf32> -> vector<8x32xf32>
      %70 = arith.addf %67, %69 : vector<8x32xf32>
      %c0_43 = arith.constant 0 : index
      %c0_44 = arith.constant 0 : index
      %71 = vector.load %arg6[%c0_43, %c0_44] : memref<1x32xf32, #tpu.memory_space<vmem>>, vector<1x32xf32>
      %72 = vector.broadcast %71 : vector<1x32xf32> to vector<8x32xf32>
      %73 = arith.addf %70, %72 : vector<8x32xf32>
      %c0_45 = arith.constant 0 : index
      %c0_46 = arith.constant 0 : index
      %74 = vector.load %arg24[%c0_45, %c0_46] : memref<8x32xf32, #tpu.memory_space<vmem>>, vector<8x32xf32>
      tpu.vector_store %arg24[%c0_45, %c0_46], %73 {strides = array<i32>} : memref<8x32xf32, #tpu.memory_space<vmem>>, vector<8x32xf32>,
      %c0_47 = arith.constant 0 : index
      %c0_48 = arith.constant 0 : index
      %75 = vector.load %arg7[%c0_47, %c0_48] : memref<1x32xf32, #tpu.memory_space<vmem>>, vector<1x32xf32>
      %c0_49 = arith.constant 0 : index
      %c0_50 = arith.constant 0 : index
      %76 = vector.load %arg8[%c0_49, %c0_50] : memref<1x32xf32, #tpu.memory_space<vmem>>, vector<1x32xf32>
      %cst_51 = arith.constant dense<0.000000e+00> : vector<8xf32>
      %77 = vector.multi_reduction <add>, %73, %cst_51 [1] : vector<8x32xf32> to vector<8xf32>
      %78 = vector.shape_cast %77 : vector<8xf32> to vector<8x1xf32>
      %cst_52 = arith.constant 3.200000e+01 : f32
      %79 = vector.broadcast %cst_52 : f32 to vector<8x1xf32>
      %80 = arith.divf %78, %79 : vector<8x1xf32>
      %81 = vector.broadcast %80 : vector<8x1xf32> to vector<8x32xf32>
      %82 = arith.subf %73, %81 : vector<8x32xf32>
      %83 = arith.mulf %82, %82 : vector<8x32xf32>
      %cst_53 = arith.constant dense<0.000000e+00> : vector<8xf32>
      %84 = vector.multi_reduction <add>, %83, %cst_53 [1] : vector<8x32xf32> to vector<8xf32>
      %85 = vector.shape_cast %84 : vector<8xf32> to vector<8x1xf32>
      %cst_54 = arith.constant 3.200000e+01 : f32
      %86 = vector.broadcast %cst_54 : f32 to vector<8x1xf32>
      %87 = arith.divf %85, %86 : vector<8x1xf32>
      %cst_55 = arith.constant 9.99999974E-6 : f32
      %88 = vector.broadcast %cst_55 : f32 to vector<8x1xf32>
      %89 = arith.addf %87, %88 : vector<8x1xf32>
      %90 = math.rsqrt %89 : vector<8x1xf32>
      %91 = vector.broadcast %90 : vector<8x1xf32> to vector<8x32xf32>
      %92 = arith.mulf %82, %91 : vector<8x32xf32>
      %93 = vector.broadcast %75 : vector<1x32xf32> to vector<8x32xf32>
      %94 = arith.mulf %92, %93 : vector<8x32xf32>
      %95 = vector.broadcast %76 : vector<1x32xf32> to vector<8x32xf32>
      %96 = arith.addf %94, %95 : vector<8x32xf32>
      %97 = arith.truncf %96 : vector<8x32xf32> to vector<8x32xbf16>
      %c0_56 = arith.constant 0 : index
      %c0_57 = arith.constant 0 : index
      %98 = vector.load %arg25[%c0_56, %c0_57] : memref<8x32xbf16, #tpu.memory_space<vmem>>, vector<8x32xbf16>
      tpu.vector_store %arg25[%c0_56, %c0_57], %97 {strides = array<i32>} : memref<8x32xbf16, #tpu.memory_space<vmem>>, vector<8x32xbf16>,
      %c0_i32_58 = arith.constant 0 : i32
      %c4_i32_59 = arith.constant 4 : i32
      %99 = arith.addi %c0_i32_58, %c4_i32_59 : i32
      %c1_i32_60 = arith.constant 1 : i32
      scf.for %arg28 = %c0_i32_58 to %99 step %c1_i32_60  : i32 {
        %c1_i32_62 = arith.constant 1 : i32
        %100 = arith.muli %arg28, %c1_i32_62 : i32
        %c0_i32_63 = arith.constant 0 : i32
        %101 = arith.addi %c0_i32_63, %100 : i32
        %102 = arith.index_cast %101 : i32 to index
        %c0_64 = arith.constant 0 : index
        %c0_65 = arith.constant 0 : index
        %103 = vector.load %arg11[%102, %c0_64, %c0_65] : memref<4x32x8xbf16, #tpu.memory_space<vmem>>, vector<1x32x8xbf16>
        %104 = vector.shape_cast %103 : vector<1x32x8xbf16> to vector<32x8xbf16>
        %cst_66 = arith.constant dense<0.000000e+00> : vector<8x8xf32>
        %105 = tpu.matmul %97, %104, %cst_66 {dimension_numbers = #tpu.dot_dimension_numbers<[1], [0], [0], [1], [0, 0, 1, 1], [], []>} : vector<8x32xbf16>, vector<32x8xbf16>, vector<8x8xf32> -> vector<8x8xf32>
        %106 = arith.index_cast %101 : i32 to index
        %c0_67 = arith.constant 0 : index
        %c0_68 = arith.constant 0 : index
        %107 = vector.load %arg12[%106, %c0_67, %c0_68] : memref<4x1x8xf32, #tpu.memory_space<vmem>>, vector<1x1x8xf32>
        %108 = vector.shape_cast %107 : vector<1x1x8xf32> to vector<1x8xf32>
        %109 = vector.broadcast %108 : vector<1x8xf32> to vector<8x8xf32>
        %110 = arith.addf %105, %109 : vector<8x8xf32>
        %111 = arith.truncf %110 : vector<8x8xf32> to vector<8x8xbf16>
        %112 = arith.index_cast %101 : i32 to index
        %c0_69 = arith.constant 0 : index
        %c0_70 = arith.constant 0 : index
        %113 = vector.load %arg26[%112, %c0_69, %c0_70] : memref<4x8x8xbf16, #tpu.memory_space<vmem>>, vector<1x8x8xbf16>
        %114 = vector.shape_cast %113 : vector<1x8x8xbf16> to vector<8x8xbf16>
        %115 = vector.shape_cast %111 : vector<8x8xbf16> to vector<1x8x8xbf16>
        tpu.vector_store %arg26[%112, %c0_69, %c0_70], %115 {strides = array<i32>} : memref<4x8x8xbf16, #tpu.memory_space<vmem>>, vector<1x8x8xbf16>,
        %116 = arith.index_cast %101 : i32 to index
        %c0_71 = arith.constant 0 : index
        %c0_72 = arith.constant 0 : index
        %117 = vector.load %arg13[%116, %c0_71, %c0_72] : memref<4x32x8xbf16, #tpu.memory_space<vmem>>, vector<1x32x8xbf16>
        %118 = vector.shape_cast %117 : vector<1x32x8xbf16> to vector<32x8xbf16>
        %cst_73 = arith.constant dense<0.000000e+00> : vector<8x8xf32>
        %119 = tpu.matmul %97, %118, %cst_73 {dimension_numbers = #tpu.dot_dimension_numbers<[1], [0], [0], [1], [0, 0, 1, 1], [], []>} : vector<8x32xbf16>, vector<32x8xbf16>, vector<8x8xf32> -> vector<8x8xf32>
        %120 = arith.index_cast %101 : i32 to index
        %c0_74 = arith.constant 0 : index
        %c0_75 = arith.constant 0 : index
        %121 = vector.load %arg14[%120, %c0_74, %c0_75] : memref<4x1x8xf32, #tpu.memory_space<vmem>>, vector<1x1x8xf32>
        %122 = vector.shape_cast %121 : vector<1x1x8xf32> to vector<1x8xf32>
        %123 = vector.broadcast %122 : vector<1x8xf32> to vector<8x8xf32>
        %124 = arith.addf %119, %123 : vector<8x8xf32>
        %125 = arith.truncf %124 : vector<8x8xf32> to vector<8x8xbf16>
        %126 = arith.index_cast %101 : i32 to index
        %c0_76 = arith.constant 0 : index
        %c0_77 = arith.constant 0 : index
        %127 = vector.load %arg27[%126, %c0_76, %c0_77] : memref<4x8x8xbf16, #tpu.memory_space<vmem>>, vector<1x8x8xbf16>
        %128 = vector.shape_cast %127 : vector<1x8x8xbf16> to vector<8x8xbf16>
        %129 = vector.shape_cast %125 : vector<8x8xbf16> to vector<1x8x8xbf16>
        tpu.vector_store %arg27[%126, %c0_76, %c0_77], %129 {strides = array<i32>} : memref<4x8x8xbf16, #tpu.memory_space<vmem>>, vector<1x8x8xbf16>,
      }
      %c4_i32_61 = arith.constant 4 : i32
    } else {
    }
    %c8_i32 = arith.constant 8 : i32
    %3 = arith.muli %arg1, %c8_i32 : i32
    %4 = tpu.assume_multiple %3, 8 : i32
    %5 = arith.index_cast %4 : i32 to index
    %c0 = arith.constant 0 : index
    %6 = vector.load %arg24[%5, %c0] : memref<8x32xf32, #tpu.memory_space<vmem>>, vector<8x32xf32>
    %7 = arith.index_cast %4 : i32 to index
    %c0_1 = arith.constant 0 : index
    %8 = vector.load %arg25[%7, %c0_1] : memref<8x32xbf16, #tpu.memory_space<vmem>>, vector<8x32xbf16>
    %cst = arith.constant 0.000000e+00 : f32
    %9 = vector.broadcast %cst : f32 to vector<8x32xf32>
    %c0_i32_2 = arith.constant 0 : i32
    %c4_i32 = arith.constant 4 : i32
    %10 = arith.addi %c0_i32_2, %c4_i32 : i32
    %c1_i32 = arith.constant 1 : i32
    %11 = scf.for %arg28 = %c0_i32_2 to %10 step %c1_i32 iter_args(%arg29 = %9) -> (vector<8x32xf32>)  : i32 {
      %62 = arith.index_cast %arg28 : i32 to index
      %c0_31 = arith.constant 0 : index
      %c0_32 = arith.constant 0 : index
      %63 = vector.load %arg9[%62, %c0_31, %c0_32] : memref<4x32x8xbf16, #tpu.memory_space<vmem>>, vector<1x32x8xbf16>
      %64 = vector.shape_cast %63 : vector<1x32x8xbf16> to vector<32x8xbf16>
      %cst_33 = arith.constant dense<0.000000e+00> : vector<8x8xf32>
      %65 = tpu.matmul %8, %64, %cst_33 {dimension_numbers = #tpu.dot_dimension_numbers<[1], [0], [0], [1], [0, 0, 1, 1], [], []>} : vector<8x32xbf16>, vector<32x8xbf16>, vector<8x8xf32> -> vector<8x8xf32>
      %66 = arith.index_cast %arg28 : i32 to index
      %c0_34 = arith.constant 0 : index
      %c0_35 = arith.constant 0 : index
      %67 = vector.load %arg10[%66, %c0_34, %c0_35] : memref<4x1x8xf32, #tpu.memory_space<vmem>>, vector<1x1x8xf32>
      %68 = vector.shape_cast %67 : vector<1x1x8xf32> to vector<1x8xf32>
      %69 = vector.broadcast %68 : vector<1x8xf32> to vector<8x8xf32>
      %70 = arith.addf %65, %69 : vector<8x8xf32>
      %71 = arith.truncf %70 : vector<8x8xf32> to vector<8x8xbf16>
      %72 = arith.index_cast %arg28 : i32 to index
      %c0_36 = arith.constant 0 : index
      %c0_37 = arith.constant 0 : index
      %73 = vector.load %arg26[%72, %c0_36, %c0_37] : memref<4x8x8xbf16, #tpu.memory_space<vmem>>, vector<1x8x8xbf16>
      %74 = vector.shape_cast %73 : vector<1x8x8xbf16> to vector<8x8xbf16>
      %cst_38 = arith.constant dense<0.000000e+00> : vector<8x8xf32>
      %75 = tpu.matmul %71, %74, %cst_38 {dimension_numbers = #tpu.dot_dimension_numbers<[1], [1], [0], [0], [0, 0, 1, 0], [], []>} : vector<8x8xbf16>, vector<8x8xbf16>, vector<8x8xf32> -> vector<8x8xf32>
      %cst_39 = arith.constant dense<0xFF800000> : vector<8xf32>
      %76 = vector.multi_reduction <maximumf>, %75, %cst_39 [1] : vector<8x8xf32> to vector<8xf32>
      %77 = vector.shape_cast %76 : vector<8xf32> to vector<8x1xf32>
      %78 = vector.broadcast %77 : vector<8x1xf32> to vector<8x8xf32>
      %79 = arith.subf %75, %78 : vector<8x8xf32>
      %80 = math.exp %79 : vector<8x8xf32>
      %cst_40 = arith.constant dense<0.000000e+00> : vector<8xf32>
      %81 = vector.multi_reduction <add>, %80, %cst_40 [1] : vector<8x8xf32> to vector<8xf32>
      %82 = vector.shape_cast %81 : vector<8xf32> to vector<8x1xf32>
      %83 = arith.truncf %80 : vector<8x8xf32> to vector<8x8xbf16>
      %84 = arith.index_cast %arg28 : i32 to index
      %c0_41 = arith.constant 0 : index
      %c0_42 = arith.constant 0 : index
      %85 = vector.load %arg27[%84, %c0_41, %c0_42] : memref<4x8x8xbf16, #tpu.memory_space<vmem>>, vector<1x8x8xbf16>
      %86 = vector.shape_cast %85 : vector<1x8x8xbf16> to vector<8x8xbf16>
      %cst_43 = arith.constant dense<0.000000e+00> : vector<8x8xf32>
      %87 = tpu.matmul %83, %86, %cst_43 {dimension_numbers = #tpu.dot_dimension_numbers<[1], [0], [0], [1], [0, 0, 1, 1], [], []>} : vector<8x8xbf16>, vector<8x8xbf16>, vector<8x8xf32> -> vector<8x8xf32>
      %88 = vector.broadcast %82 : vector<8x1xf32> to vector<8x8xf32>
      %89 = arith.divf %87, %88 : vector<8x8xf32>
      %90 = arith.truncf %89 : vector<8x8xf32> to vector<8x8xbf16>
      %91 = arith.index_cast %arg28 : i32 to index
      %c0_44 = arith.constant 0 : index
      %c0_45 = arith.constant 0 : index
      %92 = vector.load %arg15[%91, %c0_44, %c0_45] : memref<4x8x32xbf16, #tpu.memory_space<vmem>>, vector<1x8x32xbf16>
      %93 = vector.shape_cast %92 : vector<1x8x32xbf16> to vector<8x32xbf16>
      %cst_46 = arith.constant dense<0.000000e+00> : vector<8x32xf32>
      %94 = tpu.matmul %90, %93, %cst_46 {dimension_numbers = #tpu.dot_dimension_numbers<[1], [0], [0], [1], [0, 0, 1, 1], [], []>} : vector<8x8xbf16>, vector<8x32xbf16>, vector<8x32xf32> -> vector<8x32xf32>
      %95 = arith.addf %arg29, %94 : vector<8x32xf32>
      scf.yield %95 : vector<8x32xf32>
    }
    %c4_i32_3 = arith.constant 4 : i32
    %12 = arith.addf %6, %11 : vector<8x32xf32>
    %c0_4 = arith.constant 0 : index
    %c0_5 = arith.constant 0 : index
    %13 = vector.load %arg16[%c0_4, %c0_5] : memref<1x32xf32, #tpu.memory_space<vmem>>, vector<1x32xf32>
    %14 = vector.broadcast %13 : vector<1x32xf32> to vector<8x32xf32>
    %15 = arith.addf %12, %14 : vector<8x32xf32>
    %c0_6 = arith.constant 0 : index
    %c0_7 = arith.constant 0 : index
    %16 = vector.load %arg17[%c0_6, %c0_7] : memref<1x32xf32, #tpu.memory_space<vmem>>, vector<1x32xf32>
    %c0_8 = arith.constant 0 : index
    %c0_9 = arith.constant 0 : index
    %17 = vector.load %arg18[%c0_8, %c0_9] : memref<1x32xf32, #tpu.memory_space<vmem>>, vector<1x32xf32>
    %cst_10 = arith.constant dense<0.000000e+00> : vector<8xf32>
    %18 = vector.multi_reduction <add>, %15, %cst_10 [1] : vector<8x32xf32> to vector<8xf32>
    %19 = vector.shape_cast %18 : vector<8xf32> to vector<8x1xf32>
    %cst_11 = arith.constant 3.200000e+01 : f32
    %20 = vector.broadcast %cst_11 : f32 to vector<8x1xf32>
    %21 = arith.divf %19, %20 : vector<8x1xf32>
    %22 = vector.broadcast %21 : vector<8x1xf32> to vector<8x32xf32>
    %23 = arith.subf %15, %22 : vector<8x32xf32>
    %24 = arith.mulf %23, %23 : vector<8x32xf32>
    %cst_12 = arith.constant dense<0.000000e+00> : vector<8xf32>
    %25 = vector.multi_reduction <add>, %24, %cst_12 [1] : vector<8x32xf32> to vector<8xf32>
    %26 = vector.shape_cast %25 : vector<8xf32> to vector<8x1xf32>
    %cst_13 = arith.constant 3.200000e+01 : f32
    %27 = vector.broadcast %cst_13 : f32 to vector<8x1xf32>
    %28 = arith.divf %26, %27 : vector<8x1xf32>
    %cst_14 = arith.constant 9.99999974E-6 : f32
    %29 = vector.broadcast %cst_14 : f32 to vector<8x1xf32>
    %30 = arith.addf %28, %29 : vector<8x1xf32>
    %31 = math.rsqrt %30 : vector<8x1xf32>
    %32 = vector.broadcast %31 : vector<8x1xf32> to vector<8x32xf32>
    %33 = arith.mulf %23, %32 : vector<8x32xf32>
    %34 = vector.broadcast %16 : vector<1x32xf32> to vector<8x32xf32>
    %35 = arith.mulf %33, %34 : vector<8x32xf32>
    %36 = vector.broadcast %17 : vector<1x32xf32> to vector<8x32xf32>
    %37 = arith.addf %35, %36 : vector<8x32xf32>
    %38 = arith.truncf %37 : vector<8x32xf32> to vector<8x32xbf16>
    %c0_15 = arith.constant 0 : index
    %c0_16 = arith.constant 0 : index
    %39 = vector.load %arg19[%c0_15, %c0_16] : memref<32x128xbf16, #tpu.memory_space<vmem>>, vector<32x128xbf16>
    %cst_17 = arith.constant dense<0.000000e+00> : vector<8x128xf32>
    %40 = tpu.matmul %38, %39, %cst_17 {dimension_numbers = #tpu.dot_dimension_numbers<[1], [0], [0], [1], [0, 0, 1, 1], [], []>} : vector<8x32xbf16>, vector<32x128xbf16>, vector<8x128xf32> -> vector<8x128xf32>
    %c0_18 = arith.constant 0 : index
    %c0_19 = arith.constant 0 : index
    %41 = vector.load %arg20[%c0_18, %c0_19] : memref<1x128xf32, #tpu.memory_space<vmem>>, vector<1x128xf32>
    %42 = vector.broadcast %41 : vector<1x128xf32> to vector<8x128xf32>
    %43 = arith.addf %40, %42 : vector<8x128xf32>
    %cst_20 = arith.constant 5.000000e-01 : f32
    %44 = vector.broadcast %cst_20 : f32 to vector<8x128xf32>
    %45 = arith.mulf %44, %43 : vector<8x128xf32>
    %cst_21 = arith.constant 0.707106769 : f32
    %46 = vector.broadcast %cst_21 : f32 to vector<8x128xf32>
    %47 = arith.mulf %43, %46 : vector<8x128xf32>
    %48 = math.erf %47 : vector<8x128xf32>
    %cst_22 = arith.constant 1.000000e+00 : f32
    %49 = vector.broadcast %cst_22 : f32 to vector<8x128xf32>
    %50 = arith.addf %49, %48 : vector<8x128xf32>
    %51 = arith.mulf %45, %50 : vector<8x128xf32>
    %52 = arith.truncf %51 : vector<8x128xf32> to vector<8x128xbf16>
    %c0_23 = arith.constant 0 : index
    %c0_24 = arith.constant 0 : index
    %53 = vector.load %arg21[%c0_23, %c0_24] : memref<128x32xbf16, #tpu.memory_space<vmem>>, vector<128x32xbf16>
    %cst_25 = arith.constant dense<0.000000e+00> : vector<8x32xf32>
    %54 = tpu.matmul %52, %53, %cst_25 {dimension_numbers = #tpu.dot_dimension_numbers<[1], [0], [0], [1], [0, 0, 1, 1], [], []>} : vector<8x128xbf16>, vector<128x32xbf16>, vector<8x32xf32> -> vector<8x32xf32>
    %c0_26 = arith.constant 0 : index
    %c0_27 = arith.constant 0 : index
    %55 = vector.load %arg22[%c0_26, %c0_27] : memref<1x32xf32, #tpu.memory_space<vmem>>, vector<1x32xf32>
    %56 = vector.broadcast %55 : vector<1x32xf32> to vector<8x32xf32>
    %57 = arith.addf %54, %56 : vector<8x32xf32>
    %58 = arith.addf %15, %57 : vector<8x32xf32>
    %c0_28 = arith.constant 0 : index
    %c0_29 = arith.constant 0 : index
    %c0_30 = arith.constant 0 : index
    %59 = vector.load %arg23[%c0_28, %c0_29, %c0_30] : memref<1x8x32xf32, #tpu.memory_space<vmem>>, vector<1x8x32xf32>
    %60 = vector.shape_cast %59 : vector<1x8x32xf32> to vector<8x32xf32>
    %61 = vector.shape_cast %58 : vector<8x32xf32> to vector<1x8x32xf32>
    tpu.vector_store %arg23[%c0_28, %c0_29, %c0_30], %61 {strides = array<i32>} : memref<1x8x32xf32, #tpu.memory_space<vmem>>, vector<1x8x32xf32>,
    return
  }
  func.func @transform_0(%arg0: i32, %arg1: i32) -> (i32, i32, i32) {
    %c0_i32 = arith.constant 0 : i32
    %c0_i32_0 = arith.constant 0 : i32
    %c0_i32_1 = arith.constant 0 : i32
    return %arg0, %c0_i32, %c0_i32_0 : i32, i32, i32
  }
  func.func @transform_1(%arg0: i32, %arg1: i32) -> (i32, i32, i32) {
    %c0_i32 = arith.constant 0 : i32
    %c0_i32_0 = arith.constant 0 : i32
    %c0_i32_1 = arith.constant 0 : i32
    return %arg0, %c0_i32, %c0_i32_0 : i32, i32, i32
  }
  func.func @transform_2(%arg0: i32, %arg1: i32) -> (i32, i32) {
    %c0_i32 = arith.constant 0 : i32
    %c0_i32_0 = arith.constant 0 : i32
    %c0_i32_1 = arith.constant 0 : i32
    return %c0_i32, %c0_i32_0 : i32, i32
  }
  func.func @transform_3(%arg0: i32, %arg1: i32) -> (i32, i32) {
    %c0_i32 = arith.constant 0 : i32
    %c0_i32_0 = arith.constant 0 : i32
    %c0_i32_1 = arith.constant 0 : i32
    return %c0_i32, %c0_i32_0 : i32, i32
  }
  func.func @transform_4(%arg0: i32, %arg1: i32) -> (i32, i32) {
    %c0_i32 = arith.constant 0 : i32
    %c0_i32_0 = arith.constant 0 : i32
    %c0_i32_1 = arith.constant 0 : i32
    return %c0_i32, %c0_i32_0 : i32, i32
  }
  func.func @transform_5(%arg0: i32, %arg1: i32) -> (i32, i32) {
    %c0_i32 = arith.constant 0 : i32
    %c0_i32_0 = arith.constant 0 : i32
    %c0_i32_1 = arith.constant 0 : i32
    return %c0_i32, %c0_i32_0 : i32, i32
  }
  func.func @transform_6(%arg0: i32, %arg1: i32) -> (i32, i32) {
    %c0_i32 = arith.constant 0 : i32
    %c0_i32_0 = arith.constant 0 : i32
    %c0_i32_1 = arith.constant 0 : i32
    return %c0_i32, %c0_i32_0 : i32, i32
  }
  func.func @transform_7(%arg0: i32, %arg1: i32) -> (i32, i32, i32) {
    %c0_i32 = arith.constant 0 : i32
    %c0_i32_0 = arith.constant 0 : i32
    %c0_i32_1 = arith.constant 0 : i32
    %c0_i32_2 = arith.constant 0 : i32
    return %c0_i32, %c0_i32_0, %c0_i32_1 : i32, i32, i32
  }
  func.func @transform_8(%arg0: i32, %arg1: i32) -> (i32, i32, i32) {
    %c0_i32 = arith.constant 0 : i32
    %c0_i32_0 = arith.constant 0 : i32
    %c0_i32_1 = arith.constant 0 : i32
    %c0_i32_2 = arith.constant 0 : i32
    return %c0_i32, %c0_i32_0, %c0_i32_1 : i32, i32, i32
  }
  func.func @transform_9(%arg0: i32, %arg1: i32) -> (i32, i32, i32) {
    %c0_i32 = arith.constant 0 : i32
    %c0_i32_0 = arith.constant 0 : i32
    %c0_i32_1 = arith.constant 0 : i32
    %c0_i32_2 = arith.constant 0 : i32
    return %c0_i32, %c0_i32_0, %c0_i32_1 : i32, i32, i32
  }
  func.func @transform_10(%arg0: i32, %arg1: i32) -> (i32, i32, i32) {
    %c0_i32 = arith.constant 0 : i32
    %c0_i32_0 = arith.constant 0 : i32
    %c0_i32_1 = arith.constant 0 : i32
    %c0_i32_2 = arith.constant 0 : i32
    return %c0_i32, %c0_i32_0, %c0_i32_1 : i32, i32, i32
  }
  func.func @transform_11(%arg0: i32, %arg1: i32) -> (i32, i32, i32) {
    %c0_i32 = arith.constant 0 : i32
    %c0_i32_0 = arith.constant 0 : i32
    %c0_i32_1 = arith.constant 0 : i32
    %c0_i32_2 = arith.constant 0 : i32
    return %c0_i32, %c0_i32_0, %c0_i32_1 : i32, i32, i32
  }
  func.func @transform_12(%arg0: i32, %arg1: i32) -> (i32, i32, i32) {
    %c0_i32 = arith.constant 0 : i32
    %c0_i32_0 = arith.constant 0 : i32
    %c0_i32_1 = arith.constant 0 : i32
    %c0_i32_2 = arith.constant 0 : i32
    return %c0_i32, %c0_i32_0, %c0_i32_1 : i32, i32, i32
  }
  func.func @transform_13(%arg0: i32, %arg1: i32) -> (i32, i32, i32) {
    %c0_i32 = arith.constant 0 : i32
    %c0_i32_0 = arith.constant 0 : i32
    %c0_i32_1 = arith.constant 0 : i32
    %c0_i32_2 = arith.constant 0 : i32
    return %c0_i32, %c0_i32_0, %c0_i32_1 : i32, i32, i32
  }
  func.func @transform_14(%arg0: i32, %arg1: i32) -> (i32, i32) {
    %c0_i32 = arith.constant 0 : i32
    %c0_i32_0 = arith.constant 0 : i32
    %c0_i32_1 = arith.constant 0 : i32
    return %c0_i32, %c0_i32_0 : i32, i32
  }
  func.func @transform_15(%arg0: i32, %arg1: i32) -> (i32, i32) {
    %c0_i32 = arith.constant 0 : i32
    %c0_i32_0 = arith.constant 0 : i32
    %c0_i32_1 = arith.constant 0 : i32
    return %c0_i32, %c0_i32_0 : i32, i32
  }
  func.func @transform_16(%arg0: i32, %arg1: i32) -> (i32, i32) {
    %c0_i32 = arith.constant 0 : i32
    %c0_i32_0 = arith.constant 0 : i32
    %c0_i32_1 = arith.constant 0 : i32
    return %c0_i32, %c0_i32_0 : i32, i32
  }
  func.func @transform_17(%arg0: i32, %arg1: i32) -> (i32, i32) {
    %c0_i32 = arith.constant 0 : i32
    %c0_i32_0 = arith.constant 0 : i32
    %c0_i32_1 = arith.constant 0 : i32
    return %c0_i32, %c0_i32_0 : i32, i32
  }
  func.func @transform_18(%arg0: i32, %arg1: i32) -> (i32, i32) {
    %c0_i32 = arith.constant 0 : i32
    %c0_i32_0 = arith.constant 0 : i32
    %c0_i32_1 = arith.constant 0 : i32
    return %c0_i32, %c0_i32_0 : i32, i32
  }
  func.func @transform_19(%arg0: i32, %arg1: i32) -> (i32, i32) {
    %c0_i32 = arith.constant 0 : i32
    %c0_i32_0 = arith.constant 0 : i32
    %c0_i32_1 = arith.constant 0 : i32
    return %c0_i32, %c0_i32_0 : i32, i32
  }
  func.func @transform_20(%arg0: i32, %arg1: i32) -> (i32, i32) {
    %c0_i32 = arith.constant 0 : i32
    %c0_i32_0 = arith.constant 0 : i32
    %c0_i32_1 = arith.constant 0 : i32
    return %c0_i32, %c0_i32_0 : i32, i32
  }
  func.func @transform_21(%arg0: i32, %arg1: i32) -> (i32, i32, i32) {
    %c0_i32 = arith.constant 0 : i32
    %c0_i32_0 = arith.constant 0 : i32
    return %arg0, %arg1, %c0_i32 : i32, i32, i32
  }
}

</mosaic_0001>

<llo_original>
// kernel: tpu_custom_call.1
$region0: #{tpu_custom_call.1}
  #allocation0 [shape = 'u32[]', space=smem, size = 0x4, offset = 0x4, fixed_abs, tag = 'smem constant byte address 0x4 - core index']
  #allocation1 [shape = 'u32[72,128]{1,0:T(1,128)}', space=vmem, size = 0x9000, scoped, tag = 'internal scratch']
  #allocation2 [shape = 'f32[8,32]{1,0:T(8,128)}', space=vmem, size = 0x1000, scoped, tag = 'scratch operand']
  #allocation3 [shape = 'bf16[8,32]{1,0:T(8,128)(2,1)}', space=vmem, size = 0x800, scoped, tag = 'scratch operand']
  #allocation4 [shape = 'bf16[4,8,8]{2,1,0:T(8,128)(2,1)}', space=vmem, size = 0x2000, scoped, tag = 'scratch operand']
  #allocation5 [shape = 'bf16[4,8,8]{2,1,0:T(8,128)(2,1)}', space=vmem, size = 0x2000, scoped, tag = 'scratch operand']
  %s0 = inlined_call_operand.vmem [shape: bf16[2,8,32], index: 0, kind: input, shape index: {}]
  %s1 = inlined_call_operand.vmem [shape: bf16[2,8,32], index: 1, kind: input, shape index: {}]
  %s2 = inlined_call_operand.vmem [shape: bf16[32,32], index: 2, kind: input, shape index: {}]
  %s3 = inlined_call_operand.vmem [shape: bf16[32,32], index: 3, kind: input, shape index: {}]
  %s4 = inlined_call_operand.vmem [shape: f32[1,32], index: 4, kind: input, shape index: {}]
  %s5 = inlined_call_operand.vmem [shape: f32[1,32], index: 5, kind: input, shape index: {}]
  %s6 = inlined_call_operand.vmem [shape: f32[1,32], index: 6, kind: input, shape index: {}]
  %s7 = inlined_call_operand.vmem [shape: bf16[4,32,8], index: 7, kind: input, shape index: {}]
  %s8 = inlined_call_operand.vmem [shape: f32[4,1,8], index: 8, kind: input, shape index: {}]
  %s9 = inlined_call_operand.vmem [shape: bf16[4,32,8], index: 9, kind: input, shape index: {}]
  %s10 = inlined_call_operand.vmem [shape: f32[4,1,8], index: 10, kind: input, shape index: {}]
  %s11 = inlined_call_operand.vmem [shape: bf16[4,32,8], index: 11, kind: input, shape index: {}]
  %s12 = inlined_call_operand.vmem [shape: f32[4,1,8], index: 12, kind: input, shape index: {}]
  %s13 = inlined_call_operand.vmem [shape: bf16[4,8,32], index: 13, kind: input, shape index: {}]
  %s14 = inlined_call_operand.vmem [shape: f32[1,32], index: 14, kind: input, shape index: {}]
  %s15 = inlined_call_operand.vmem [shape: f32[1,32], index: 15, kind: input, shape index: {}]
  %s16 = inlined_call_operand.vmem [shape: f32[1,32], index: 16, kind: input, shape index: {}]
  %s17 = inlined_call_operand.vmem [shape: bf16[32,128], index: 17, kind: input, shape index: {}]
  %s18 = inlined_call_operand.vmem [shape: f32[1,128], index: 18, kind: input, shape index: {}]
  %s19 = inlined_call_operand.vmem [shape: bf16[128,32], index: 19, kind: input, shape index: {}]
  %s20 = inlined_call_operand.vmem [shape: f32[1,32], index: 20, kind: input, shape index: {}]
  %s21 = inlined_call_operand.hbm [shape: f32[2,8,32], index: 21, kind: output, shape index: {}]
  %s22 = sld [smem:[#allocation0]]
  $region135: #{tpu_custom_call.1} parent=0
    _
  %s24 = ssub.s32 1, %s22
  %s25 = scalar_select 0, %s24, %s22
  $region1: #{tpu_custom_call.1} parent=0
    #allocation6 [shape = 'u8[8192]{0}', space=vmem, size = 0x2000, scoped, tag = 'output window, operand 0']
    #allocation7 [shape = 's32[2]{0}', space=sflag, size = 0x8, scoped, tag = 'scoped memory for tpu_custom_call.1']
    %26 = vsyncpa [#allocation7], 0
    %s27 = scalar_lea.sflag [#allocation7], 1
    %28 = vsyncpa %s27, 0
    loop: start=0, step=1, limit=4
    $region2: #{tpu_custom_call.1} parent=1 // loop_pre_header
      _
    $region3: #{tpu_custom_call.1} parent=1 // loop_header
      %s30 = sphi 0, %s34
      %p31 = scmp.ge.s32.totalorder %s30, 4
      %s37 = sphi 0, %s49
      %s38 = sphi 0, %s45
      %s39 = sphi 0, %s37
      %s40 = sphi 0, %s38
      %s41 = sphi 0, %s39
      %s42 = sphi 0, %s40
      %s52 = sphi 0, %s54
      %s55 = sphi 0, %s52
      %s56 = sphi 0, %s55
      %s72 = sphi 0, %s56
      %s78 = sphi 0, %s80
      %s81 = sphi 0, %s78
      %s82 = sphi 0, %s81
      %s98 = sphi 0, %s82
      %s102 = sphi 0, %s102
      %s104 = sphi 0, %s102
      %s105 = sphi 0, %s104
      %s119 = sphi 0, %s105
      %s123 = sphi 0, %s123
      %s125 = sphi 0, %s123
      %s126 = sphi 0, %s125
      %s140 = sphi 0, %s126
      %s144 = sphi 0, %s144
      %s146 = sphi 0, %s144
      %s147 = sphi 0, %s146
      %s161 = sphi 0, %s147
      %s165 = sphi 0, %s165
      %s167 = sphi 0, %s165
      %s168 = sphi 0, %s167
      %s182 = sphi 0, %s168
      %s186 = sphi 0, %s186
      %s188 = sphi 0, %s186
      %s189 = sphi 0, %s188
      %s203 = sphi 0, %s189
      %s207 = sphi 0, %s207
      %s209 = sphi 0, %s207
      %s210 = sphi 0, %s209
      %s224 = sphi 0, %s210
      %s228 = sphi 0, %s228
      %s230 = sphi 0, %s228
      %s231 = sphi 0, %s230
      %s245 = sphi 0, %s231
      %s249 = sphi 0, %s249
      %s251 = sphi 0, %s249
      %s252 = sphi 0, %s251
      %s266 = sphi 0, %s252
      %s270 = sphi 0, %s270
      %s272 = sphi 0, %s270
      %s273 = sphi 0, %s272
      %s287 = sphi 0, %s273
      %s291 = sphi 0, %s291
      %s293 = sphi 0, %s291
      %s294 = sphi 0, %s293
      %s308 = sphi 0, %s294
      %s312 = sphi 0, %s312
      %s314 = sphi 0, %s312
      %s315 = sphi 0, %s314
      %s329 = sphi 0, %s315
      %s333 = sphi 0, %s333
      %s335 = sphi 0, %s333
      %s336 = sphi 0, %s335
      %s350 = sphi 0, %s336
      %s354 = sphi 0, %s354
      %s356 = sphi 0, %s354
      %s357 = sphi 0, %s356
      %s371 = sphi 0, %s357
      %s375 = sphi 0, %s375
      %s377 = sphi 0, %s375
      %s378 = sphi 0, %s377
      %s392 = sphi 0, %s378
      %s396 = sphi 0, %s396
      %s398 = sphi 0, %s396
      %s399 = sphi 0, %s398
      %s413 = sphi 0, %s399
      %s417 = sphi 0, %s417
      %s419 = sphi 0, %s417
      %s420 = sphi 0, %s419
      %s434 = sphi 0, %s420
      %s438 = sphi 0, %s438
      %s440 = sphi 0, %s438
      %s441 = sphi 0, %s440
      %s455 = sphi 0, %s441
      %s459 = sphi 0, %s459
      %s461 = sphi 0, %s459
      %s462 = sphi 0, %s461
      %s476 = sphi 0, %s462
      %s480 = sphi 0, %s480
      %s482 = sphi 0, %s480
      %s483 = sphi 0, %s482
      %s497 = sphi 0, %s483
      %s505 = sphi 0, %s507
      %s508 = sphi 0, %s505
      %s509 = sphi 0, %s508
      %s525 = sphi 0, %s509
    $region4: #{tpu_custom_call.1} parent=1 // loop_header_branch
      %33 = sbr.rel (%p31) target = $region8
    $region5: #{tpu_custom_call.1} parent=1 // loop_body
      %s35 = ssub.s32 %s30, 1
      %s36 = ssub.s32 %s30, 2
      %s43 = sadd.s32 1, %s38
      %p44 = scmp.ge.s32.totalorder %s43, 1
      %s45 = scalar_select %p44, 0, %s43
      %s46 = sadd.s32 1, %s37
      %s47 = scalar_select %p44, %s46, %s37
      %p48 = scmp.ge.s32.totalorder %s47, 2
      %s49 = scalar_select %p48, 0, %s47
      %s50 = ssub.s32 %s37, %s49
      %p51 = scmp.eq.s32.totalorder %s50, 0
      %s53 = sadd.s32 %s52, 1
      %s54 = scalar_select %p51, %s52, %s53
      %p57 = pneg %p51
      %p58 = scmp.eq.s32.totalorder %s30, 1
      %p59 = por %p57, %p58
      %p60 = scmp.ne.s32.totalorder %s52, %s55
      %p61 = scmp.eq.s32.totalorder %s30, 0
      %p62 = por %p60, %p61
      %p63 = scmp.ne.s32.totalorder %s52, %s55
      %p64 = scmp.eq.s32.totalorder %s35, 1
      %p65 = por %p63, %p64
      %p66 = scmp.ne.s32.totalorder %s55, %s56
      %p67 = scmp.eq.s32.totalorder %s35, 0
      %p68 = por %p66, %p67
      %p69 = scmp.ne.s32.totalorder %s55, %s56
      %p70 = scmp.eq.s32.totalorder %s36, 1
      %p71 = por %p69, %p70
      %p73 = scmp.ne.s32.totalorder %s56, %s72
      %p74 = scmp.eq.s32.totalorder %s36, 0
      %p75 = por %p73, %p74
      %s76 = ssub.s32 %s37, %s49
      %p77 = scmp.eq.s32.totalorder %s76, 0
      %s79 = sadd.s32 %s78, 1
      %s80 = scalar_select %p77, %s78, %s79
      %p83 = pneg %p77
      %p84 = scmp.eq.s32.totalorder %s30, 1
      %p85 = por %p83, %p84
      %p86 = scmp.ne.s32.totalorder %s78, %s81
      %p87 = scmp.eq.s32.totalorder %s30, 0
      %p88 = por %p86, %p87
      %p89 = scmp.ne.s32.totalorder %s78, %s81
      %p90 = scmp.eq.s32.totalorder %s35, 1
      %p91 = por %p89, %p90
      %p92 = scmp.ne.s32.totalorder %s81, %s82
      %p93 = scmp.eq.s32.totalorder %s35, 0
      %p94 = por %p92, %p93
      %p95 = scmp.ne.s32.totalorder %s81, %s82
      %p96 = scmp.eq.s32.totalorder %s36, 1
      %p97 = por %p95, %p96
      %p99 = scmp.ne.s32.totalorder %s82, %s98
      %p100 = scmp.eq.s32.totalorder %s36, 0
      %p101 = por %p99, %p100
      %s103 = sadd.s32 %s102, 1
      %p106 = scmp.eq.s32.totalorder %s30, 1
      %p107 = scmp.ne.s32.totalorder %s102, %s104
      %p108 = scmp.eq.s32.totalorder %s30, 0
      %p109 = por %p107, %p108
      %p110 = scmp.ne.s32.totalorder %s102, %s104
      %p111 = scmp.eq.s32.totalorder %s35, 1
      %p112 = por %p110, %p111
      %p113 = scmp.ne.s32.totalorder %s104, %s105
      %p114 = scmp.eq.s32.totalorder %s35, 0
      %p115 = por %p113, %p114
      %p116 = scmp.ne.s32.totalorder %s104, %s105
      %p117 = scmp.eq.s32.totalorder %s36, 1
      %p118 = por %p116, %p117
      %p120 = scmp.ne.s32.totalorder %s105, %s119
      %p121 = scmp.eq.s32.totalorder %s36, 0
      %p122 = por %p120, %p121
      %s124 = sadd.s32 %s123, 1
      %p127 = scmp.eq.s32.totalorder %s30, 1
      %p128 = scmp.ne.s32.totalorder %s123, %s125
      %p129 = scmp.eq.s32.totalorder %s30, 0
      %p130 = por %p128, %p129
      %p131 = scmp.ne.s32.totalorder %s123, %s125
      %p132 = scmp.eq.s32.totalorder %s35, 1
      %p133 = por %p131, %p132
      %p134 = scmp.ne.s32.totalorder %s125, %s126
      %p135 = scmp.eq.s32.totalorder %s35, 0
      %p136 = por %p134, %p135
      %p137 = scmp.ne.s32.totalorder %s125, %s126
      %p138 = scmp.eq.s32.totalorder %s36, 1
      %p139 = por %p137, %p138
      %p141 = scmp.ne.s32.totalorder %s126, %s140
      %p142 = scmp.eq.s32.totalorder %s36, 0
      %p143 = por %p141, %p142
      %s145 = sadd.s32 %s144, 1
      %p148 = scmp.eq.s32.totalorder %s30, 1
      %p149 = scmp.ne.s32.totalorder %s144, %s146
      %p150 = scmp.eq.s32.totalorder %s30, 0
      %p151 = por %p149, %p150
      %p152 = scmp.ne.s32.totalorder %s144, %s146
      %p153 = scmp.eq.s32.totalorder %s35, 1
      %p154 = por %p152, %p153
      %p155 = scmp.ne.s32.totalorder %s146, %s147
      %p156 = scmp.eq.s32.totalorder %s35, 0
      %p157 = por %p155, %p156
      %p158 = scmp.ne.s32.totalorder %s146, %s147
      %p159 = scmp.eq.s32.totalorder %s36, 1
      %p160 = por %p158, %p159
      %p162 = scmp.ne.s32.totalorder %s147, %s161
      %p163 = scmp.eq.s32.totalorder %s36, 0
      %p164 = por %p162, %p163
      %s166 = sadd.s32 %s165, 1
      %p169 = scmp.eq.s32.totalorder %s30, 1
      %p170 = scmp.ne.s32.totalorder %s165, %s167
      %p171 = scmp.eq.s32.totalorder %s30, 0
      %p172 = por %p170, %p171
      %p173 = scmp.ne.s32.totalorder %s165, %s167
      %p174 = scmp.eq.s32.totalorder %s35, 1
      %p175 = por %p173, %p174
      %p176 = scmp.ne.s32.totalorder %s167, %s168
      %p177 = scmp.eq.s32.totalorder %s35, 0
      %p178 = por %p176, %p177
      %p179 = scmp.ne.s32.totalorder %s167, %s168
      %p180 = scmp.eq.s32.totalorder %s36, 1
      %p181 = por %p179, %p180
      %p183 = scmp.ne.s32.totalorder %s168, %s182
      %p184 = scmp.eq.s32.totalorder %s36, 0
      %p185 = por %p183, %p184
      %s187 = sadd.s32 %s186, 1
      %p190 = scmp.eq.s32.totalorder %s30, 1
      %p191 = scmp.ne.s32.totalorder %s186, %s188
      %p192 = scmp.eq.s32.totalorder %s30, 0
      %p193 = por %p191, %p192
      %p194 = scmp.ne.s32.totalorder %s186, %s188
      %p195 = scmp.eq.s32.totalorder %s35, 1
      %p196 = por %p194, %p195
      %p197 = scmp.ne.s32.totalorder %s188, %s189
      %p198 = scmp.eq.s32.totalorder %s35, 0
      %p199 = por %p197, %p198
      %p200 = scmp.ne.s32.totalorder %s188, %s189
      %p201 = scmp.eq.s32.totalorder %s36, 1
      %p202 = por %p200, %p201
      %p204 = scmp.ne.s32.totalorder %s189, %s203
      %p205 = scmp.eq.s32.totalorder %s36, 0
      %p206 = por %p204, %p205
      %s208 = sadd.s32 %s207, 1
      %p211 = scmp.eq.s32.totalorder %s30, 1
      %p212 = scmp.ne.s32.totalorder %s207, %s209
      %p213 = scmp.eq.s32.totalorder %s30, 0
      %p214 = por %p212, %p213
      %p215 = scmp.ne.s32.totalorder %s207, %s209
      %p216 = scmp.eq.s32.totalorder %s35, 1
      %p217 = por %p215, %p216
      %p218 = scmp.ne.s32.totalorder %s209, %s210
      %p219 = scmp.eq.s32.totalorder %s35, 0
      %p220 = por %p218, %p219
      %p221 = scmp.ne.s32.totalorder %s209, %s210
      %p222 = scmp.eq.s32.totalorder %s36, 1
      %p223 = por %p221, %p222
      %p225 = scmp.ne.s32.totalorder %s210, %s224
      %p226 = scmp.eq.s32.totalorder %s36, 0
      %p227 = por %p225, %p226
      %s229 = sadd.s32 %s228, 1
      %p232 = scmp.eq.s32.totalorder %s30, 1
      %p233 = scmp.ne.s32.totalorder %s228, %s230
      %p234 = scmp.eq.s32.totalorder %s30, 0
      %p235 = por %p233, %p234
      %p236 = scmp.ne.s32.totalorder %s228, %s230
      %p237 = scmp.eq.s32.totalorder %s35, 1
      %p238 = por %p236, %p237
      %p239 = scmp.ne.s32.totalorder %s230, %s231
      %p240 = scmp.eq.s32.totalorder %s35, 0
      %p241 = por %p239, %p240
      %p242 = scmp.ne.s32.totalorder %s230, %s231
      %p243 = scmp.eq.s32.totalorder %s36, 1
      %p244 = por %p242, %p243
      %p246 = scmp.ne.s32.totalorder %s231, %s245
      %p247 = scmp.eq.s32.totalorder %s36, 0
      %p248 = por %p246, %p247
      %s250 = sadd.s32 %s249, 1
      %p253 = scmp.eq.s32.totalorder %s30, 1
      %p254 = scmp.ne.s32.totalorder %s249, %s251
      %p255 = scmp.eq.s32.totalorder %s30, 0
      %p256 = por %p254, %p255
      %p257 = scmp.ne.s32.totalorder %s249, %s251
      %p258 = scmp.eq.s32.totalorder %s35, 1
      %p259 = por %p257, %p258
      %p260 = scmp.ne.s32.totalorder %s251, %s252
      %p261 = scmp.eq.s32.totalorder %s35, 0
      %p262 = por %p260, %p261
      %p263 = scmp.ne.s32.totalorder %s251, %s252
      %p264 = scmp.eq.s32.totalorder %s36, 1
      %p265 = por %p263, %p264
      %p267 = scmp.ne.s32.totalorder %s252, %s266
      %p268 = scmp.eq.s32.totalorder %s36, 0
      %p269 = por %p267, %p268
      %s271 = sadd.s32 %s270, 1
      %p274 = scmp.eq.s32.totalorder %s30, 1
      %p275 = scmp.ne.s32.totalorder %s270, %s272
      %p276 = scmp.eq.s32.totalorder %s30, 0
      %p277 = por %p275, %p276
      %p278 = scmp.ne.s32.totalorder %s270, %s272
      %p279 = scmp.eq.s32.totalorder %s35, 1
      %p280 = por %p278, %p279
      %p281 = scmp.ne.s32.totalorder %s272, %s273
      %p282 = scmp.eq.s32.totalorder %s35, 0
      %p283 = por %p281, %p282
      %p284 = scmp.ne.s32.totalorder %s272, %s273
      %p285 = scmp.eq.s32.totalorder %s36, 1
      %p286 = por %p284, %p285
      %p288 = scmp.ne.s32.totalorder %s273, %s287
      %p289 = scmp.eq.s32.totalorder %s36, 0
      %p290 = por %p288, %p289
      %s292 = sadd.s32 %s291, 1
      %p295 = scmp.eq.s32.totalorder %s30, 1
      %p296 = scmp.ne.s32.totalorder %s291, %s293
      %p297 = scmp.eq.s32.totalorder %s30, 0
      %p298 = por %p296, %p297
      %p299 = scmp.ne.s32.totalorder %s291, %s293
      %p300 = scmp.eq.s32.totalorder %s35, 1
      %p301 = por %p299, %p300
      %p302 = scmp.ne.s32.totalorder %s293, %s294
      %p303 = scmp.eq.s32.totalorder %s35, 0
      %p304 = por %p302, %p303
      %p305 = scmp.ne.s32.totalorder %s293, %s294
      %p306 = scmp.eq.s32.totalorder %s36, 1
      %p307 = por %p305, %p306
      %p309 = scmp.ne.s32.totalorder %s294, %s308
      %p310 = scmp.eq.s32.totalorder %s36, 0
      %p311 = por %p309, %p310
      %s313 = sadd.s32 %s312, 1
      %p316 = scmp.eq.s32.totalorder %s30, 1
      %p317 = scmp.ne.s32.totalorder %s312, %s314
      %p318 = scmp.eq.s32.totalorder %s30, 0
      %p319 = por %p317, %p318
      %p320 = scmp.ne.s32.totalorder %s312, %s314
      %p321 = scmp.eq.s32.totalorder %s35, 1
      %p322 = por %p320, %p321
      %p323 = scmp.ne.s32.totalorder %s314, %s315
      %p324 = scmp.eq.s32.totalorder %s35, 0
      %p325 = por %p323, %p324
      %p326 = scmp.ne.s32.totalorder %s314, %s315
      %p327 = scmp.eq.s32.totalorder %s36, 1
      %p328 = por %p326, %p327
      %p330 = scmp.ne.s32.totalorder %s315, %s329
      %p331 = scmp.eq.s32.totalorder %s36, 0
      %p332 = por %p330, %p331
      %s334 = sadd.s32 %s333, 1
      %p337 = scmp.eq.s32.totalorder %s30, 1
      %p338 = scmp.ne.s32.totalorder %s333, %s335
      %p339 = scmp.eq.s32.totalorder %s30, 0
      %p340 = por %p338, %p339
      %p341 = scmp.ne.s32.totalorder %s333, %s335
      %p342 = scmp.eq.s32.totalorder %s35, 1
      %p343 = por %p341, %p342
      %p344 = scmp.ne.s32.totalorder %s335, %s336
      %p345 = scmp.eq.s32.totalorder %s35, 0
      %p346 = por %p344, %p345
      %p347 = scmp.ne.s32.totalorder %s335, %s336
      %p348 = scmp.eq.s32.totalorder %s36, 1
      %p349 = por %p347, %p348
      %p351 = scmp.ne.s32.totalorder %s336, %s350
      %p352 = scmp.eq.s32.totalorder %s36, 0
      %p353 = por %p351, %p352
      %s355 = sadd.s32 %s354, 1
      %p358 = scmp.eq.s32.totalorder %s30, 1
      %p359 = scmp.ne.s32.totalorder %s354, %s356
      %p360 = scmp.eq.s32.totalorder %s30, 0
      %p361 = por %p359, %p360
      %p362 = scmp.ne.s32.totalorder %s354, %s356
      %p363 = scmp.eq.s32.totalorder %s35, 1
      %p364 = por %p362, %p363
      %p365 = scmp.ne.s32.totalorder %s356, %s357
      %p366 = scmp.eq.s32.totalorder %s35, 0
      %p367 = por %p365, %p366
      %p368 = scmp.ne.s32.totalorder %s356, %s357
      %p369 = scmp.eq.s32.totalorder %s36, 1
      %p370 = por %p368, %p369
      %p372 = scmp.ne.s32.totalorder %s357, %s371
      %p373 = scmp.eq.s32.totalorder %s36, 0
      %p374 = por %p372, %p373
      %s376 = sadd.s32 %s375, 1
      %p379 = scmp.eq.s32.totalorder %s30, 1
      %p380 = scmp.ne.s32.totalorder %s375, %s377
      %p381 = scmp.eq.s32.totalorder %s30, 0
      %p382 = por %p380, %p381
      %p383 = scmp.ne.s32.totalorder %s375, %s377
      %p384 = scmp.eq.s32.totalorder %s35, 1
      %p385 = por %p383, %p384
      %p386 = scmp.ne.s32.totalorder %s377, %s378
      %p387 = scmp.eq.s32.totalorder %s35, 0
      %p388 = por %p386, %p387
      %p389 = scmp.ne.s32.totalorder %s377, %s378
      %p390 = scmp.eq.s32.totalorder %s36, 1
      %p391 = por %p389, %p390
      %p393 = scmp.ne.s32.totalorder %s378, %s392
      %p394 = scmp.eq.s32.totalorder %s36, 0
      %p395 = por %p393, %p394
      %s397 = sadd.s32 %s396, 1
      %p400 = scmp.eq.s32.totalorder %s30, 1
      %p401 = scmp.ne.s32.totalorder %s396, %s398
      %p402 = scmp.eq.s32.totalorder %s30, 0
      %p403 = por %p401, %p402
      %p404 = scmp.ne.s32.totalorder %s396, %s398
      %p405 = scmp.eq.s32.totalorder %s35, 1
      %p406 = por %p404, %p405
      %p407 = scmp.ne.s32.totalorder %s398, %s399
      %p408 = scmp.eq.s32.totalorder %s35, 0
      %p409 = por %p407, %p408
      %p410 = scmp.ne.s32.totalorder %s398, %s399
      %p411 = scmp.eq.s32.totalorder %s36, 1
      %p412 = por %p410, %p411
      %p414 = scmp.ne.s32.totalorder %s399, %s413
      %p415 = scmp.eq.s32.totalorder %s36, 0
      %p416 = por %p414, %p415
      %s418 = sadd.s32 %s417, 1
      %p421 = scmp.eq.s32.totalorder %s30, 1
      %p422 = scmp.ne.s32.totalorder %s417, %s419
      %p423 = scmp.eq.s32.totalorder %s30, 0
      %p424 = por %p422, %p423
      %p425 = scmp.ne.s32.totalorder %s417, %s419
      %p426 = scmp.eq.s32.totalorder %s35, 1
      %p427 = por %p425, %p426
      %p428 = scmp.ne.s32.totalorder %s419, %s420
      %p429 = scmp.eq.s32.totalorder %s35, 0
      %p430 = por %p428, %p429
      %p431 = scmp.ne.s32.totalorder %s419, %s420
      %p432 = scmp.eq.s32.totalorder %s36, 1
      %p433 = por %p431, %p432
      %p435 = scmp.ne.s32.totalorder %s420, %s434
      %p436 = scmp.eq.s32.totalorder %s36, 0
      %p437 = por %p435, %p436
      %s439 = sadd.s32 %s438, 1
      %p442 = scmp.eq.s32.totalorder %s30, 1
      %p443 = scmp.ne.s32.totalorder %s438, %s440
      %p444 = scmp.eq.s32.totalorder %s30, 0
      %p445 = por %p443, %p444
      %p446 = scmp.ne.s32.totalorder %s438, %s440
      %p447 = scmp.eq.s32.totalorder %s35, 1
      %p448 = por %p446, %p447
      %p449 = scmp.ne.s32.totalorder %s440, %s441
      %p450 = scmp.eq.s32.totalorder %s35, 0
      %p451 = por %p449, %p450
      %p452 = scmp.ne.s32.totalorder %s440, %s441
      %p453 = scmp.eq.s32.totalorder %s36, 1
      %p454 = por %p452, %p453
      %p456 = scmp.ne.s32.totalorder %s441, %s455
      %p457 = scmp.eq.s32.totalorder %s36, 0
      %p458 = por %p456, %p457
      %s460 = sadd.s32 %s459, 1
      %p463 = scmp.eq.s32.totalorder %s30, 1
      %p464 = scmp.ne.s32.totalorder %s459, %s461
      %p465 = scmp.eq.s32.totalorder %s30, 0
      %p466 = por %p464, %p465
      %p467 = scmp.ne.s32.totalorder %s459, %s461
      %p468 = scmp.eq.s32.totalorder %s35, 1
      %p469 = por %p467, %p468
      %p470 = scmp.ne.s32.totalorder %s461, %s462
      %p471 = scmp.eq.s32.totalorder %s35, 0
      %p472 = por %p470, %p471
      %p473 = scmp.ne.s32.totalorder %s461, %s462
      %p474 = scmp.eq.s32.totalorder %s36, 1
      %p475 = por %p473, %p474
      %p477 = scmp.ne.s32.totalorder %s462, %s476
      %p478 = scmp.eq.s32.totalorder %s36, 0
      %p479 = por %p477, %p478
      %s481 = sadd.s32 %s480, 1
      %p484 = scmp.eq.s32.totalorder %s30, 1
      %p485 = scmp.ne.s32.totalorder %s480, %s482
      %p486 = scmp.eq.s32.totalorder %s30, 0
      %p487 = por %p485, %p486
      %p488 = scmp.ne.s32.totalorder %s480, %s482
      %p489 = scmp.eq.s32.totalorder %s35, 1
      %p490 = por %p488, %p489
      %p491 = scmp.ne.s32.totalorder %s482, %s483
      %p492 = scmp.eq.s32.totalorder %s35, 0
      %p493 = por %p491, %p492
      %p494 = scmp.ne.s32.totalorder %s482, %s483
      %p495 = scmp.eq.s32.totalorder %s36, 1
      %p496 = por %p494, %p495
      %p498 = scmp.ne.s32.totalorder %s483, %s497
      %p499 = scmp.eq.s32.totalorder %s36, 0
      %p500 = por %p498, %p499
      %s501 = ssub.s32 %s37, %s49
      %s502 = ssub.s32 %s38, %s45
      %s503 = sor.u32 %s501, %s502
      %p504 = scmp.eq.s32.totalorder %s503, 0
      %s506 = sadd.s32 %s505, 1
      %s507 = scalar_select %p504, %s505, %s506
      %p510 = pneg %p504
      %p511 = scmp.eq.s32.totalorder %s30, 1
      %p512 = por %p510, %p511
      %p513 = scmp.ne.s32.totalorder %s505, %s508
      %p514 = scmp.eq.s32.totalorder %s30, 0
      %p515 = por %p513, %p514
      %p516 = scmp.ne.s32.totalorder %s505, %s508
      %p517 = scmp.eq.s32.totalorder %s35, 1
      %p518 = por %p516, %p517
      %p519 = scmp.ne.s32.totalorder %s508, %s509
      %p520 = scmp.eq.s32.totalorder %s35, 0
      %p521 = por %p519, %p520
      %p522 = scmp.ne.s32.totalorder %s508, %s509
      %p523 = scmp.eq.s32.totalorder %s36, 1
      %p524 = por %p522, %p523
      %p526 = scmp.ne.s32.totalorder %s509, %s525
      %p527 = scmp.eq.s32.totalorder %s36, 0
      %p528 = por %p526, %p527
      %p529 = scmp.le.s32.totalorder 1, %s30
      %p530 = scmp.lt.s32.totalorder %s30, 3
      %p531 = pnand %p529, %p530
      %p532 = pneg %p531
      // Predicated region
      $region9: #{tpu_custom_call.1} parent=5 // pred_check
        _
      $region10: #{tpu_custom_call.1} parent=5 // pred_check_branch
        %534 = sbr.rel (%p531) target = $region12
      $region11: #{tpu_custom_call.1} parent=5 // pred_region
        %s535 = ssub.s32 %s30, 1
        // Predicated region
        $region13: #{tpu_custom_call.1} parent=11 // pred_check
          %p536 = pneg %p115
        $region14: #{tpu_custom_call.1} parent=11 // pred_check_branch
          %538 = sbr.rel (%p536) target = $region16
        $region15: #{tpu_custom_call.1} parent=11 // pred_region
          _
        $region16: #{tpu_custom_call.1} parent=11 // pred_fallthru
          _
        // Predicated region
        $region17: #{tpu_custom_call.1} parent=11 // pred_check
          %p539 = pneg %p136
        $region18: #{tpu_custom_call.1} parent=11 // pred_check_branch
          %541 = sbr.rel (%p539) target = $region20
        $region19: #{tpu_custom_call.1} parent=11 // pred_region
          _
        $region20: #{tpu_custom_call.1} parent=11 // pred_fallthru
          _
        // Predicated region
        $region21: #{tpu_custom_call.1} parent=11 // pred_check
          %p542 = pneg %p157
        $region22: #{tpu_custom_call.1} parent=11 // pred_check_branch
          %544 = sbr.rel (%p542) target = $region24
        $region23: #{tpu_custom_call.1} parent=11 // pred_region
          _
        $region24: #{tpu_custom_call.1} parent=11 // pred_fallthru
          _
        // Predicated region
        $region25: #{tpu_custom_call.1} parent=11 // pred_check
          %p545 = pneg %p178
        $region26: #{tpu_custom_call.1} parent=11 // pred_check_branch
          %547 = sbr.rel (%p545) target = $region28
        $region27: #{tpu_custom_call.1} parent=11 // pred_region
          _
        $region28: #{tpu_custom_call.1} parent=11 // pred_fallthru
          _
        // Predicated region
        $region29: #{tpu_custom_call.1} parent=11 // pred_check
          %p548 = pneg %p199
        $region30: #{tpu_custom_call.1} parent=11 // pred_check_branch
          %550 = sbr.rel (%p548) target = $region32
        $region31: #{tpu_custom_call.1} parent=11 // pred_region
          _
        $region32: #{tpu_custom_call.1} parent=11 // pred_fallthru
          _
        // Predicated region
        $region33: #{tpu_custom_call.1} parent=11 // pred_check
          %p551 = pneg %p220
        $region34: #{tpu_custom_call.1} parent=11 // pred_check_branch
          %553 = sbr.rel (%p551) target = $region36
        $region35: #{tpu_custom_call.1} parent=11 // pred_region
          _
        $region36: #{tpu_custom_call.1} parent=11 // pred_fallthru
          _
        // Predicated region
        $region37: #{tpu_custom_call.1} parent=11 // pred_check
          %p554 = pneg %p241
        $region38: #{tpu_custom_call.1} parent=11 // pred_check_branch
          %556 = sbr.rel (%p554) target = $region40
        $region39: #{tpu_custom_call.1} parent=11 // pred_region
          _
        $region40: #{tpu_custom_call.1} parent=11 // pred_fallthru
          _
        // Predicated region
        $region41: #{tpu_custom_call.1} parent=11 // pred_check
          %p557 = pneg %p262
        $region42: #{tpu_custom_call.1} parent=11 // pred_check_branch
          %559 = sbr.rel (%p557) target = $region44
        $region43: #{tpu_custom_call.1} parent=11 // pred_region
          _
        $region44: #{tpu_custom_call.1} parent=11 // pred_fallthru
          _
        // Predicated region
        $region45: #{tpu_custom_call.1} parent=11 // pred_check
          %p560 = pneg %p283
        $region46: #{tpu_custom_call.1} parent=11 // pred_check_branch
          %562 = sbr.rel (%p560) target = $region48
        $region47: #{tpu_custom_call.1} parent=11 // pred_region
          _
        $region48: #{tpu_custom_call.1} parent=11 // pred_fallthru
          _
        // Predicated region
        $region49: #{tpu_custom_call.1} parent=11 // pred_check
          %p563 = pneg %p304
        $region50: #{tpu_custom_call.1} parent=11 // pred_check_branch
          %565 = sbr.rel (%p563) target = $region52
        $region51: #{tpu_custom_call.1} parent=11 // pred_region
          _
        $region52: #{tpu_custom_call.1} parent=11 // pred_fallthru
          _
        // Predicated region
        $region53: #{tpu_custom_call.1} parent=11 // pred_check
          %p566 = pneg %p325
        $region54: #{tpu_custom_call.1} parent=11 // pred_check_branch
          %568 = sbr.rel (%p566) target = $region56
        $region55: #{tpu_custom_call.1} parent=11 // pred_region
          _
        $region56: #{tpu_custom_call.1} parent=11 // pred_fallthru
          _
        // Predicated region
        $region57: #{tpu_custom_call.1} parent=11 // pred_check
          %p569 = pneg %p346
        $region58: #{tpu_custom_call.1} parent=11 // pred_check_branch
          %571 = sbr.rel (%p569) target = $region60
        $region59: #{tpu_custom_call.1} parent=11 // pred_region
          _
        $region60: #{tpu_custom_call.1} parent=11 // pred_fallthru
          _
        // Predicated region
        $region61: #{tpu_custom_call.1} parent=11 // pred_check
          %p572 = pneg %p367
        $region62: #{tpu_custom_call.1} parent=11 // pred_check_branch
          %574 = sbr.rel (%p572) target = $region64
        $region63: #{tpu_custom_call.1} parent=11 // pred_region
          _
        $region64: #{tpu_custom_call.1} parent=11 // pred_fallthru
          _
        // Predicated region
        $region65: #{tpu_custom_call.1} parent=11 // pred_check
          %p575 = pneg %p388
        $region66: #{tpu_custom_call.1} parent=11 // pred_check_branch
          %577 = sbr.rel (%p575) target = $region68
        $region67: #{tpu_custom_call.1} parent=11 // pred_region
          _
        $region68: #{tpu_custom_call.1} parent=11 // pred_fallthru
          _
        // Predicated region
        $region69: #{tpu_custom_call.1} parent=11 // pred_check
          %p578 = pneg %p409
        $region70: #{tpu_custom_call.1} parent=11 // pred_check_branch
          %580 = sbr.rel (%p578) target = $region72
        $region71: #{tpu_custom_call.1} parent=11 // pred_region
          _
        $region72: #{tpu_custom_call.1} parent=11 // pred_fallthru
          _
        // Predicated region
        $region73: #{tpu_custom_call.1} parent=11 // pred_check
          %p581 = pneg %p430
        $region74: #{tpu_custom_call.1} parent=11 // pred_check_branch
          %583 = sbr.rel (%p581) target = $region76
        $region75: #{tpu_custom_call.1} parent=11 // pred_region
          _
        $region76: #{tpu_custom_call.1} parent=11 // pred_fallthru
          _
        // Predicated region
        $region77: #{tpu_custom_call.1} parent=11 // pred_check
          %p584 = pneg %p451
        $region78: #{tpu_custom_call.1} parent=11 // pred_check_branch
          %586 = sbr.rel (%p584) target = $region80
        $region79: #{tpu_custom_call.1} parent=11 // pred_region
          _
        $region80: #{tpu_custom_call.1} parent=11 // pred_fallthru
          _
        // Predicated region
        $region81: #{tpu_custom_call.1} parent=11 // pred_check
          %p587 = pneg %p472
        $region82: #{tpu_custom_call.1} parent=11 // pred_check_branch
          %589 = sbr.rel (%p587) target = $region84
        $region83: #{tpu_custom_call.1} parent=11 // pred_region
          _
        $region84: #{tpu_custom_call.1} parent=11 // pred_fallthru
          _
        // Predicated region
        $region85: #{tpu_custom_call.1} parent=11 // pred_check
          %p590 = pneg %p493
        $region86: #{tpu_custom_call.1} parent=11 // pred_check_branch
          %592 = sbr.rel (%p590) target = $region88
        $region87: #{tpu_custom_call.1} parent=11 // pred_region
          _
        $region88: #{tpu_custom_call.1} parent=11 // pred_fallthru
          _
      $region12: #{tpu_custom_call.1} parent=5 // pred_fallthru
        _
      %p593 = scmp.lt.s32.totalorder %s30, 2
      // Predicated region
      $region89: #{tpu_custom_call.1} parent=5 // pred_check
        %p594 = pneg %p593
      $region90: #{tpu_custom_call.1} parent=5 // pred_check_branch
        %596 = sbr.rel (%p594) target = $region92
      $region91: #{tpu_custom_call.1} parent=5 // pred_region
        // Predicated region
        $region93: #{tpu_custom_call.1} parent=91 // pred_check
          %p597 = pneg %p62
        $region94: #{tpu_custom_call.1} parent=91 // pred_check_branch
          %599 = sbr.rel (%p597) target = $region96
        $region95: #{tpu_custom_call.1} parent=91 // pred_region
          %p600 = scmp.lt.s32.totalorder %s37, 1
          %s601 = scalar_select %p600, %s37, 1
          %s602 = smul.addr %s601, 4
          %s603 = scalar_lea.vmem %s0, %s602
        $region96: #{tpu_custom_call.1} parent=91 // pred_fallthru
          _
        // Predicated region
        $region97: #{tpu_custom_call.1} parent=91 // pred_check
          %p604 = pneg %p88
        $region98: #{tpu_custom_call.1} parent=91 // pred_check_branch
          %606 = sbr.rel (%p604) target = $region100
        $region99: #{tpu_custom_call.1} parent=91 // pred_region
          %p607 = scmp.lt.s32.totalorder %s37, 1
          %s608 = scalar_select %p607, %s37, 1
          %s609 = smul.addr %s608, 4
          %s610 = scalar_lea.vmem %s1, %s609
        $region100: #{tpu_custom_call.1} parent=91 // pred_fallthru
          _
      $region92: #{tpu_custom_call.1} parent=5 // pred_fallthru
        _
      %p611 = scmp.le.s32.totalorder 1, %s30
      %p612 = scmp.lt.s32.totalorder %s30, 3
      %p613 = pnand %p611, %p612
      %p614 = pneg %p613
      // Predicated region
      $region101: #{tpu_custom_call.1} parent=5 // pred_check
        _
      $region102: #{tpu_custom_call.1} parent=5 // pred_check_branch
        %616 = sbr.rel (%p613) target = $region104
      $region103: #{tpu_custom_call.1} parent=5 // pred_region
        %s617 = ssub.s32 %s30, 1
        %p618 = scmp.lt.s32.totalorder %s39, 1
        %s619 = scalar_select %p618, %s39, 1
        %s620 = smul.addr %s619, 4
        %s621 = scalar_lea.vmem %s0, %s620
        %p622 = pneg %p68
        %p623 = pneg %p65
        %p624 = scmp.lt.s32.totalorder %s39, 1
        %s625 = scalar_select %p624, %s39, 1
        %s626 = smul.addr %s625, 4
        %s627 = scalar_lea.vmem %s1, %s626
        %p628 = pneg %p94
        %p629 = pneg %p91
        %p630 = pneg %p115
        %p631 = pneg %p112
        %p632 = pneg %p136
        %p633 = pneg %p133
        %p634 = pneg %p157
        %p635 = pneg %p154
        %p636 = pneg %p178
        %p637 = pneg %p175
        %p638 = pneg %p199
        %p639 = pneg %p196
        %p640 = pneg %p220
        %p641 = pneg %p217
        %p642 = pneg %p241
        %p643 = pneg %p238
        %p644 = pneg %p262
        %p645 = pneg %p259
        %p646 = pneg %p283
        %p647 = pneg %p280
        %p648 = pneg %p304
        %p649 = pneg %p301
        %p650 = pneg %p325
        %p651 = pneg %p322
        %p652 = pneg %p346
        %p653 = pneg %p343
        %p654 = pneg %p367
        %p655 = pneg %p364
        %p656 = pneg %p388
        %p657 = pneg %p385
        %p658 = pneg %p409
        %p659 = pneg %p406
        %p660 = pneg %p430
        %p661 = pneg %p427
        %p662 = pneg %p451
        %p663 = pneg %p448
        %p664 = pneg %p472
        %p665 = pneg %p469
        %p666 = pneg %p493
        %p667 = pneg %p490
        %p668 = pneg %p521
        %p669 = pneg %p518
        %s670 = sand.u32 %s508, 1
        %s671 = scalar_lea.sflag [#allocation7], %s670
        %s672 = sand.u32 %s508, 1
        %s673 = smul.addr %s672, 8
        %s674 = scalar_lea.vmem [#allocation6], %s673
        %p675 = scmp.lt.s32.totalorder %s39, 1
        %s676 = scalar_select %p675, %s39, 1
        %s677 = smul.addr %s676, 4
        %s678 = scalar_lea.vmem %s0, %s677
        %p679 = scmp.lt.s32.totalorder %s39, 1
        %s680 = scalar_select %p679, %s39, 1
        %s681 = smul.addr %s680, 4
        %s682 = scalar_lea.vmem %s1, %s681
        %p684 = scmp.eq.s32.totalorder %s40, 0
        // Predicated region
        $region105: #{tpu_custom_call.1} parent=103 // pred_check
          %p685 = pneg %p684
        $region106: #{tpu_custom_call.1} parent=103 // pred_check_branch
          %687 = sbr.rel (%p685) target = $region108
        $region107: #{tpu_custom_call.1} parent=103 // pred_region
          %v688 = vld [vmem:[%s678] sm:$0xf]
          %v689 = vld [vmem:[%s682] sm:$0xf]
          %v690 = vld [vmem:[%s2] sm:$0xf]
          %v691 = vld [vmem:[%s2 + $0x4] sm:$0xf]
          %v692 = vld [vmem:[%s2 + $0x8] sm:$0xf]
          %v693 = vld [vmem:[%s2 + $0xc] sm:$0xf]
          %v694 = vld [vmem:[%s3] sm:$0xf]
          %v695 = vld [vmem:[%s3 + $0x4] sm:$0xf]
          %v696 = vld [vmem:[%s3 + $0x8] sm:$0xf]
          %v697 = vld [vmem:[%s3 + $0xc] sm:$0xf]
          %v702 = vunpack.c.l.b16 %v694
          %v703 = vunpack.c.l.b16 %v695
          %v704 = vunpack.c.l.b16 %v696
          %v705 = vunpack.c.l.b16 %v697
          %v706 = vpack.c.b16 %v703, %v702
          %v707 = vpack.c.b16 %v705, %v704
          %vm710 = vcmask 261120
          %v712 = vsel %vm710, %v689, 0
          %714 = vmatpush.bf16.msra.mxu0 0
          %715 = vmatpush.bf16.msra.mxu0 0
          %716 = vmatpush.bf16.msra.mxu0 0
          %717 = vmatpush.bf16.msra.mxu0 0
          %718 = vmatpush.bf16.msra.mxu0 0
          %719 = vmatpush.bf16.msra.mxu0 0
          %720 = vmatpush.bf16.msra.mxu0 %v707
          %721 = vmatpush.bf16.msra.mxu0 %v706
          %722 = vmatmul.bf16.gmra.mxu0 %v712
          %v723 = vpop.f32.mrf.mxu0
          %v724 = vadd.f32 0.0, %v723
          %v725 = vpop.f32.mrf.mxu0
          %726 = vdwg.mxu0
          %v731 = vunpack.c.l.b16 %v690
          %v732 = vunpack.c.l.b16 %v691
          %v733 = vunpack.c.l.b16 %v692
          %v734 = vunpack.c.l.b16 %v693
          %v735 = vpack.c.b16 %v732, %v731
          %v736 = vpack.c.b16 %v734, %v733
          %v740 = vsel %vm710, %v688, 0
          %742 = vmatpush.bf16.msra.mxu0 0
          %743 = vmatpush.bf16.msra.mxu0 0
          %744 = vmatpush.bf16.msra.mxu0 0
          %745 = vmatpush.bf16.msra.mxu0 0
          %746 = vmatpush.bf16.msra.mxu0 0
          %747 = vmatpush.bf16.msra.mxu0 0
          %748 = vmatpush.bf16.msra.mxu0 %v736
          %749 = vmatpush.bf16.msra.mxu0 %v735
          %750 = vmatmul.bf16.gmra.mxu0 %v740
          %v751 = vpop.f32.mrf.mxu0
          %v752 = vadd.f32 %v724, %v751
          %v753 = vpop.f32.mrf.mxu0
          %754 = vdwg.mxu0
          %v755 = vld [vmem:[%s4] sm:$0x1]
          %v757 = vperm.slane %v755, 0
          %v759 = vadd.f32 %v752, %v757
          %760 = vst.msk [vmem:[#allocation2] sm:$0xff] %vm710, %v759
          %v761 = vld [vmem:[%s5] sm:$0x1]
          %v762 = vld [vmem:[%s6] sm:$0x1]
          %v763 = vsel %vm710, %v759, 0.0
          %764 = vadd.xlane.f32.xlu0 %v763
          %v765 = vpop.xlane.xlu0 %764
          %v766 = vrcp.pop 32.0
          %v767 = vmul.f32 32.0, %v766
          %v768 = vsub.f32 1.0, %v767
          %v769 = vmul.f32 %v766, %v768
          %v770 = vadd.f32 %v766, %v769
          %vm771 = vweird.f32 %v766
          %v772 = vsel %vm771, %v766, %v770
          %v773 = vmul.f32 %v765, %v772
          %v774 = vsub.f32 %v759, %v773
          %v775 = vmul.f32 %v774, %v774
          %v776 = vsel %vm710, %v775, 0.0
          %777 = vadd.xlane.f32.xlu0 %v776
          %v778 = vpop.xlane.xlu0 %777
          %v779 = vmul.f32 %v778, %v772
          %v780 = vadd.f32 %v779, 1e-05
          %v781 = vrsqrt.pop %v780
          %v782 = vmul.f32 %v781, %v780
          %v783 = vmul.f32 %v782, %v781
          %v784 = vmul.f32 0.5, %v783
          %v785 = vsub.f32 1.5, %v784
          %v786 = vmul.f32 %v781, %v785
          %vm787 = vweird.f32 %v780
          %vm788 = vweird.f32 %v781
          %vm789 = vmor %vm787, %vm788
          %v790 = vsel %vm789, %v781, %v786
          %v791 = vmul.f32 %v774, %v790
          %v793 = vperm.slane %v761, 0
          %v795 = vmul.f32 %v791, %v793
          %v797 = vperm.slane %v762, 0
          %v799 = vadd.f32 %v795, %v797
          %v800 = vpack.c.bf16 %v799, %v799
          %vm801 = vcmask 257024
          %802 = vst.msk [vmem:[#allocation3] sm:$0xf] %vm801, %v800
          loop: start=0, step=1, limit=4
          $region109: #{tpu_custom_call.1} parent=107 // loop_pre_header
            _
          $region110: #{tpu_custom_call.1} parent=107 // loop_header
            %s804 = sphi 0, %s808
            %p805 = scmp.ge.s32.totalorder %s804, 4
          $region111: #{tpu_custom_call.1} parent=107 // loop_header_branch
            %807 = sbr.rel (%p805) target = $region115
          $region112: #{tpu_custom_call.1} parent=107 // loop_body
            %s809 = smul.u32 %s804, 4
            %s810 = smul.addr %s809, 4
            %s811 = scalar_lea.vmem %s9, %s810
            %v812 = vld [vmem:[%s811] sm:$0xf]
            %v813 = vld [vmem:[%s811 + $0x4] sm:$0xf]
            %v814 = vld [vmem:[%s811 + $0x8] sm:$0xf]
            %v815 = vld [vmem:[%s811 + $0xc] sm:$0xf]
            %s816 = scalar_lea.vmem %s10, %s804
            %v817 = vld [vmem:[%s816] sm:$0x1]
            %v819 = vperm.slane %v817, 0
            %v825 = vunpack.c.l.b16 %v812
            %v826 = vunpack.c.l.b16 %v813
            %v827 = vunpack.c.l.b16 %v814
            %v828 = vunpack.c.l.b16 %v815
            %v829 = vpack.c.b16 %v826, %v825
            %v830 = vpack.c.b16 %v828, %v827
            %v834 = vsel %vm710, %v800, 0
            %836 = vmatpush.bf16.msra.mxu0 0
            %837 = vmatpush.bf16.msra.mxu0 0
            %838 = vmatpush.bf16.msra.mxu0 0
            %839 = vmatpush.bf16.msra.mxu0 0
            %840 = vmatpush.bf16.msra.mxu0 0
            %841 = vmatpush.bf16.msra.mxu0 0
            %842 = vmatpush.bf16.msra.mxu0 %v830
            %843 = vmatpush.bf16.msra.mxu0 %v829
            %844 = vmatmul.bf16.gmra.mxu0 %v834
            %v845 = vpop.f32.mrf.mxu0
            %v846 = vadd.f32 %v819, %v845
            %v847 = vpop.f32.mrf.mxu0
            %848 = vdwg.mxu0
            %v849 = vpack.c.bf16 %v846, %v846
            %s850 = smul.addr %s804, 4
            %s851 = scalar_lea.vmem [#allocation4], %s850
            %vm852 = vcmask 60416
            %853 = vst.msk [vmem:[%s851] sm:$0xf] %vm852, %v849
            %s854 = smul.addr %s809, 4
            %s855 = scalar_lea.vmem %s11, %s854
            %v856 = vld [vmem:[%s855] sm:$0xf]
            %v857 = vld [vmem:[%s855 + $0x4] sm:$0xf]
            %v858 = vld [vmem:[%s855 + $0x8] sm:$0xf]
            %v859 = vld [vmem:[%s855 + $0xc] sm:$0xf]
            %s860 = scalar_lea.vmem %s12, %s804
            %v861 = vld [vmem:[%s860] sm:$0x1]
            %v863 = vperm.slane %v861, 0
            %v869 = vunpack.c.l.b16 %v856
            %v870 = vunpack.c.l.b16 %v857
            %v871 = vunpack.c.l.b16 %v858
            %v872 = vunpack.c.l.b16 %v859
            %v873 = vpack.c.b16 %v870, %v869
            %v874 = vpack.c.b16 %v872, %v871
            %877 = vmatpush.bf16.msra.mxu0 0
            %878 = vmatpush.bf16.msra.mxu0 0
            %879 = vmatpush.bf16.msra.mxu0 0
            %880 = vmatpush.bf16.msra.mxu0 0
            %881 = vmatpush.bf16.msra.mxu0 0
            %882 = vmatpush.bf16.msra.mxu0 0
            %883 = vmatpush.bf16.msra.mxu0 %v874
            %884 = vmatpush.bf16.msra.mxu0 %v873
            %885 = vmatmul.bf16.gmra.mxu0 %v834
            %v886 = vpop.f32.mrf.mxu0
            %v887 = vadd.f32 %v863, %v886
            %v888 = vpop.f32.mrf.mxu0
            %889 = vdwg.mxu0
            %v890 = vpack.c.bf16 %v887, %v887
            %s891 = smul.addr %s804, 4
            %s892 = scalar_lea.vmem [#allocation5], %s891
            %893 = vst.msk [vmem:[%s892] sm:$0xf] %vm852, %v890
          $region113: #{tpu_custom_call.1} parent=107 // loop_footer
            %s808 = sadd.s32 1, %s804
          $region114: #{tpu_custom_call.1} parent=107 // loop_footer_branch
            %803 = sbr.rel target = $region110
          $region115: #{tpu_custom_call.1} parent=107 // loop_exit
            _
        $region108: #{tpu_custom_call.1} parent=103 // pred_fallthru
          _
        %s894 = smul.u32 %s40, 8
        %s895 = scalar_lea.vmem [#allocation2], %s894
        %v896 = vld [vmem:[%s895] sm:$0xff]
        %s897 = sshra.s32 %s894, 3
        %s898 = sand.u32 %s894, 7
        %s899 = smul.addr %s897, 4
        %s900 = scalar_lea.vmem [#allocation3], %s899
        %v901 = vld [vmem:[%s900] sm:$0xf]
        loop: start=0, step=1, limit=4
        $region116: #{tpu_custom_call.1} parent=103 // loop_pre_header
          _
        $region117: #{tpu_custom_call.1} parent=103 // loop_header
          %s903 = sphi 0, %s907
          %p904 = scmp.ge.s32.totalorder %s903, 4
          %v908 = vphi 0.0, %v1045
        $region118: #{tpu_custom_call.1} parent=103 // loop_header_branch
          %906 = sbr.rel (%p904) target = $region122
        $region119: #{tpu_custom_call.1} parent=103 // loop_body
          %s909 = smul.u32 %s903, 4
          %s910 = smul.addr %s909, 4
          %s911 = scalar_lea.vmem %s7, %s910
          %v912 = vld [vmem:[%s911] sm:$0xf]
          %v913 = vld [vmem:[%s911 + $0x4] sm:$0xf]
          %v914 = vld [vmem:[%s911 + $0x8] sm:$0xf]
          %v915 = vld [vmem:[%s911 + $0xc] sm:$0xf]
          %s916 = scalar_lea.vmem %s8, %s903
          %v917 = vld [vmem:[%s916] sm:$0x1]
          %v919 = vperm.slane %v917, 0
          %v925 = vunpack.c.l.b16 %v912
          %v926 = vunpack.c.l.b16 %v913
          %v927 = vunpack.c.l.b16 %v914
          %v928 = vunpack.c.l.b16 %v915
          %v929 = vpack.c.b16 %v926, %v925
          %v930 = vpack.c.b16 %v928, %v927
          %vm933 = vcmask 261120
          %v935 = vsel %vm933, %v901, 0
          %937 = vmatpush.bf16.msra.mxu0 0
          %938 = vmatpush.bf16.msra.mxu0 0
          %939 = vmatpush.bf16.msra.mxu0 0
          %940 = vmatpush.bf16.msra.mxu0 0
          %941 = vmatpush.bf16.msra.mxu0 0
          %942 = vmatpush.bf16.msra.mxu0 0
          %943 = vmatpush.bf16.msra.mxu0 %v930
          %944 = vmatpush.bf16.msra.mxu0 %v929
          %945 = vmatmul.bf16.gmra.mxu0 %v935
          %v946 = vpop.f32.mrf.mxu0
          %v947 = vadd.f32 %v919, %v946
          %v948 = vpop.f32.mrf.mxu0
          %949 = vdwg.mxu0
          %v950 = vpack.c.bf16 %v947, %v947
          %s951 = smul.addr %s903, 4
          %s952 = scalar_lea.vmem [#allocation4], %s951
          %v953 = vld [vmem:[%s952] sm:$0xf]
          %vm954 = vcmask 64512
          %v956 = vsel %vm954, %v950, 0
          %v959 = vsel %vm954, %v953, 0
          %961 = vmatpush.bf16.xpose.msra.mxu0 0
          %962 = vmatpush.bf16.xpose.msra.mxu0 0
          %963 = vmatpush.bf16.xpose.msra.mxu0 0
          %964 = vmatpush.bf16.xpose.msra.mxu0 0
          %965 = vmatpush.bf16.xpose.msra.mxu0 0
          %966 = vmatpush.bf16.xpose.msra.mxu0 0
          %967 = vmatpush.bf16.xpose.msra.mxu0 0
          %968 = vmatpush.bf16.xpose.msra.mxu0 %v959
          %969 = vmatmul.bf16.gmra.mxu0 %v956
          %v970 = vpop.f32.mrf.mxu0
          %v971 = vadd.f32 0.0, %v970
          %v972 = vpop.f32.mrf.mxu0
          %973 = vdwg.mxu0
          %v974 = vsel %vm954, %v971, -inf
          %975 = vmax.xlane.f32.xlu0 %v974
          %v976 = vpop.xlane.xlu0 %975
          %v977 = vsub.f32 %v971, %v976
          %v978 = vmul.f32 %v977, 1.442695
          %v979 = vpow.pop %v978
          %v980 = vsel %vm954, %v979, 0.0
          %981 = vadd.xlane.f32.xlu0 %v980
          %v982 = vpop.xlane.xlu0 %981
          %v983 = vpack.c.bf16 %v979, %v979
          %s984 = smul.addr %s903, 4
          %s985 = scalar_lea.vmem [#allocation5], %s984
          %v986 = vld [vmem:[%s985] sm:$0xf]
          %v988 = vsel %vm954, %v983, 0
          %vm990 = vcmask 1043456
          %v992 = vsel %vm990, %v986, 0
          %994 = vmatpush.bf16.msra.mxu0 0
          %995 = vmatpush.bf16.msra.mxu0 0
          %996 = vmatpush.bf16.msra.mxu0 0
          %997 = vmatpush.bf16.msra.mxu0 0
          %998 = vmatpush.bf16.msra.mxu0 0
          %999 = vmatpush.bf16.msra.mxu0 0
          %1000 = vmatpush.bf16.msra.mxu0 0
          %1001 = vmatpush.bf16.msra.mxu0 %v992
          %1002 = vmatmul.bf16.gmra.mxu0 %v988
          %v1003 = vpop.f32.mrf.mxu0
          %v1004 = vadd.f32 0.0, %v1003
          %v1005 = vpop.f32.mrf.mxu0
          %1006 = vdwg.mxu0
          %v1007 = vrcp.pop %v982
          %v1008 = vmul.f32 %v982, %v1007
          %v1009 = vsub.f32 1.0, %v1008
          %v1010 = vmul.f32 %v1007, %v1009
          %v1011 = vadd.f32 %v1007, %v1010
          %vm1012 = vweird.f32 %v982
          %vm1013 = vweird.f32 %v1007
          %vm1014 = vmor %vm1012, %vm1013
          %v1015 = vsel %vm1014, %v1007, %v1011
          %v1016 = vand.u32 2147483647, %v982
          %vm1017 = vcmp.eq.f32.partialorder %v1016, 8.507059e+37
          %v1018 = vand.u32 %v982, 2147483648
          %v1019 = vor.u32 1.1754944e-38, %v1018
          %v1020 = vsel %vm1017, %v1019, %v1015
          %v1021 = vmul.f32 %v1004, %v1020
          %v1022 = vpack.c.bf16 %v1021, %v1021
          %s1023 = smul.addr %s903, 4
          %s1024 = scalar_lea.vmem %s13, %s1023
          %v1025 = vld [vmem:[%s1024] sm:$0xf]
          %v1027 = vsel %vm954, %v1022, 0
          %v1030 = vsel %vm990, %v1025, 0
          %1032 = vmatpush.bf16.msra.mxu0 0
          %1033 = vmatpush.bf16.msra.mxu0 0
          %1034 = vmatpush.bf16.msra.mxu0 0
          %1035 = vmatpush.bf16.msra.mxu0 0
          %1036 = vmatpush.bf16.msra.mxu0 0
          %1037 = vmatpush.bf16.msra.mxu0 0
          %1038 = vmatpush.bf16.msra.mxu0 0
          %1039 = vmatpush.bf16.msra.mxu0 %v1030
          %1040 = vmatmul.bf16.gmra.mxu0 %v1027
          %v1041 = vpop.f32.mrf.mxu0
          %v1042 = vadd.f32 0.0, %v1041
          %v1043 = vpop.f32.mrf.mxu0
          %1044 = vdwg.mxu0
          %v1045 = vadd.f32 %v908, %v1042
        $region120: #{tpu_custom_call.1} parent=103 // loop_footer
          %s907 = sadd.s32 1, %s903
        $region121: #{tpu_custom_call.1} parent=103 // loop_footer_branch
          %902 = sbr.rel target = $region117
        $region122: #{tpu_custom_call.1} parent=103 // loop_exit
          _
        %v1046 = vadd.f32 %v896, %v908
        %v1047 = vld [vmem:[%s14] sm:$0x1]
        %v1049 = vperm.slane %v1047, 0
        %v1051 = vadd.f32 %v1046, %v1049
        %v1052 = vld [vmem:[%s15] sm:$0x1]
        %v1053 = vld [vmem:[%s16] sm:$0x1]
        %vm1054 = vcmask 261120
        %v1055 = vsel %vm1054, %v1051, 0.0
        %1056 = vadd.xlane.f32.xlu0 %v1055
        %v1057 = vpop.xlane.xlu0 %1056
        %v1058 = vrcp.pop 32.0
        %v1059 = vmul.f32 32.0, %v1058
        %v1060 = vsub.f32 1.0, %v1059
        %v1061 = vmul.f32 %v1058, %v1060
        %v1062 = vadd.f32 %v1058, %v1061
        %vm1063 = vweird.f32 %v1058
        %v1064 = vsel %vm1063, %v1058, %v1062
        %v1065 = vmul.f32 %v1057, %v1064
        %v1066 = vsub.f32 %v1051, %v1065
        %v1067 = vmul.f32 %v1066, %v1066
        %v1068 = vsel %vm1054, %v1067, 0.0
        %1069 = vadd.xlane.f32.xlu0 %v1068
        %v1070 = vpop.xlane.xlu0 %1069
        %v1071 = vmul.f32 %v1070, %v1064
        %v1072 = vadd.f32 %v1071, 1e-05
        %v1073 = vrsqrt.pop %v1072
        %v1074 = vmul.f32 %v1073, %v1072
        %v1075 = vmul.f32 %v1074, %v1073
        %v1076 = vmul.f32 0.5, %v1075
        %v1077 = vsub.f32 1.5, %v1076
        %v1078 = vmul.f32 %v1073, %v1077
        %vm1079 = vweird.f32 %v1072
        %vm1080 = vweird.f32 %v1073
        %vm1081 = vmor %vm1079, %vm1080
        %v1082 = vsel %vm1081, %v1073, %v1078
        %v1083 = vmul.f32 %v1066, %v1082
        %v1085 = vperm.slane %v1052, 0
        %v1087 = vmul.f32 %v1083, %v1085
        %v1089 = vperm.slane %v1053, 0
        %v1091 = vadd.f32 %v1087, %v1089
        %v1092 = vpack.c.bf16 %v1091, %v1091
        %v1093 = vld [vmem:[%s17] sm:$0xf]
        %v1094 = vld [vmem:[%s17 + $0x4] sm:$0xf]
        %v1095 = vld [vmem:[%s17 + $0x8] sm:$0xf]
        %v1096 = vld [vmem:[%s17 + $0xc] sm:$0xf]
        %v1097 = vld [vmem:[%s18] sm:$0x1]
        %v1099 = vperm.slane %v1097, 0
        %v1105 = vunpack.c.l.b16 %v1093
        %v1106 = vunpack.c.l.b16 %v1094
        %v1107 = vunpack.c.l.b16 %v1095
        %v1108 = vunpack.c.l.b16 %v1096
        %v1109 = vpack.c.b16 %v1106, %v1105
        %v1110 = vpack.c.b16 %v1108, %v1107
        %v1114 = vsel %vm1054, %v1092, 0
        %1116 = vmatpush.bf16.msra.mxu0 0
        %1117 = vmatpush.bf16.msra.mxu0 0
        %1118 = vmatpush.bf16.msra.mxu0 0
        %1119 = vmatpush.bf16.msra.mxu0 0
        %1120 = vmatpush.bf16.msra.mxu0 0
        %1121 = vmatpush.bf16.msra.mxu0 0
        %1122 = vmatpush.bf16.msra.mxu0 %v1110
        %1123 = vmatpush.bf16.msra.mxu0 %v1109
        %1124 = vmatmul.bf16.gmra.mxu0 %v1114
        %v1125 = vpop.f32.mrf.mxu0
        %v1126 = vadd.f32 %v1099, %v1125
        %v1127 = vpop.f32.mrf.mxu0
        %1128 = vdwg.mxu0
        %v1129 = vmul.f32 %v1126, 0.5
        %v1130 = vmul.f32 %v1126, 0.70710677
        %v1131 = vmul.f32 %v1130, %v1130
        %v1132 = vmin.f32 16.0, %v1131
        %v1133 = vmul.f32 %v1132, 2.1237322e-06
        %v1134 = vadd.f32 %v1133, 0.00028619796
        %v1135 = vmul.f32 %v1132, %v1134
        %v1136 = vadd.f32 %v1135, 0.0036580483
        %v1137 = vmul.f32 %v1132, %v1136
        %v1138 = vadd.f32 %v1137, 0.05243302
        %v1139 = vmul.f32 %v1132, %v1138
        %v1140 = vadd.f32 %v1139, 0.18741608
        %v1141 = vmul.f32 %v1132, %v1140
        %v1142 = vadd.f32 %v1141, 1.1283791
        %v1143 = vmul.f32 %v1130, %v1142
        %v1144 = vmul.f32 %v1132, 3.8918573e-05
        %v1145 = vadd.f32 %v1144, 0.001143296
        %v1146 = vmul.f32 %v1132, %v1145
        %v1147 = vadd.f32 %v1146, 0.014752088
        %v1148 = vmul.f32 %v1132, %v1147
        %v1149 = vadd.f32 %v1148, 0.112945676
        %v1150 = vmul.f32 %v1132, %v1149
        %v1151 = vadd.f32 %v1150, 0.4994258
        %v1152 = vmul.f32 %v1132, %v1151
        %v1153 = vadd.f32 %v1152, 1.0
        %v1154 = vrcp.pop %v1153
        %v1155 = vmul.f32 %v1153, %v1154
        %v1156 = vsub.f32 1.0, %v1155
        %v1157 = vmul.f32 %v1154, %v1156
        %v1158 = vadd.f32 %v1154, %v1157
        %vm1159 = vweird.f32 %v1153
        %vm1160 = vweird.f32 %v1154
        %vm1161 = vmor %vm1159, %vm1160
        %v1162 = vsel %vm1161, %v1154, %v1158
        %v1163 = vand.u32 2147483647, %v1153
        %vm1164 = vcmp.eq.f32.partialorder %v1163, 8.507059e+37
        %v1165 = vand.u32 %v1153, 2147483648
        %v1166 = vor.u32 1.1754944e-38, %v1165
        %v1167 = vsel %vm1164, %v1166, %v1162
        %v1168 = vmul.f32 %v1143, %v1167
        %v1169 = vmin.f32 %v1168, 1.0
        %v1170 = vmax.f32 %v1169, -1.0
        %v1171 = vadd.f32 %v1170, 1.0
        %v1172 = vmul.f32 %v1129, %v1171
        %v1173 = vpack.c.bf16 %v1172, %v1172
        %v1174 = vld [vmem:[%s19] sm:$0xf]
        %v1175 = vld [vmem:[%s19 + $0x4] sm:$0xf]
        %v1176 = vld [vmem:[%s19 + $0x8] sm:$0xf]
        %v1177 = vld [vmem:[%s19 + $0xc] sm:$0xf]
        %v1178 = vld [vmem:[%s19 + $0x10] sm:$0xf]
        %v1179 = vld [vmem:[%s19 + $0x14] sm:$0xf]
        %v1180 = vld [vmem:[%s19 + $0x18] sm:$0xf]
        %v1181 = vld [vmem:[%s19 + $0x1c] sm:$0xf]
        %v1182 = vld [vmem:[%s19 + $0x20] sm:$0xf]
        %v1183 = vld [vmem:[%s19 + $0x24] sm:$0xf]
        %v1184 = vld [vmem:[%s19 + $0x28] sm:$0xf]
        %v1185 = vld [vmem:[%s19 + $0x2c] sm:$0xf]
        %v1186 = vld [vmem:[%s19 + $0x30] sm:$0xf]
        %v1187 = vld [vmem:[%s19 + $0x34] sm:$0xf]
        %v1188 = vld [vmem:[%s19 + $0x38] sm:$0xf]
        %v1189 = vld [vmem:[%s19 + $0x3c] sm:$0xf]
        %v1190 = vld [vmem:[%s20] sm:$0x1]
        %v1192 = vperm.slane %v1190, 0
        %v1210 = vunpack.c.l.b16 %v1174
        %v1211 = vunpack.c.l.b16 %v1175
        %v1212 = vunpack.c.l.b16 %v1176
        %v1213 = vunpack.c.l.b16 %v1177
        %v1214 = vunpack.c.l.b16 %v1178
        %v1215 = vunpack.c.l.b16 %v1179
        %v1216 = vunpack.c.l.b16 %v1180
        %v1217 = vunpack.c.l.b16 %v1181
        %v1218 = vunpack.c.l.b16 %v1182
        %v1219 = vunpack.c.l.b16 %v1183
        %v1220 = vunpack.c.l.b16 %v1184
        %v1221 = vunpack.c.l.b16 %v1185
        %v1222 = vunpack.c.l.b16 %v1186
        %v1223 = vunpack.c.l.b16 %v1187
        %v1224 = vunpack.c.l.b16 %v1188
        %v1225 = vunpack.c.l.b16 %v1189
        %v1226 = vpack.c.b16 %v1211, %v1210
        %v1227 = vpack.c.b16 %v1213, %v1212
        %v1228 = vpack.c.b16 %v1215, %v1214
        %v1229 = vpack.c.b16 %v1217, %v1216
        %v1230 = vpack.c.b16 %v1219, %v1218
        %v1231 = vpack.c.b16 %v1221, %v1220
        %v1232 = vpack.c.b16 %v1223, %v1222
        %v1233 = vpack.c.b16 %v1225, %v1224
        %1242 = vmatpush.bf16.msra.mxu0 %v1233
        %1243 = vmatpush.bf16.msra.mxu0 %v1232
        %1244 = vmatpush.bf16.msra.mxu0 %v1231
        %1245 = vmatpush.bf16.msra.mxu0 %v1230
        %1246 = vmatpush.bf16.msra.mxu0 %v1229
        %1247 = vmatpush.bf16.msra.mxu0 %v1228
        %1248 = vmatpush.bf16.msra.mxu0 %v1227
        %1249 = vmatpush.bf16.msra.mxu0 %v1226
        %1250 = vmatmul.bf16.gmra.mxu0 %v1173
        %v1251 = vpop.f32.mrf.mxu0
        %v1252 = vadd.f32 %v1192, %v1251
        %v1253 = vpop.f32.mrf.mxu0
        %1254 = vdwg.mxu0
        %v1255 = vadd.f32 %v1051, %v1252
        %1256 = vst.msk [vmem:[%s674] sm:$0xff] %vm1054, %v1255
        %s1257 = sand.u32 %s508, 1
        %s1258 = scalar_lea.sflag [#allocation7], %s1257
        %s1259 = sand.u32 %s508, 1
        %s1260 = smul.addr %s1259, 8
        %s1261 = scalar_lea.vmem [#allocation6], %s1260
        // Predicated region
        $region123: #{tpu_custom_call.1} parent=103 // pred_check
          %p1262 = pneg %p518
        $region124: #{tpu_custom_call.1} parent=103 // pred_check_branch
          %1264 = sbr.rel (%p1262) target = $region126
        $region125: #{tpu_custom_call.1} parent=103 // pred_region
          %1266 = vsyncadd %s1258, 0
          %s1267 = sadd.s32 %s40, %s39
          %s1268 = smul.addr %s1267, 8
          %s1269 = scalar_lea.hbm %s21, %s1268
          %s1271 = sshll.u32 %s1261, 4
          %s1272 = int_to_ptr.vmem [resolvable:$true] %s1271
          %s1273 = sshll.u32 %s1269, 4
          %s1274 = int_to_ptr.hbm [resolvable:$true] %s1273
          %1276 = dma.vmem_to_hbm [thread:$0]  %s1272, 128, %s1274, %s1258
        $region126: #{tpu_custom_call.1} parent=103 // pred_fallthru
          _
      $region104: #{tpu_custom_call.1} parent=5 // pred_fallthru
        _
      %p1277 = scmp.le.s32.totalorder 2, %s30
      // Predicated region
      $region127: #{tpu_custom_call.1} parent=5 // pred_check
        %p1278 = pneg %p1277
      $region128: #{tpu_custom_call.1} parent=5 // pred_check_branch
        %1280 = sbr.rel (%p1278) target = $region130
      $region129: #{tpu_custom_call.1} parent=5 // pred_region
        %s1281 = ssub.s32 %s30, 2
        // Predicated region
        $region131: #{tpu_custom_call.1} parent=129 // pred_check
          %p1282 = pneg %p524
        $region132: #{tpu_custom_call.1} parent=129 // pred_check_branch
          %1284 = sbr.rel (%p1282) target = $region134
        $region133: #{tpu_custom_call.1} parent=129 // pred_region
          %s1285 = sand.u32 %s509, 1
          %s1286 = scalar_lea.sflag [#allocation7], %s1285
          %s1287 = sand.u32 %s509, 1
          %s1288 = smul.addr %s1287, 8
          %s1289 = scalar_lea.vmem [#allocation6], %s1288
          %1291 = dma.done %s1286, 128
        $region134: #{tpu_custom_call.1} parent=129 // pred_fallthru
          _
      $region130: #{tpu_custom_call.1} parent=5 // pred_fallthru
        _
    $region6: #{tpu_custom_call.1} parent=1 // loop_footer
      %s34 = sadd.s32 1, %s30
    $region7: #{tpu_custom_call.1} parent=1 // loop_footer_branch
      %29 = sbr.rel target = $region3
    $region8: #{tpu_custom_call.1} parent=1 // loop_exit
      _
    %1292 = vsyncpa [#allocation7], 1
    %s1293 = scalar_lea.sflag [#allocation7], 1
    %1294 = vsyncpa %s1293, 1

// kernel: tpu_custom_call.1
$region0: #{tpu_custom_call.1}
  #allocation0 [shape = 'u32[]', space=smem, size = 0x4, offset = 0x4, fixed_abs, tag = 'smem constant byte address 0x4 - core index']
  #allocation1 [shape = 'u32[72,128]{1,0:T(1,128)}', space=vmem, size = 0x9000, scoped, tag = 'internal scratch']
  #allocation2 [shape = 'f32[8,32]{1,0:T(8,128)}', space=vmem, size = 0x1000, scoped, tag = 'scratch operand']
  #allocation3 [shape = 'bf16[8,32]{1,0:T(8,128)(2,1)}', space=vmem, size = 0x800, scoped, tag = 'scratch operand']
  #allocation4 [shape = 'bf16[4,8,8]{2,1,0:T(8,128)(2,1)}', space=vmem, size = 0x2000, scoped, tag = 'scratch operand']
  #allocation5 [shape = 'bf16[4,8,8]{2,1,0:T(8,128)(2,1)}', space=vmem, size = 0x2000, scoped, tag = 'scratch operand']
  %s0 = inlined_call_operand.vmem [shape: bf16[2,8,32], index: 0, kind: input, shape index: {}]
  %s1 = inlined_call_operand.vmem [shape: bf16[2,8,32], index: 1, kind: input, shape index: {}]
  %s2 = inlined_call_operand.vmem [shape: bf16[32,32], index: 2, kind: input, shape index: {}]
  %s3 = inlined_call_operand.vmem [shape: bf16[32,32], index: 3, kind: input, shape index: {}]
  %s4 = inlined_call_operand.vmem [shape: f32[1,32], index: 4, kind: input, shape index: {}]
  %s5 = inlined_call_operand.vmem [shape: f32[1,32], index: 5, kind: input, shape index: {}]
  %s6 = inlined_call_operand.vmem [shape: f32[1,32], index: 6, kind: input, shape index: {}]
  %s7 = inlined_call_operand.vmem [shape: bf16[4,32,8], index: 7, kind: input, shape index: {}]
  %s8 = inlined_call_operand.vmem [shape: f32[4,1,8], index: 8, kind: input, shape index: {}]
  %s9 = inlined_call_operand.vmem [shape: bf16[4,32,8], index: 9, kind: input, shape index: {}]
  %s10 = inlined_call_operand.vmem [shape: f32[4,1,8], index: 10, kind: input, shape index: {}]
  %s11 = inlined_call_operand.vmem [shape: bf16[4,32,8], index: 11, kind: input, shape index: {}]
  %s12 = inlined_call_operand.vmem [shape: f32[4,1,8], index: 12, kind: input, shape index: {}]
  %s13 = inlined_call_operand.vmem [shape: bf16[4,8,32], index: 13, kind: input, shape index: {}]
  %s14 = inlined_call_operand.vmem [shape: f32[1,32], index: 14, kind: input, shape index: {}]
  %s15 = inlined_call_operand.vmem [shape: f32[1,32], index: 15, kind: input, shape index: {}]
  %s16 = inlined_call_operand.vmem [shape: f32[1,32], index: 16, kind: input, shape index: {}]
  %s17 = inlined_call_operand.vmem [shape: bf16[32,128], index: 17, kind: input, shape index: {}]
  %s18 = inlined_call_operand.vmem [shape: f32[1,128], index: 18, kind: input, shape index: {}]
  %s19 = inlined_call_operand.vmem [shape: bf16[128,32], index: 19, kind: input, shape index: {}]
  %s20 = inlined_call_operand.vmem [shape: f32[1,32], index: 20, kind: input, shape index: {}]
  %s21 = inlined_call_operand.hbm [shape: f32[2,8,32], index: 21, kind: output, shape index: {}]
  %s22 = sld [smem:[#allocation0]]
  $region135: #{tpu_custom_call.1} parent=0
    _
  %s24 = ssub.s32 1, %s22
  %s25 = scalar_select 0, %s24, %s22
  $region1: #{tpu_custom_call.1} parent=0
    #allocation6 [shape = 'u8[8192]{0}', space=vmem, size = 0x2000, scoped, tag = 'output window, operand 0']
    #allocation7 [shape = 's32[2]{0}', space=sflag, size = 0x8, scoped, tag = 'scoped memory for tpu_custom_call.1']
    %26 = vsyncpa [#allocation7], 0
    %s27 = scalar_lea.sflag [#allocation7], 1
    %28 = vsyncpa %s27, 0
    loop: start=0, step=1, limit=4
    $region2: #{tpu_custom_call.1} parent=1 // loop_pre_header
      _
    $region3: #{tpu_custom_call.1} parent=1 // loop_header
      %s30 = sphi 0, %s34
      %p31 = scmp.ge.s32.totalorder %s30, 4
      %s37 = sphi 0, %s49
      %s38 = sphi 0, %s45
      %s39 = sphi 0, %s37
      %s40 = sphi 0, %s38
      %s41 = sphi 0, %s39
      %s42 = sphi 0, %s40
      %s52 = sphi 0, %s54
      %s55 = sphi 0, %s52
      %s56 = sphi 0, %s55
      %s72 = sphi 0, %s56
      %s78 = sphi 0, %s80
      %s81 = sphi 0, %s78
      %s82 = sphi 0, %s81
      %s98 = sphi 0, %s82
      %s102 = sphi 0, %s102
      %s104 = sphi 0, %s102
      %s105 = sphi 0, %s104
      %s119 = sphi 0, %s105
      %s123 = sphi 0, %s123
      %s125 = sphi 0, %s123
      %s126 = sphi 0, %s125
      %s140 = sphi 0, %s126
      %s144 = sphi 0, %s144
      %s146 = sphi 0, %s144
      %s147 = sphi 0, %s146
      %s161 = sphi 0, %s147
      %s165 = sphi 0, %s165
      %s167 = sphi 0, %s165
      %s168 = sphi 0, %s167
      %s182 = sphi 0, %s168
      %s186 = sphi 0, %s186
      %s188 = sphi 0, %s186
      %s189 = sphi 0, %s188
      %s203 = sphi 0, %s189
      %s207 = sphi 0, %s207
      %s209 = sphi 0, %s207
      %s210 = sphi 0, %s209
      %s224 = sphi 0, %s210
      %s228 = sphi 0, %s228
      %s230 = sphi 0, %s228
      %s231 = sphi 0, %s230
      %s245 = sphi 0, %s231
      %s249 = sphi 0, %s249
      %s251 = sphi 0, %s249
      %s252 = sphi 0, %s251
      %s266 = sphi 0, %s252
      %s270 = sphi 0, %s270
      %s272 = sphi 0, %s270
      %s273 = sphi 0, %s272
      %s287 = sphi 0, %s273
      %s291 = sphi 0, %s291
      %s293 = sphi 0, %s291
      %s294 = sphi 0, %s293
      %s308 = sphi 0, %s294
      %s312 = sphi 0, %s312
      %s314 = sphi 0, %s312
      %s315 = sphi 0, %s314
      %s329 = sphi 0, %s315
      %s333 = sphi 0, %s333
      %s335 = sphi 0, %s333
      %s336 = sphi 0, %s335
      %s350 = sphi 0, %s336
      %s354 = sphi 0, %s354
      %s356 = sphi 0, %s354
      %s357 = sphi 0, %s356
      %s371 = sphi 0, %s357
      %s375 = sphi 0, %s375
      %s377 = sphi 0, %s375
      %s378 = sphi 0, %s377
      %s392 = sphi 0, %s378
      %s396 = sphi 0, %s396
      %s398 = sphi 0, %s396
      %s399 = sphi 0, %s398
      %s413 = sphi 0, %s399
      %s417 = sphi 0, %s417
      %s419 = sphi 0, %s417
      %s420 = sphi 0, %s419
      %s434 = sphi 0, %s420
      %s438 = sphi 0, %s438
      %s440 = sphi 0, %s438
      %s441 = sphi 0, %s440
      %s455 = sphi 0, %s441
      %s459 = sphi 0, %s459
      %s461 = sphi 0, %s459
      %s462 = sphi 0, %s461
      %s476 = sphi 0, %s462
      %s480 = sphi 0, %s480
      %s482 = sphi 0, %s480
      %s483 = sphi 0, %s482
      %s497 = sphi 0, %s483
      %s505 = sphi 0, %s507
      %s508 = sphi 0, %s505
      %s509 = sphi 0, %s508
      %s525 = sphi 0, %s509
    $region4: #{tpu_custom_call.1} parent=1 // loop_header_branch
      %33 = sbr.rel (%p31) target = $region8
    $region5: #{tpu_custom_call.1} parent=1 // loop_body
      %s35 = ssub.s32 %s30, 1
      %s36 = ssub.s32 %s30, 2
      %s43 = sadd.s32 1, %s38
      %p44 = scmp.ge.s32.totalorder %s43, 1
      %s45 = scalar_select %p44, 0, %s43
      %s46 = sadd.s32 1, %s37
      %s47 = scalar_select %p44, %s46, %s37
      %p48 = scmp.ge.s32.totalorder %s47, 2
      %s49 = scalar_select %p48, 0, %s47
      %s50 = ssub.s32 %s37, %s49
      %p51 = scmp.eq.s32.totalorder %s50, 0
      %s53 = sadd.s32 %s52, 1
      %s54 = scalar_select %p51, %s52, %s53
      %p57 = pneg %p51
      %p58 = scmp.eq.s32.totalorder %s30, 1
      %p59 = por %p57, %p58
      %p60 = scmp.ne.s32.totalorder %s52, %s55
      %p61 = scmp.eq.s32.totalorder %s30, 0
      %p62 = por %p60, %p61
      %p63 = scmp.ne.s32.totalorder %s52, %s55
      %p64 = scmp.eq.s32.totalorder %s35, 1
      %p65 = por %p63, %p64
      %p66 = scmp.ne.s32.totalorder %s55, %s56
      %p67 = scmp.eq.s32.totalorder %s35, 0
      %p68 = por %p66, %p67
      %p69 = scmp.ne.s32.totalorder %s55, %s56
      %p70 = scmp.eq.s32.totalorder %s36, 1
      %p71 = por %p69, %p70
      %p73 = scmp.ne.s32.totalorder %s56, %s72
      %p74 = scmp.eq.s32.totalorder %s36, 0
      %p75 = por %p73, %p74
      %s76 = ssub.s32 %s37, %s49
      %p77 = scmp.eq.s32.totalorder %s76, 0
      %s79 = sadd.s32 %s78, 1
      %s80 = scalar_select %p77, %s78, %s79
      %p83 = pneg %p77
      %p84 = scmp.eq.s32.totalorder %s30, 1
      %p85 = por %p83, %p84
      %p86 = scmp.ne.s32.totalorder %s78, %s81
      %p87 = scmp.eq.s32.totalorder %s30, 0
      %p88 = por %p86, %p87
      %p89 = scmp.ne.s32.totalorder %s78, %s81
      %p90 = scmp.eq.s32.totalorder %s35, 1
      %p91 = por %p89, %p90
      %p92 = scmp.ne.s32.totalorder %s81, %s82
      %p93 = scmp.eq.s32.totalorder %s35, 0
      %p94 = por %p92, %p93
      %p95 = scmp.ne.s32.totalorder %s81, %s82
      %p96 = scmp.eq.s32.totalorder %s36, 1
      %p97 = por %p95, %p96
      %p99 = scmp.ne.s32.totalorder %s82, %s98
      %p100 = scmp.eq.s32.totalorder %s36, 0
      %p101 = por %p99, %p100
      %s103 = sadd.s32 %s102, 1
      %p106 = scmp.eq.s32.totalorder %s30, 1
      %p107 = scmp.ne.s32.totalorder %s102, %s104
      %p108 = scmp.eq.s32.totalorder %s30, 0
      %p109 = por %p107, %p108
      %p110 = scmp.ne.s32.totalorder %s102, %s104
      %p111 = scmp.eq.s32.totalorder %s35, 1
      %p112 = por %p110, %p111
      %p113 = scmp.ne.s32.totalorder %s104, %s105
      %p114 = scmp.eq.s32.totalorder %s35, 0
      %p115 = por %p113, %p114
      %p116 = scmp.ne.s32.totalorder %s104, %s105
      %p117 = scmp.eq.s32.totalorder %s36, 1
      %p118 = por %p116, %p117
      %p120 = scmp.ne.s32.totalorder %s105, %s119
      %p121 = scmp.eq.s32.totalorder %s36, 0
      %p122 = por %p120, %p121
      %s124 = sadd.s32 %s123, 1
      %p127 = scmp.eq.s32.totalorder %s30, 1
      %p128 = scmp.ne.s32.totalorder %s123, %s125
      %p129 = scmp.eq.s32.totalorder %s30, 0
      %p130 = por %p128, %p129
      %p131 = scmp.ne.s32.totalorder %s123, %s125
      %p132 = scmp.eq.s32.totalorder %s35, 1
      %p133 = por %p131, %p132
      %p134 = scmp.ne.s32.totalorder %s125, %s126
      %p135 = scmp.eq.s32.totalorder %s35, 0
      %p136 = por %p134, %p135
      %p137 = scmp.ne.s32.totalorder %s125, %s126
      %p138 = scmp.eq.s32.totalorder %s36, 1
      %p139 = por %p137, %p138
      %p141 = scmp.ne.s32.totalorder %s126, %s140
      %p142 = scmp.eq.s32.totalorder %s36, 0
      %p143 = por %p141, %p142
      %s145 = sadd.s32 %s144, 1
      %p148 = scmp.eq.s32.totalorder %s30, 1
      %p149 = scmp.ne.s32.totalorder %s144, %s146
      %p150 = scmp.eq.s32.totalorder %s30, 0
      %p151 = por %p149, %p150
      %p152 = scmp.ne.s32.totalorder %s144, %s146
      %p153 = scmp.eq.s32.totalorder %s35, 1
      %p154 = por %p152, %p153
      %p155 = scmp.ne.s32.totalorder %s146, %s147
      %p156 = scmp.eq.s32.totalorder %s35, 0
      %p157 = por %p155, %p156
      %p158 = scmp.ne.s32.totalorder %s146, %s147
      %p159 = scmp.eq.s32.totalorder %s36, 1
      %p160 = por %p158, %p159
      %p162 = scmp.ne.s32.totalorder %s147, %s161
      %p163 = scmp.eq.s32.totalorder %s36, 0
      %p164 = por %p162, %p163
      %s166 = sadd.s32 %s165, 1
      %p169 = scmp.eq.s32.totalorder %s30, 1
      %p170 = scmp.ne.s32.totalorder %s165, %s167
      %p171 = scmp.eq.s32.totalorder %s30, 0
      %p172 = por %p170, %p171
      %p173 = scmp.ne.s32.totalorder %s165, %s167
      %p174 = scmp.eq.s32.totalorder %s35, 1
      %p175 = por %p173, %p174
      %p176 = scmp.ne.s32.totalorder %s167, %s168
      %p177 = scmp.eq.s32.totalorder %s35, 0
      %p178 = por %p176, %p177
      %p179 = scmp.ne.s32.totalorder %s167, %s168
      %p180 = scmp.eq.s32.totalorder %s36, 1
      %p181 = por %p179, %p180
      %p183 = scmp.ne.s32.totalorder %s168, %s182
      %p184 = scmp.eq.s32.totalorder %s36, 0
      %p185 = por %p183, %p184
      %s187 = sadd.s32 %s186, 1
      %p190 = scmp.eq.s32.totalorder %s30, 1
      %p191 = scmp.ne.s32.totalorder %s186, %s188
      %p192 = scmp.eq.s32.totalorder %s30, 0
      %p193 = por %p191, %p192
      %p194 = scmp.ne.s32.totalorder %s186, %s188
      %p195 = scmp.eq.s32.totalorder %s35, 1
      %p196 = por %p194, %p195
      %p197 = scmp.ne.s32.totalorder %s188, %s189
      %p198 = scmp.eq.s32.totalorder %s35, 0
      %p199 = por %p197, %p198
      %p200 = scmp.ne.s32.totalorder %s188, %s189
      %p201 = scmp.eq.s32.totalorder %s36, 1
      %p202 = por %p200, %p201
      %p204 = scmp.ne.s32.totalorder %s189, %s203
      %p205 = scmp.eq.s32.totalorder %s36, 0
      %p206 = por %p204, %p205
      %s208 = sadd.s32 %s207, 1
      %p211 = scmp.eq.s32.totalorder %s30, 1
      %p212 = scmp.ne.s32.totalorder %s207, %s209
      %p213 = scmp.eq.s32.totalorder %s30, 0
      %p214 = por %p212, %p213
      %p215 = scmp.ne.s32.totalorder %s207, %s209
      %p216 = scmp.eq.s32.totalorder %s35, 1
      %p217 = por %p215, %p216
      %p218 = scmp.ne.s32.totalorder %s209, %s210
      %p219 = scmp.eq.s32.totalorder %s35, 0
      %p220 = por %p218, %p219
      %p221 = scmp.ne.s32.totalorder %s209, %s210
      %p222 = scmp.eq.s32.totalorder %s36, 1
      %p223 = por %p221, %p222
      %p225 = scmp.ne.s32.totalorder %s210, %s224
      %p226 = scmp.eq.s32.totalorder %s36, 0
      %p227 = por %p225, %p226
      %s229 = sadd.s32 %s228, 1
      %p232 = scmp.eq.s32.totalorder %s30, 1
      %p233 = scmp.ne.s32.totalorder %s228, %s230
      %p234 = scmp.eq.s32.totalorder %s30, 0
      %p235 = por %p233, %p234
      %p236 = scmp.ne.s32.totalorder %s228, %s230
      %p237 = scmp.eq.s32.totalorder %s35, 1
      %p238 = por %p236, %p237
      %p239 = scmp.ne.s32.totalorder %s230, %s231
      %p240 = scmp.eq.s32.totalorder %s35, 0
      %p241 = por %p239, %p240
      %p242 = scmp.ne.s32.totalorder %s230, %s231
      %p243 = scmp.eq.s32.totalorder %s36, 1
      %p244 = por %p242, %p243
      %p246 = scmp.ne.s32.totalorder %s231, %s245
      %p247 = scmp.eq.s32.totalorder %s36, 0
      %p248 = por %p246, %p247
      %s250 = sadd.s32 %s249, 1
      %p253 = scmp.eq.s32.totalorder %s30, 1
      %p254 = scmp.ne.s32.totalorder %s249, %s251
      %p255 = scmp.eq.s32.totalorder %s30, 0
      %p256 = por %p254, %p255
      %p257 = scmp.ne.s32.totalorder %s249, %s251
      %p258 = scmp.eq.s32.totalorder %s35, 1
      %p259 = por %p257, %p258
      %p260 = scmp.ne.s32.totalorder %s251, %s252
      %p261 = scmp.eq.s32.totalorder %s35, 0
      %p262 = por %p260, %p261
      %p263 = scmp.ne.s32.totalorder %s251, %s252
      %p264 = scmp.eq.s32.totalorder %s36, 1
      %p265 = por %p263, %p264
      %p267 = scmp.ne.s32.totalorder %s252, %s266
      %p268 = scmp.eq.s32.totalorder %s36, 0
      %p269 = por %p267, %p268
      %s271 = sadd.s32 %s270, 1
      %p274 = scmp.eq.s32.totalorder %s30, 1
      %p275 = scmp.ne.s32.totalorder %s270, %s272
      %p276 = scmp.eq.s32.totalorder %s30, 0
      %p277 = por %p275, %p276
      %p278 = scmp.ne.s32.totalorder %s270, %s272
      %p279 = scmp.eq.s32.totalorder %s35, 1
      %p280 = por %p278, %p279
      %p281 = scmp.ne.s32.totalorder %s272, %s273
      %p282 = scmp.eq.s32.totalorder %s35, 0
      %p283 = por %p281, %p282
      %p284 = scmp.ne.s32.totalorder %s272, %s273
      %p285 = scmp.eq.s32.totalorder %s36, 1
      %p286 = por %p284, %p285
      %p288 = scmp.ne.s32.totalorder %s273, %s287
      %p289 = scmp.eq.s32.totalorder %s36, 0
      %p290 = por %p288, %p289
      %s292 = sadd.s32 %s291, 1
      %p295 = scmp.eq.s32.totalorder %s30, 1
      %p296 = scmp.ne.s32.totalorder %s291, %s293
      %p297 = scmp.eq.s32.totalorder %s30, 0
      %p298 = por %p296, %p297
      %p299 = scmp.ne.s32.totalorder %s291, %s293
      %p300 = scmp.eq.s32.totalorder %s35, 1
      %p301 = por %p299, %p300
      %p302 = scmp.ne.s32.totalorder %s293, %s294
      %p303 = scmp.eq.s32.totalorder %s35, 0
      %p304 = por %p302, %p303
      %p305 = scmp.ne.s32.totalorder %s293, %s294
      %p306 = scmp.eq.s32.totalorder %s36, 1
      %p307 = por %p305, %p306
      %p309 = scmp.ne.s32.totalorder %s294, %s308
      %p310 = scmp.eq.s32.totalorder %s36, 0
      %p311 = por %p309, %p310
      %s313 = sadd.s32 %s312, 1
      %p316 = scmp.eq.s32.totalorder %s30, 1
      %p317 = scmp.ne.s32.totalorder %s312, %s314
      %p318 = scmp.eq.s32.totalorder %s30, 0
      %p319 = por %p317, %p318
      %p320 = scmp.ne.s32.totalorder %s312, %s314
      %p321 = scmp.eq.s32.totalorder %s35, 1
      %p322 = por %p320, %p321
      %p323 = scmp.ne.s32.totalorder %s314, %s315
      %p324 = scmp.eq.s32.totalorder %s35, 0
      %p325 = por %p323, %p324
      %p326 = scmp.ne.s32.totalorder %s314, %s315
      %p327 = scmp.eq.s32.totalorder %s36, 1
      %p328 = por %p326, %p327
      %p330 = scmp.ne.s32.totalorder %s315, %s329
      %p331 = scmp.eq.s32.totalorder %s36, 0
      %p332 = por %p330, %p331
      %s334 = sadd.s32 %s333, 1
      %p337 = scmp.eq.s32.totalorder %s30, 1
      %p338 = scmp.ne.s32.totalorder %s333, %s335
      %p339 = scmp.eq.s32.totalorder %s30, 0
      %p340 = por %p338, %p339
      %p341 = scmp.ne.s32.totalorder %s333, %s335
      %p342 = scmp.eq.s32.totalorder %s35, 1
      %p343 = por %p341, %p342
      %p344 = scmp.ne.s32.totalorder %s335, %s336
      %p345 = scmp.eq.s32.totalorder %s35, 0
      %p346 = por %p344, %p345
      %p347 = scmp.ne.s32.totalorder %s335, %s336
      %p348 = scmp.eq.s32.totalorder %s36, 1
      %p349 = por %p347, %p348
      %p351 = scmp.ne.s32.totalorder %s336, %s350
      %p352 = scmp.eq.s32.totalorder %s36, 0
      %p353 = por %p351, %p352
      %s355 = sadd.s32 %s354, 1
      %p358 = scmp.eq.s32.totalorder %s30, 1
      %p359 = scmp.ne.s32.totalorder %s354, %s356
      %p360 = scmp.eq.s32.totalorder %s30, 0
      %p361 = por %p359, %p360
      %p362 = scmp.ne.s32.totalorder %s354, %s356
      %p363 = scmp.eq.s32.totalorder %s35, 1
      %p364 = por %p362, %p363
      %p365 = scmp.ne.s32.totalorder %s356, %s357
      %p366 = scmp.eq.s32.totalorder %s35, 0
      %p367 = por %p365, %p366
      %p368 = scmp.ne.s32.totalorder %s356, %s357
      %p369 = scmp.eq.s32.totalorder %s36, 1
      %p370 = por %p368, %p369
      %p372 = scmp.ne.s32.totalorder %s357, %s371
      %p373 = scmp.eq.s32.totalorder %s36, 0
      %p374 = por %p372, %p373
      %s376 = sadd.s32 %s375, 1
      %p379 = scmp.eq.s32.totalorder %s30, 1
      %p380 = scmp.ne.s32.totalorder %s375, %s377
      %p381 = scmp.eq.s32.totalorder %s30, 0
      %p382 = por %p380, %p381
      %p383 = scmp.ne.s32.totalorder %s375, %s377
      %p384 = scmp.eq.s32.totalorder %s35, 1
      %p385 = por %p383, %p384
      %p386 = scmp.ne.s32.totalorder %s377, %s378
      %p387 = scmp.eq.s32.totalorder %s35, 0
      %p388 = por %p386, %p387
      %p389 = scmp.ne.s32.totalorder %s377, %s378
      %p390 = scmp.eq.s32.totalorder %s36, 1
      %p391 = por %p389, %p390
      %p393 = scmp.ne.s32.totalorder %s378, %s392
      %p394 = scmp.eq.s32.totalorder %s36, 0
      %p395 = por %p393, %p394
      %s397 = sadd.s32 %s396, 1
      %p400 = scmp.eq.s32.totalorder %s30, 1
      %p401 = scmp.ne.s32.totalorder %s396, %s398
      %p402 = scmp.eq.s32.totalorder %s30, 0
      %p403 = por %p401, %p402
      %p404 = scmp.ne.s32.totalorder %s396, %s398
      %p405 = scmp.eq.s32.totalorder %s35, 1
      %p406 = por %p404, %p405
      %p407 = scmp.ne.s32.totalorder %s398, %s399
      %p408 = scmp.eq.s32.totalorder %s35, 0
      %p409 = por %p407, %p408
      %p410 = scmp.ne.s32.totalorder %s398, %s399
      %p411 = scmp.eq.s32.totalorder %s36, 1
      %p412 = por %p410, %p411
      %p414 = scmp.ne.s32.totalorder %s399, %s413
      %p415 = scmp.eq.s32.totalorder %s36, 0
      %p416 = por %p414, %p415
      %s418 = sadd.s32 %s417, 1
      %p421 = scmp.eq.s32.totalorder %s30, 1
      %p422 = scmp.ne.s32.totalorder %s417, %s419
      %p423 = scmp.eq.s32.totalorder %s30, 0
      %p424 = por %p422, %p423
      %p425 = scmp.ne.s32.totalorder %s417, %s419
      %p426 = scmp.eq.s32.totalorder %s35, 1
      %p427 = por %p425, %p426
      %p428 = scmp.ne.s32.totalorder %s419, %s420
      %p429 = scmp.eq.s32.totalorder %s35, 0
      %p430 = por %p428, %p429
      %p431 = scmp.ne.s32.totalorder %s419, %s420
      %p432 = scmp.eq.s32.totalorder %s36, 1
      %p433 = por %p431, %p432
      %p435 = scmp.ne.s32.totalorder %s420, %s434
      %p436 = scmp.eq.s32.totalorder %s36, 0
      %p437 = por %p435, %p436
      %s439 = sadd.s32 %s438, 1
      %p442 = scmp.eq.s32.totalorder %s30, 1
      %p443 = scmp.ne.s32.totalorder %s438, %s440
      %p444 = scmp.eq.s32.totalorder %s30, 0
      %p445 = por %p443, %p444
      %p446 = scmp.ne.s32.totalorder %s438, %s440
      %p447 = scmp.eq.s32.totalorder %s35, 1
      %p448 = por %p446, %p447
      %p449 = scmp.ne.s32.totalorder %s440, %s441
      %p450 = scmp.eq.s32.totalorder %s35, 0
      %p451 = por %p449, %p450
      %p452 = scmp.ne.s32.totalorder %s440, %s441
      %p453 = scmp.eq.s32.totalorder %s36, 1
      %p454 = por %p452, %p453
      %p456 = scmp.ne.s32.totalorder %s441, %s455
      %p457 = scmp.eq.s32.totalorder %s36, 0
      %p458 = por %p456, %p457
      %s460 = sadd.s32 %s459, 1
      %p463 = scmp.eq.s32.totalorder %s30, 1
      %p464 = scmp.ne.s32.totalorder %s459, %s461
      %p465 = scmp.eq.s32.totalorder %s30, 0
      %p466 = por %p464, %p465
      %p467 = scmp.ne.s32.totalorder %s459, %s461
      %p468 = scmp.eq.s32.totalorder %s35, 1
      %p469 = por %p467, %p468
      %p470 = scmp.ne.s32.totalorder %s461, %s462
      %p471 = scmp.eq.s32.totalorder %s35, 0
      %p472 = por %p470, %p471
      %p473 = scmp.ne.s32.totalorder %s461, %s462
      %p474 = scmp.eq.s32.totalorder %s36, 1
      %p475 = por %p473, %p474
      %p477 = scmp.ne.s32.totalorder %s462, %s476
      %p478 = scmp.eq.s32.totalorder %s36, 0
      %p479 = por %p477, %p478
      %s481 = sadd.s32 %s480, 1
      %p484 = scmp.eq.s32.totalorder %s30, 1
      %p485 = scmp.ne.s32.totalorder %s480, %s482
      %p486 = scmp.eq.s32.totalorder %s30, 0
      %p487 = por %p485, %p486
      %p488 = scmp.ne.s32.totalorder %s480, %s482
      %p489 = scmp.eq.s32.totalorder %s35, 1
      %p490 = por %p488, %p489
      %p491 = scmp.ne.s32.totalorder %s482, %s483
      %p492 = scmp.eq.s32.totalorder %s35, 0
      %p493 = por %p491, %p492
      %p494 = scmp.ne.s32.totalorder %s482, %s483
      %p495 = scmp.eq.s32.totalorder %s36, 1
      %p496 = por %p494, %p495
      %p498 = scmp.ne.s32.totalorder %s483, %s497
      %p499 = scmp.eq.s32.totalorder %s36, 0
      %p500 = por %p498, %p499
      %s501 = ssub.s32 %s37, %s49
      %s502 = ssub.s32 %s38, %s45
      %s503 = sor.u32 %s501, %s502
      %p504 = scmp.eq.s32.totalorder %s503, 0
      %s506 = sadd.s32 %s505, 1
      %s507 = scalar_select %p504, %s505, %s506
      %p510 = pneg %p504
      %p511 = scmp.eq.s32.totalorder %s30, 1
      %p512 = por %p510, %p511
      %p513 = scmp.ne.s32.totalorder %s505, %s508
      %p514 = scmp.eq.s32.totalorder %s30, 0
      %p515 = por %p513, %p514
      %p516 = scmp.ne.s32.totalorder %s505, %s508
      %p517 = scmp.eq.s32.totalorder %s35, 1
      %p518 = por %p516, %p517
      %p519 = scmp.ne.s32.totalorder %s508, %s509
      %p520 = scmp.eq.s32.totalorder %s35, 0
      %p521 = por %p519, %p520
      %p522 = scmp.ne.s32.totalorder %s508, %s509
      %p523 = scmp.eq.s32.totalorder %s36, 1
      %p524 = por %p522, %p523
      %p526 = scmp.ne.s32.totalorder %s509, %s525
      %p527 = scmp.eq.s32.totalorder %s36, 0
      %p528 = por %p526, %p527
      %p529 = scmp.le.s32.totalorder 1, %s30
      %p530 = scmp.lt.s32.totalorder %s30, 3
      %p531 = pnand %p529, %p530
      %p532 = pneg %p531
      // Predicated region
      $region9: #{tpu_custom_call.1} parent=5 // pred_check
        _
      $region10: #{tpu_custom_call.1} parent=5 // pred_check_branch
        %534 = sbr.rel (%p531) target = $region12
      $region11: #{tpu_custom_call.1} parent=5 // pred_region
        %s535 = ssub.s32 %s30, 1
        // Predicated region
        $region13: #{tpu_custom_call.1} parent=11 // pred_check
          %p536 = pneg %p115
        $region14: #{tpu_custom_call.1} parent=11 // pred_check_branch
          %538 = sbr.rel (%p536) target = $region16
        $region15: #{tpu_custom_call.1} parent=11 // pred_region
          _
        $region16: #{tpu_custom_call.1} parent=11 // pred_fallthru
          _
        // Predicated region
        $region17: #{tpu_custom_call.1} parent=11 // pred_check
          %p539 = pneg %p136
        $region18: #{tpu_custom_call.1} parent=11 // pred_check_branch
          %541 = sbr.rel (%p539) target = $region20
        $region19: #{tpu_custom_call.1} parent=11 // pred_region
          _
        $region20: #{tpu_custom_call.1} parent=11 // pred_fallthru
          _
        // Predicated region
        $region21: #{tpu_custom_call.1} parent=11 // pred_check
          %p542 = pneg %p157
        $region22: #{tpu_custom_call.1} parent=11 // pred_check_branch
          %544 = sbr.rel (%p542) target = $region24
        $region23: #{tpu_custom_call.1} parent=11 // pred_region
          _
        $region24: #{tpu_custom_call.1} parent=11 // pred_fallthru
          _
        // Predicated region
        $region25: #{tpu_custom_call.1} parent=11 // pred_check
          %p545 = pneg %p178
        $region26: #{tpu_custom_call.1} parent=11 // pred_check_branch
          %547 = sbr.rel (%p545) target = $region28
        $region27: #{tpu_custom_call.1} parent=11 // pred_region
          _
        $region28: #{tpu_custom_call.1} parent=11 // pred_fallthru
          _
        // Predicated region
        $region29: #{tpu_custom_call.1} parent=11 // pred_check
          %p548 = pneg %p199
        $region30: #{tpu_custom_call.1} parent=11 // pred_check_branch
          %550 = sbr.rel (%p548) target = $region32
        $region31: #{tpu_custom_call.1} parent=11 // pred_region
          _
        $region32: #{tpu_custom_call.1} parent=11 // pred_fallthru
          _
        // Predicated region
        $region33: #{tpu_custom_call.1} parent=11 // pred_check
          %p551 = pneg %p220
        $region34: #{tpu_custom_call.1} parent=11 // pred_check_branch
          %553 = sbr.rel (%p551) target = $region36
        $region35: #{tpu_custom_call.1} parent=11 // pred_region
          _
        $region36: #{tpu_custom_call.1} parent=11 // pred_fallthru
          _
        // Predicated region
        $region37: #{tpu_custom_call.1} parent=11 // pred_check
          %p554 = pneg %p241
        $region38: #{tpu_custom_call.1} parent=11 // pred_check_branch
          %556 = sbr.rel (%p554) target = $region40
        $region39: #{tpu_custom_call.1} parent=11 // pred_region
          _
        $region40: #{tpu_custom_call.1} parent=11 // pred_fallthru
          _
        // Predicated region
        $region41: #{tpu_custom_call.1} parent=11 // pred_check
          %p557 = pneg %p262
        $region42: #{tpu_custom_call.1} parent=11 // pred_check_branch
          %559 = sbr.rel (%p557) target = $region44
        $region43: #{tpu_custom_call.1} parent=11 // pred_region
          _
        $region44: #{tpu_custom_call.1} parent=11 // pred_fallthru
          _
        // Predicated region
        $region45: #{tpu_custom_call.1} parent=11 // pred_check
          %p560 = pneg %p283
        $region46: #{tpu_custom_call.1} parent=11 // pred_check_branch
          %562 = sbr.rel (%p560) target = $region48
        $region47: #{tpu_custom_call.1} parent=11 // pred_region
          _
        $region48: #{tpu_custom_call.1} parent=11 // pred_fallthru
          _
        // Predicated region
        $region49: #{tpu_custom_call.1} parent=11 // pred_check
          %p563 = pneg %p304
        $region50: #{tpu_custom_call.1} parent=11 // pred_check_branch
          %565 = sbr.rel (%p563) target = $region52
        $region51: #{tpu_custom_call.1} parent=11 // pred_region
          _
        $region52: #{tpu_custom_call.1} parent=11 // pred_fallthru
          _
        // Predicated region
        $region53: #{tpu_custom_call.1} parent=11 // pred_check
          %p566 = pneg %p325
        $region54: #{tpu_custom_call.1} parent=11 // pred_check_branch
          %568 = sbr.rel (%p566) target = $region56
        $region55: #{tpu_custom_call.1} parent=11 // pred_region
          _
        $region56: #{tpu_custom_call.1} parent=11 // pred_fallthru
          _
        // Predicated region
        $region57: #{tpu_custom_call.1} parent=11 // pred_check
          %p569 = pneg %p346
        $region58: #{tpu_custom_call.1} parent=11 // pred_check_branch
          %571 = sbr.rel (%p569) target = $region60
        $region59: #{tpu_custom_call.1} parent=11 // pred_region
          _
        $region60: #{tpu_custom_call.1} parent=11 // pred_fallthru
          _
        // Predicated region
        $region61: #{tpu_custom_call.1} parent=11 // pred_check
          %p572 = pneg %p367
        $region62: #{tpu_custom_call.1} parent=11 // pred_check_branch
          %574 = sbr.rel (%p572) target = $region64
        $region63: #{tpu_custom_call.1} parent=11 // pred_region
          _
        $region64: #{tpu_custom_call.1} parent=11 // pred_fallthru
          _
        // Predicated region
        $region65: #{tpu_custom_call.1} parent=11 // pred_check
          %p575 = pneg %p388
        $region66: #{tpu_custom_call.1} parent=11 // pred_check_branch
          %577 = sbr.rel (%p575) target = $region68
        $region67: #{tpu_custom_call.1} parent=11 // pred_region
          _
        $region68: #{tpu_custom_call.1} parent=11 // pred_fallthru
          _
        // Predicated region
        $region69: #{tpu_custom_call.1} parent=11 // pred_check
          %p578 = pneg %p409
        $region70: #{tpu_custom_call.1} parent=11 // pred_check_branch
          %580 = sbr.rel (%p578) target = $region72
        $region71: #{tpu_custom_call.1} parent=11 // pred_region
          _
        $region72: #{tpu_custom_call.1} parent=11 // pred_fallthru
          _
        // Predicated region
        $region73: #{tpu_custom_call.1} parent=11 // pred_check
          %p581 = pneg %p430
        $region74: #{tpu_custom_call.1} parent=11 // pred_check_branch
          %583 = sbr.rel (%p581) target = $region76
        $region75: #{tpu_custom_call.1} parent=11 // pred_region
          _
        $region76: #{tpu_custom_call.1} parent=11 // pred_fallthru
          _
        // Predicated region
        $region77: #{tpu_custom_call.1} parent=11 // pred_check
          %p584 = pneg %p451
        $region78: #{tpu_custom_call.1} parent=11 // pred_check_branch
          %586 = sbr.rel (%p584) target = $region80
        $region79: #{tpu_custom_call.1} parent=11 // pred_region
          _
        $region80: #{tpu_custom_call.1} parent=11 // pred_fallthru
          _
        // Predicated region
        $region81: #{tpu_custom_call.1} parent=11 // pred_check
          %p587 = pneg %p472
        $region82: #{tpu_custom_call.1} parent=11 // pred_check_branch
          %589 = sbr.rel (%p587) target = $region84
        $region83: #{tpu_custom_call.1} parent=11 // pred_region
          _
        $region84: #{tpu_custom_call.1} parent=11 // pred_fallthru
          _
        // Predicated region
        $region85: #{tpu_custom_call.1} parent=11 // pred_check
          %p590 = pneg %p493
        $region86: #{tpu_custom_call.1} parent=11 // pred_check_branch
          %592 = sbr.rel (%p590) target = $region88
        $region87: #{tpu_custom_call.1} parent=11 // pred_region
          _
        $region88: #{tpu_custom_call.1} parent=11 // pred_fallthru
          _
      $region12: #{tpu_custom_call.1} parent=5 // pred_fallthru
        _
      %p593 = scmp.lt.s32.totalorder %s30, 2
      // Predicated region
      $region89: #{tpu_custom_call.1} parent=5 // pred_check
        %p594 = pneg %p593
      $region90: #{tpu_custom_call.1} parent=5 // pred_check_branch
        %596 = sbr.rel (%p594) target = $region92
      $region91: #{tpu_custom_call.1} parent=5 // pred_region
        // Predicated region
        $region93: #{tpu_custom_call.1} parent=91 // pred_check
          %p597 = pneg %p62
        $region94: #{tpu_custom_call.1} parent=91 // pred_check_branch
          %599 = sbr.rel (%p597) target = $region96
        $region95: #{tpu_custom_call.1} parent=91 // pred_region
          %p600 = scmp.lt.s32.totalorder %s37, 1
          %s601 = scalar_select %p600, %s37, 1
          %s602 = smul.addr %s601, 4
          %s603 = scalar_lea.vmem %s0, %s602
        $region96: #{tpu_custom_call.1} parent=91 // pred_fallthru
          _
        // Predicated region
        $region97: #{tpu_custom_call.1} parent=91 // pred_check
          %p604 = pneg %p88
        $region98: #{tpu_custom_call.1} parent=91 // pred_check_branch
          %606 = sbr.rel (%p604) target = $region100
        $region99: #{tpu_custom_call.1} parent=91 // pred_region
          %p607 = scmp.lt.s32.totalorder %s37, 1
          %s608 = scalar_select %p607, %s37, 1
          %s609 = smul.addr %s608, 4
          %s610 = scalar_lea.vmem %s1, %s609
        $region100: #{tpu_custom_call.1} parent=91 // pred_fallthru
          _
      $region92: #{tpu_custom_call.1} parent=5 // pred_fallthru
        _
      %p611 = scmp.le.s32.totalorder 1, %s30
      %p612 = scmp.lt.s32.totalorder %s30, 3
      %p613 = pnand %p611, %p612
      %p614 = pneg %p613
      // Predicated region
      $region101: #{tpu_custom_call.1} parent=5 // pred_check
        _
      $region102: #{tpu_custom_call.1} parent=5 // pred_check_branch
        %616 = sbr.rel (%p613) target = $region104
      $region103: #{tpu_custom_call.1} parent=5 // pred_region
        %s617 = ssub.s32 %s30, 1
        %p618 = scmp.lt.s32.totalorder %s39, 1
        %s619 = scalar_select %p618, %s39, 1
        %s620 = smul.addr %s619, 4
        %s621 = scalar_lea.vmem %s0, %s620
        %p622 = pneg %p68
        %p623 = pneg %p65
        %p624 = scmp.lt.s32.totalorder %s39, 1
        %s625 = scalar_select %p624, %s39, 1
        %s626 = smul.addr %s625, 4
        %s627 = scalar_lea.vmem %s1, %s626
        %p628 = pneg %p94
        %p629 = pneg %p91
        %p630 = pneg %p115
        %p631 = pneg %p112
        %p632 = pneg %p136
        %p633 = pneg %p133
        %p634 = pneg %p157
        %p635 = pneg %p154
        %p636 = pneg %p178
        %p637 = pneg %p175
        %p638 = pneg %p199
        %p639 = pneg %p196
        %p640 = pneg %p220
        %p641 = pneg %p217
        %p642 = pneg %p241
        %p643 = pneg %p238
        %p644 = pneg %p262
        %p645 = pneg %p259
        %p646 = pneg %p283
        %p647 = pneg %p280
        %p648 = pneg %p304
        %p649 = pneg %p301
        %p650 = pneg %p325
        %p651 = pneg %p322
        %p652 = pneg %p346
        %p653 = pneg %p343
        %p654 = pneg %p367
        %p655 = pneg %p364
        %p656 = pneg %p388
        %p657 = pneg %p385
        %p658 = pneg %p409
        %p659 = pneg %p406
        %p660 = pneg %p430
        %p661 = pneg %p427
        %p662 = pneg %p451
        %p663 = pneg %p448
        %p664 = pneg %p472
        %p665 = pneg %p469
        %p666 = pneg %p493
        %p667 = pneg %p490
        %p668 = pneg %p521
        %p669 = pneg %p518
        %s670 = sand.u32 %s508, 1
        %s671 = scalar_lea.sflag [#allocation7], %s670
        %s672 = sand.u32 %s508, 1
        %s673 = smul.addr %s672, 8
        %s674 = scalar_lea.vmem [#allocation6], %s673
        %p675 = scmp.lt.s32.totalorder %s39, 1
        %s676 = scalar_select %p675, %s39, 1
        %s677 = smul.addr %s676, 4
        %s678 = scalar_lea.vmem %s0, %s677
        %p679 = scmp.lt.s32.totalorder %s39, 1
        %s680 = scalar_select %p679, %s39, 1
        %s681 = smul.addr %s680, 4
        %s682 = scalar_lea.vmem %s1, %s681
        %p684 = scmp.eq.s32.totalorder %s40, 0
        // Predicated region
        $region105: #{tpu_custom_call.1} parent=103 // pred_check
          %p685 = pneg %p684
        $region106: #{tpu_custom_call.1} parent=103 // pred_check_branch
          %687 = sbr.rel (%p685) target = $region108
        $region107: #{tpu_custom_call.1} parent=103 // pred_region
          %v688 = vld [vmem:[%s678] sm:$0xf]
          %v689 = vld [vmem:[%s682] sm:$0xf]
          %v690 = vld [vmem:[%s2] sm:$0xf]
          %v691 = vld [vmem:[%s2 + $0x4] sm:$0xf]
          %v692 = vld [vmem:[%s2 + $0x8] sm:$0xf]
          %v693 = vld [vmem:[%s2 + $0xc] sm:$0xf]
          %v694 = vld [vmem:[%s3] sm:$0xf]
          %v695 = vld [vmem:[%s3 + $0x4] sm:$0xf]
          %v696 = vld [vmem:[%s3 + $0x8] sm:$0xf]
          %v697 = vld [vmem:[%s3 + $0xc] sm:$0xf]
          %v702 = vunpack.c.l.b16 %v694
          %v703 = vunpack.c.l.b16 %v695
          %v704 = vunpack.c.l.b16 %v696
          %v705 = vunpack.c.l.b16 %v697
          %v706 = vpack.c.b16 %v703, %v702
          %v707 = vpack.c.b16 %v705, %v704
          %vm710 = vcmask 261120
          %v712 = vsel %vm710, %v689, 0
          %714 = vmatpush.bf16.msra.mxu0 0
          %715 = vmatpush.bf16.msra.mxu0 0
          %716 = vmatpush.bf16.msra.mxu0 0
          %717 = vmatpush.bf16.msra.mxu0 0
          %718 = vmatpush.bf16.msra.mxu0 0
          %719 = vmatpush.bf16.msra.mxu0 0
          %720 = vmatpush.bf16.msra.mxu0 %v707
          %721 = vmatpush.bf16.msra.mxu0 %v706
          %722 = vmatmul.bf16.gmra.mxu0 %v712
          %v723 = vpop.f32.mrf.mxu0
          %v724 = vadd.f32 0.0, %v723
          %v725 = vpop.f32.mrf.mxu0
          %726 = vdwg.mxu0
          %v731 = vunpack.c.l.b16 %v690
          %v732 = vunpack.c.l.b16 %v691
          %v733 = vunpack.c.l.b16 %v692
          %v734 = vunpack.c.l.b16 %v693
          %v735 = vpack.c.b16 %v732, %v731
          %v736 = vpack.c.b16 %v734, %v733
          %v740 = vsel %vm710, %v688, 0
          %742 = vmatpush.bf16.msra.mxu0 0
          %743 = vmatpush.bf16.msra.mxu0 0
          %744 = vmatpush.bf16.msra.mxu0 0
          %745 = vmatpush.bf16.msra.mxu0 0
          %746 = vmatpush.bf16.msra.mxu0 0
          %747 = vmatpush.bf16.msra.mxu0 0
          %748 = vmatpush.bf16.msra.mxu0 %v736
          %749 = vmatpush.bf16.msra.mxu0 %v735
          %750 = vmatmul.bf16.gmra.mxu0 %v740
          %v751 = vpop.f32.mrf.mxu0
          %v752 = vadd.f32 %v724, %v751
          %v753 = vpop.f32.mrf.mxu0
          %754 = vdwg.mxu0
          %v755 = vld [vmem:[%s4] sm:$0x1]
          %v757 = vperm.slane %v755, 0
          %v759 = vadd.f32 %v752, %v757
          %760 = vst.msk [vmem:[#allocation2] sm:$0xff] %vm710, %v759
          %v761 = vld [vmem:[%s5] sm:$0x1]
          %v762 = vld [vmem:[%s6] sm:$0x1]
          %v763 = vsel %vm710, %v759, 0.0
          %764 = vadd.xlane.f32.xlu0 %v763
          %v765 = vpop.xlane.xlu0 %764
          %v766 = vrcp.pop 32.0
          %v767 = vmul.f32 32.0, %v766
          %v768 = vsub.f32 1.0, %v767
          %v769 = vmul.f32 %v766, %v768
          %v770 = vadd.f32 %v766, %v769
          %vm771 = vweird.f32 %v766
          %v772 = vsel %vm771, %v766, %v770
          %v773 = vmul.f32 %v765, %v772
          %v774 = vsub.f32 %v759, %v773
          %v775 = vmul.f32 %v774, %v774
          %v776 = vsel %vm710, %v775, 0.0
          %777 = vadd.xlane.f32.xlu0 %v776
          %v778 = vpop.xlane.xlu0 %777
          %v779 = vmul.f32 %v778, %v772
          %v780 = vadd.f32 %v779, 1e-05
          %v781 = vrsqrt.pop %v780
          %v782 = vmul.f32 %v781, %v780
          %v783 = vmul.f32 %v782, %v781
          %v784 = vmul.f32 0.5, %v783
          %v785 = vsub.f32 1.5, %v784
          %v786 = vmul.f32 %v781, %v785
          %vm787 = vweird.f32 %v780
          %vm788 = vweird.f32 %v781
          %vm789 = vmor %vm787, %vm788
          %v790 = vsel %vm789, %v781, %v786
          %v791 = vmul.f32 %v774, %v790
          %v793 = vperm.slane %v761, 0
          %v795 = vmul.f32 %v791, %v793
          %v797 = vperm.slane %v762, 0
          %v799 = vadd.f32 %v795, %v797
          %v800 = vpack.c.bf16 %v799, %v799
          %vm801 = vcmask 257024
          %802 = vst.msk [vmem:[#allocation3] sm:$0xf] %vm801, %v800
          loop: start=0, step=1, limit=4
          $region109: #{tpu_custom_call.1} parent=107 // loop_pre_header
            _
          $region110: #{tpu_custom_call.1} parent=107 // loop_header
            %s804 = sphi 0, %s808
            %p805 = scmp.ge.s32.totalorder %s804, 4
          $region111: #{tpu_custom_call.1} parent=107 // loop_header_branch
            %807 = sbr.rel (%p805) target = $region115
          $region112: #{tpu_custom_call.1} parent=107 // loop_body
            %s809 = smul.u32 %s804, 4
            %s810 = smul.addr %s809, 4
            %s811 = scalar_lea.vmem %s9, %s810
            %v812 = vld [vmem:[%s811] sm:$0xf]
            %v813 = vld [vmem:[%s811 + $0x4] sm:$0xf]
            %v814 = vld [vmem:[%s811 + $0x8] sm:$0xf]
            %v815 = vld [vmem:[%s811 + $0xc] sm:$0xf]
            %s816 = scalar_lea.vmem %s10, %s804
            %v817 = vld [vmem:[%s816] sm:$0x1]
            %v819 = vperm.slane %v817, 0
            %v825 = vunpack.c.l.b16 %v812
            %v826 = vunpack.c.l.b16 %v813
            %v827 = vunpack.c.l.b16 %v814
            %v828 = vunpack.c.l.b16 %v815
            %v829 = vpack.c.b16 %v826, %v825
            %v830 = vpack.c.b16 %v828, %v827
            %v834 = vsel %vm710, %v800, 0
            %836 = vmatpush.bf16.msra.mxu0 0
            %837 = vmatpush.bf16.msra.mxu0 0
            %838 = vmatpush.bf16.msra.mxu0 0
            %839 = vmatpush.bf16.msra.mxu0 0
            %840 = vmatpush.bf16.msra.mxu0 0
            %841 = vmatpush.bf16.msra.mxu0 0
            %842 = vmatpush.bf16.msra.mxu0 %v830
            %843 = vmatpush.bf16.msra.mxu0 %v829
            %844 = vmatmul.bf16.gmra.mxu0 %v834
            %v845 = vpop.f32.mrf.mxu0
            %v846 = vadd.f32 %v819, %v845
            %v847 = vpop.f32.mrf.mxu0
            %848 = vdwg.mxu0
            %v849 = vpack.c.bf16 %v846, %v846
            %s850 = smul.addr %s804, 4
            %s851 = scalar_lea.vmem [#allocation4], %s850
            %vm852 = vcmask 60416
            %853 = vst.msk [vmem:[%s851] sm:$0xf] %vm852, %v849
            %s854 = smul.addr %s809, 4
            %s855 = scalar_lea.vmem %s11, %s854
            %v856 = vld [vmem:[%s855] sm:$0xf]
            %v857 = vld [vmem:[%s855 + $0x4] sm:$0xf]
            %v858 = vld [vmem:[%s855 + $0x8] sm:$0xf]
            %v859 = vld [vmem:[%s855 + $0xc] sm:$0xf]
            %s860 = scalar_lea.vmem %s12, %s804
            %v861 = vld [vmem:[%s860] sm:$0x1]
            %v863 = vperm.slane %v861, 0
            %v869 = vunpack.c.l.b16 %v856
            %v870 = vunpack.c.l.b16 %v857
            %v871 = vunpack.c.l.b16 %v858
            %v872 = vunpack.c.l.b16 %v859
            %v873 = vpack.c.b16 %v870, %v869
            %v874 = vpack.c.b16 %v872, %v871
            %877 = vmatpush.bf16.msra.mxu0 0
            %878 = vmatpush.bf16.msra.mxu0 0
            %879 = vmatpush.bf16.msra.mxu0 0
            %880 = vmatpush.bf16.msra.mxu0 0
            %881 = vmatpush.bf16.msra.mxu0 0
            %882 = vmatpush.bf16.msra.mxu0 0
            %883 = vmatpush.bf16.msra.mxu0 %v874
            %884 = vmatpush.bf16.msra.mxu0 %v873
            %885 = vmatmul.bf16.gmra.mxu0 %v834
            %v886 = vpop.f32.mrf.mxu0
            %v887 = vadd.f32 %v863, %v886
            %v888 = vpop.f32.mrf.mxu0
            %889 = vdwg.mxu0
            %v890 = vpack.c.bf16 %v887, %v887
            %s891 = smul.addr %s804, 4
            %s892 = scalar_lea.vmem [#allocation5], %s891
            %893 = vst.msk [vmem:[%s892] sm:$0xf] %vm852, %v890
          $region113: #{tpu_custom_call.1} parent=107 // loop_footer
            %s808 = sadd.s32 1, %s804
          $region114: #{tpu_custom_call.1} parent=107 // loop_footer_branch
            %803 = sbr.rel target = $region110
          $region115: #{tpu_custom_call.1} parent=107 // loop_exit
            _
        $region108: #{tpu_custom_call.1} parent=103 // pred_fallthru
          _
        %s894 = smul.u32 %s40, 8
        %s895 = scalar_lea.vmem [#allocation2], %s894
        %v896 = vld [vmem:[%s895] sm:$0xff]
        %s897 = sshra.s32 %s894, 3
        %s898 = sand.u32 %s894, 7
        %s899 = smul.addr %s897, 4
        %s900 = scalar_lea.vmem [#allocation3], %s899
        %v901 = vld [vmem:[%s900] sm:$0xf]
        loop: start=0, step=1, limit=4
        $region116: #{tpu_custom_call.1} parent=103 // loop_pre_header
          _
        $region117: #{tpu_custom_call.1} parent=103 // loop_header
          %s903 = sphi 0, %s907
          %p904 = scmp.ge.s32.totalorder %s903, 4
          %v908 = vphi 0.0, %v1045
        $region118: #{tpu_custom_call.1} parent=103 // loop_header_branch
          %906 = sbr.rel (%p904) target = $region122
        $region119: #{tpu_custom_call.1} parent=103 // loop_body
          %s909 = smul.u32 %s903, 4
          %s910 = smul.addr %s909, 4
          %s911 = scalar_lea.vmem %s7, %s910
          %v912 = vld [vmem:[%s911] sm:$0xf]
          %v913 = vld [vmem:[%s911 + $0x4] sm:$0xf]
          %v914 = vld [vmem:[%s911 + $0x8] sm:$0xf]
          %v915 = vld [vmem:[%s911 + $0xc] sm:$0xf]
          %s916 = scalar_lea.vmem %s8, %s903
          %v917 = vld [vmem:[%s916] sm:$0x1]
          %v919 = vperm.slane %v917, 0
          %v925 = vunpack.c.l.b16 %v912
          %v926 = vunpack.c.l.b16 %v913
          %v927 = vunpack.c.l.b16 %v914
          %v928 = vunpack.c.l.b16 %v915
          %v929 = vpack.c.b16 %v926, %v925
          %v930 = vpack.c.b16 %v928, %v927
          %vm933 = vcmask 261120
          %v935 = vsel %vm933, %v901, 0
          %937 = vmatpush.bf16.msra.mxu0 0
          %938 = vmatpush.bf16.msra.mxu0 0
          %939 = vmatpush.bf16.msra.mxu0 0
          %940 = vmatpush.bf16.msra.mxu0 0
          %941 = vmatpush.bf16.msra.mxu0 0
          %942 = vmatpush.bf16.msra.mxu0 0
          %943 = vmatpush.bf16.msra.mxu0 %v930
          %944 = vmatpush.bf16.msra.mxu0 %v929
          %945 = vmatmul.bf16.gmra.mxu0 %v935
          %v946 = vpop.f32.mrf.mxu0
          %v947 = vadd.f32 %v919, %v946
          %v948 = vpop.f32.mrf.mxu0
          %949 = vdwg.mxu0
          %v950 = vpack.c.bf16 %v947, %v947
          %s951 = smul.addr %s903, 4
          %s952 = scalar_lea.vmem [#allocation4], %s951
          %v953 = vld [vmem:[%s952] sm:$0xf]
          %vm954 = vcmask 64512
          %v956 = vsel %vm954, %v950, 0
          %v959 = vsel %vm954, %v953, 0
          %961 = vmatpush.bf16.xpose.msra.mxu0 0
          %962 = vmatpush.bf16.xpose.msra.mxu0 0
          %963 = vmatpush.bf16.xpose.msra.mxu0 0
          %964 = vmatpush.bf16.xpose.msra.mxu0 0
          %965 = vmatpush.bf16.xpose.msra.mxu0 0
          %966 = vmatpush.bf16.xpose.msra.mxu0 0
          %967 = vmatpush.bf16.xpose.msra.mxu0 0
          %968 = vmatpush.bf16.xpose.msra.mxu0 %v959
          %969 = vmatmul.bf16.gmra.mxu0 %v956
          %v970 = vpop.f32.mrf.mxu0
          %v971 = vadd.f32 0.0, %v970
          %v972 = vpop.f32.mrf.mxu0
          %973 = vdwg.mxu0
          %v974 = vsel %vm954, %v971, -inf
          %975 = vmax.xlane.f32.xlu0 %v974
          %v976 = vpop.xlane.xlu0 %975
          %v977 = vsub.f32 %v971, %v976
          %v978 = vmul.f32 %v977, 1.442695
          %v979 = vpow.pop %v978
          %v980 = vsel %vm954, %v979, 0.0
          %981 = vadd.xlane.f32.xlu0 %v980
          %v982 = vpop.xlane.xlu0 %981
          %v983 = vpack.c.bf16 %v979, %v979
          %s984 = smul.addr %s903, 4
          %s985 = scalar_lea.vmem [#allocation5], %s984
          %v986 = vld [vmem:[%s985] sm:$0xf]
          %v988 = vsel %vm954, %v983, 0
          %vm990 = vcmask 1043456
          %v992 = vsel %vm990, %v986, 0
          %994 = vmatpush.bf16.msra.mxu0 0
          %995 = vmatpush.bf16.msra.mxu0 0
          %996 = vmatpush.bf16.msra.mxu0 0
          %997 = vmatpush.bf16.msra.mxu0 0
          %998 = vmatpush.bf16.msra.mxu0 0
          %999 = vmatpush.bf16.msra.mxu0 0
          %1000 = vmatpush.bf16.msra.mxu0 0
          %1001 = vmatpush.bf16.msra.mxu0 %v992
          %1002 = vmatmul.bf16.gmra.mxu0 %v988
          %v1003 = vpop.f32.mrf.mxu0
          %v1004 = vadd.f32 0.0, %v1003
          %v1005 = vpop.f32.mrf.mxu0
          %1006 = vdwg.mxu0
          %v1007 = vrcp.pop %v982
          %v1008 = vmul.f32 %v982, %v1007
          %v1009 = vsub.f32 1.0, %v1008
          %v1010 = vmul.f32 %v1007, %v1009
          %v1011 = vadd.f32 %v1007, %v1010
          %vm1012 = vweird.f32 %v982
          %vm1013 = vweird.f32 %v1007
          %vm1014 = vmor %vm1012, %vm1013
          %v1015 = vsel %vm1014, %v1007, %v1011
          %v1016 = vand.u32 2147483647, %v982
          %vm1017 = vcmp.eq.f32.partialorder %v1016, 8.507059e+37
          %v1018 = vand.u32 %v982, 2147483648
          %v1019 = vor.u32 1.1754944e-38, %v1018
          %v1020 = vsel %vm1017, %v1019, %v1015
          %v1021 = vmul.f32 %v1004, %v1020
          %v1022 = vpack.c.bf16 %v1021, %v1021
          %s1023 = smul.addr %s903, 4
          %s1024 = scalar_lea.vmem %s13, %s1023
          %v1025 = vld [vmem:[%s1024] sm:$0xf]
          %v1027 = vsel %vm954, %v1022, 0
          %v1030 = vsel %vm990, %v1025, 0
          %1032 = vmatpush.bf16.msra.mxu0 0
          %1033 = vmatpush.bf16.msra.mxu0 0
          %1034 = vmatpush.bf16.msra.mxu0 0
          %1035 = vmatpush.bf16.msra.mxu0 0
          %1036 = vmatpush.bf16.msra.mxu0 0
          %1037 = vmatpush.bf16.msra.mxu0 0
          %1038 = vmatpush.bf16.msra.mxu0 0
          %1039 = vmatpush.bf16.msra.mxu0 %v1030
          %1040 = vmatmul.bf16.gmra.mxu0 %v1027
          %v1041 = vpop.f32.mrf.mxu0
          %v1042 = vadd.f32 0.0, %v1041
          %v1043 = vpop.f32.mrf.mxu0
          %1044 = vdwg.mxu0
          %v1045 = vadd.f32 %v908, %v1042
        $region120: #{tpu_custom_call.1} parent=103 // loop_footer
          %s907 = sadd.s32 1, %s903
        $region121: #{tpu_custom_call.1} parent=103 // loop_footer_branch
          %902 = sbr.rel target = $region117
        $region122: #{tpu_custom_call.1} parent=103 // loop_exit
          _
        %v1046 = vadd.f32 %v896, %v908
        %v1047 = vld [vmem:[%s14] sm:$0x1]
        %v1049 = vperm.slane %v1047, 0
        %v1051 = vadd.f32 %v1046, %v1049
        %v1052 = vld [vmem:[%s15] sm:$0x1]
        %v1053 = vld [vmem:[%s16] sm:$0x1]
        %vm1054 = vcmask 261120
        %v1055 = vsel %vm1054, %v1051, 0.0
        %1056 = vadd.xlane.f32.xlu0 %v1055
        %v1057 = vpop.xlane.xlu0 %1056
        %v1058 = vrcp.pop 32.0
        %v1059 = vmul.f32 32.0, %v1058
        %v1060 = vsub.f32 1.0, %v1059
        %v1061 = vmul.f32 %v1058, %v1060
        %v1062 = vadd.f32 %v1058, %v1061
        %vm1063 = vweird.f32 %v1058
        %v1064 = vsel %vm1063, %v1058, %v1062
        %v1065 = vmul.f32 %v1057, %v1064
        %v1066 = vsub.f32 %v1051, %v1065
        %v1067 = vmul.f32 %v1066, %v1066
        %v1068 = vsel %vm1054, %v1067, 0.0
        %1069 = vadd.xlane.f32.xlu0 %v1068
        %v1070 = vpop.xlane.xlu0 %1069
        %v1071 = vmul.f32 %v1070, %v1064
        %v1072 = vadd.f32 %v1071, 1e-05
        %v1073 = vrsqrt.pop %v1072
        %v1074 = vmul.f32 %v1073, %v1072
        %v1075 = vmul.f32 %v1074, %v1073
        %v1076 = vmul.f32 0.5, %v1075
        %v1077 = vsub.f32 1.5, %v1076
        %v1078 = vmul.f32 %v1073, %v1077
        %vm1079 = vweird.f32 %v1072
        %vm1080 = vweird.f32 %v1073
        %vm1081 = vmor %vm1079, %vm1080
        %v1082 = vsel %vm1081, %v1073, %v1078
        %v1083 = vmul.f32 %v1066, %v1082
        %v1085 = vperm.slane %v1052, 0
        %v1087 = vmul.f32 %v1083, %v1085
        %v1089 = vperm.slane %v1053, 0
        %v1091 = vadd.f32 %v1087, %v1089
        %v1092 = vpack.c.bf16 %v1091, %v1091
        %v1093 = vld [vmem:[%s17] sm:$0xf]
        %v1094 = vld [vmem:[%s17 + $0x4] sm:$0xf]
        %v1095 = vld [vmem:[%s17 + $0x8] sm:$0xf]
        %v1096 = vld [vmem:[%s17 + $0xc] sm:$0xf]
        %v1097 = vld [vmem:[%s18] sm:$0x1]
        %v1099 = vperm.slane %v1097, 0
        %v1105 = vunpack.c.l.b16 %v1093
        %v1106 = vunpack.c.l.b16 %v1094
        %v1107 = vunpack.c.l.b16 %v1095
        %v1108 = vunpack.c.l.b16 %v1096
        %v1109 = vpack.c.b16 %v1106, %v1105
        %v1110 = vpack.c.b16 %v1108, %v1107
        %v1114 = vsel %vm1054, %v1092, 0
        %1116 = vmatpush.bf16.msra.mxu0 0
        %1117 = vmatpush.bf16.msra.mxu0 0
        %1118 = vmatpush.bf16.msra.mxu0 0
        %1119 = vmatpush.bf16.msra.mxu0 0
        %1120 = vmatpush.bf16.msra.mxu0 0
        %1121 = vmatpush.bf16.msra.mxu0 0
        %1122 = vmatpush.bf16.msra.mxu0 %v1110
        %1123 = vmatpush.bf16.msra.mxu0 %v1109
        %1124 = vmatmul.bf16.gmra.mxu0 %v1114
        %v1125 = vpop.f32.mrf.mxu0
        %v1126 = vadd.f32 %v1099, %v1125
        %v1127 = vpop.f32.mrf.mxu0
        %1128 = vdwg.mxu0
        %v1129 = vmul.f32 %v1126, 0.5
        %v1130 = vmul.f32 %v1126, 0.70710677
        %v1131 = vmul.f32 %v1130, %v1130
        %v1132 = vmin.f32 16.0, %v1131
        %v1133 = vmul.f32 %v1132, 2.1237322e-06
        %v1134 = vadd.f32 %v1133, 0.00028619796
        %v1135 = vmul.f32 %v1132, %v1134
        %v1136 = vadd.f32 %v1135, 0.0036580483
        %v1137 = vmul.f32 %v1132, %v1136
        %v1138 = vadd.f32 %v1137, 0.05243302
        %v1139 = vmul.f32 %v1132, %v1138
        %v1140 = vadd.f32 %v1139, 0.18741608
        %v1141 = vmul.f32 %v1132, %v1140
        %v1142 = vadd.f32 %v1141, 1.1283791
        %v1143 = vmul.f32 %v1130, %v1142
        %v1144 = vmul.f32 %v1132, 3.8918573e-05
        %v1145 = vadd.f32 %v1144, 0.001143296
        %v1146 = vmul.f32 %v1132, %v1145
        %v1147 = vadd.f32 %v1146, 0.014752088
        %v1148 = vmul.f32 %v1132, %v1147
        %v1149 = vadd.f32 %v1148, 0.112945676
        %v1150 = vmul.f32 %v1132, %v1149
        %v1151 = vadd.f32 %v1150, 0.4994258
        %v1152 = vmul.f32 %v1132, %v1151
        %v1153 = vadd.f32 %v1152, 1.0
        %v1154 = vrcp.pop %v1153
        %v1155 = vmul.f32 %v1153, %v1154
        %v1156 = vsub.f32 1.0, %v1155
        %v1157 = vmul.f32 %v1154, %v1156
        %v1158 = vadd.f32 %v1154, %v1157
        %vm1159 = vweird.f32 %v1153
        %vm1160 = vweird.f32 %v1154
        %vm1161 = vmor %vm1159, %vm1160
        %v1162 = vsel %vm1161, %v1154, %v1158
        %v1163 = vand.u32 2147483647, %v1153
        %vm1164 = vcmp.eq.f32.partialorder %v1163, 8.507059e+37
        %v1165 = vand.u32 %v1153, 2147483648
        %v1166 = vor.u32 1.1754944e-38, %v1165
        %v1167 = vsel %vm1164, %v1166, %v1162
        %v1168 = vmul.f32 %v1143, %v1167
        %v1169 = vmin.f32 %v1168, 1.0
        %v1170 = vmax.f32 %v1169, -1.0
        %v1171 = vadd.f32 %v1170, 1.0
        %v1172 = vmul.f32 %v1129, %v1171
        %v1173 = vpack.c.bf16 %v1172, %v1172
        %v1174 = vld [vmem:[%s19] sm:$0xf]
        %v1175 = vld [vmem:[%s19 + $0x4] sm:$0xf]
        %v1176 = vld [vmem:[%s19 + $0x8] sm:$0xf]
        %v1177 = vld [vmem:[%s19 + $0xc] sm:$0xf]
        %v1178 = vld [vmem:[%s19 + $0x10] sm:$0xf]
        %v1179 = vld [vmem:[%s19 + $0x14] sm:$0xf]
        %v1180 = vld [vmem:[%s19 + $0x18] sm:$0xf]
        %v1181 = vld [vmem:[%s19 + $0x1c] sm:$0xf]
        %v1182 = vld [vmem:[%s19 + $0x20] sm:$0xf]
        %v1183 = vld [vmem:[%s19 + $0x24] sm:$0xf]
        %v1184 = vld [vmem:[%s19 + $0x28] sm:$0xf]
        %v1185 = vld [vmem:[%s19 + $0x2c] sm:$0xf]
        %v1186 = vld [vmem:[%s19 + $0x30] sm:$0xf]
        %v1187 = vld [vmem:[%s19 + $0x34] sm:$0xf]
        %v1188 = vld [vmem:[%s19 + $0x38] sm:$0xf]
        %v1189 = vld [vmem:[%s19 + $0x3c] sm:$0xf]
        %v1190 = vld [vmem:[%s20] sm:$0x1]
        %v1192 = vperm.slane %v1190, 0
        %v1210 = vunpack.c.l.b16 %v1174
        %v1211 = vunpack.c.l.b16 %v1175
        %v1212 = vunpack.c.l.b16 %v1176
        %v1213 = vunpack.c.l.b16 %v1177
        %v1214 = vunpack.c.l.b16 %v1178
        %v1215 = vunpack.c.l.b16 %v1179
        %v1216 = vunpack.c.l.b16 %v1180
        %v1217 = vunpack.c.l.b16 %v1181
        %v1218 = vunpack.c.l.b16 %v1182
        %v1219 = vunpack.c.l.b16 %v1183
        %v1220 = vunpack.c.l.b16 %v1184
        %v1221 = vunpack.c.l.b16 %v1185
        %v1222 = vunpack.c.l.b16 %v1186
        %v1223 = vunpack.c.l.b16 %v1187
        %v1224 = vunpack.c.l.b16 %v1188
        %v1225 = vunpack.c.l.b16 %v1189
        %v1226 = vpack.c.b16 %v1211, %v1210
        %v1227 = vpack.c.b16 %v1213, %v1212
        %v1228 = vpack.c.b16 %v1215, %v1214
        %v1229 = vpack.c.b16 %v1217, %v1216
        %v1230 = vpack.c.b16 %v1219, %v1218
        %v1231 = vpack.c.b16 %v1221, %v1220
        %v1232 = vpack.c.b16 %v1223, %v1222
        %v1233 = vpack.c.b16 %v1225, %v1224
        %1242 = vmatpush.bf16.msra.mxu0 %v1233
        %1243 = vmatpush.bf16.msra.mxu0 %v1232
        %1244 = vmatpush.bf16.msra.mxu0 %v1231
        %1245 = vmatpush.bf16.msra.mxu0 %v1230
        %1246 = vmatpush.bf16.msra.mxu0 %v1229
        %1247 = vmatpush.bf16.msra.mxu0 %v1228
        %1248 = vmatpush.bf16.msra.mxu0 %v1227
        %1249 = vmatpush.bf16.msra.mxu0 %v1226
        %1250 = vmatmul.bf16.gmra.mxu0 %v1173
        %v1251 = vpop.f32.mrf.mxu0
        %v1252 = vadd.f32 %v1192, %v1251
        %v1253 = vpop.f32.mrf.mxu0
        %1254 = vdwg.mxu0
        %v1255 = vadd.f32 %v1051, %v1252
        %1256 = vst.msk [vmem:[%s674] sm:$0xff] %vm1054, %v1255
        %s1257 = sand.u32 %s508, 1
        %s1258 = scalar_lea.sflag [#allocation7], %s1257
        %s1259 = sand.u32 %s508, 1
        %s1260 = smul.addr %s1259, 8
        %s1261 = scalar_lea.vmem [#allocation6], %s1260
        // Predicated region
        $region123: #{tpu_custom_call.1} parent=103 // pred_check
          %p1262 = pneg %p518
        $region124: #{tpu_custom_call.1} parent=103 // pred_check_branch
          %1264 = sbr.rel (%p1262) target = $region126
        $region125: #{tpu_custom_call.1} parent=103 // pred_region
          %1266 = vsyncadd %s1258, 0
          %s1267 = sadd.s32 %s40, %s39
          %s1268 = smul.addr %s1267, 8
          %s1269 = scalar_lea.hbm %s21, %s1268
          %s1271 = sshll.u32 %s1261, 4
          %s1272 = int_to_ptr.vmem [resolvable:$true] %s1271
          %s1273 = sshll.u32 %s1269, 4
          %s1274 = int_to_ptr.hbm [resolvable:$true] %s1273
          %1276 = dma.vmem_to_hbm [thread:$0]  %s1272, 128, %s1274, %s1258
        $region126: #{tpu_custom_call.1} parent=103 // pred_fallthru
          _
      $region104: #{tpu_custom_call.1} parent=5 // pred_fallthru
        _
      %p1277 = scmp.le.s32.totalorder 2, %s30
      // Predicated region
      $region127: #{tpu_custom_call.1} parent=5 // pred_check
        %p1278 = pneg %p1277
      $region128: #{tpu_custom_call.1} parent=5 // pred_check_branch
        %1280 = sbr.rel (%p1278) target = $region130
      $region129: #{tpu_custom_call.1} parent=5 // pred_region
        %s1281 = ssub.s32 %s30, 2
        // Predicated region
        $region131: #{tpu_custom_call.1} parent=129 // pred_check
          %p1282 = pneg %p524
        $region132: #{tpu_custom_call.1} parent=129 // pred_check_branch
          %1284 = sbr.rel (%p1282) target = $region134
        $region133: #{tpu_custom_call.1} parent=129 // pred_region
          %s1285 = sand.u32 %s509, 1
          %s1286 = scalar_lea.sflag [#allocation7], %s1285
          %s1287 = sand.u32 %s509, 1
          %s1288 = smul.addr %s1287, 8
          %s1289 = scalar_lea.vmem [#allocation6], %s1288
          %1291 = dma.done %s1286, 128
        $region134: #{tpu_custom_call.1} parent=129 // pred_fallthru
          _
      $region130: #{tpu_custom_call.1} parent=5 // pred_fallthru
        _
    $region6: #{tpu_custom_call.1} parent=1 // loop_footer
      %s34 = sadd.s32 1, %s30
    $region7: #{tpu_custom_call.1} parent=1 // loop_footer_branch
      %29 = sbr.rel target = $region3
    $region8: #{tpu_custom_call.1} parent=1 // loop_exit
      _
    %1292 = vsyncpa [#allocation7], 1
    %s1293 = scalar_lea.sflag [#allocation7], 1
    %1294 = vsyncpa %s1293, 1

</llo_original>
